<compile_context>
chip_gen: v5e
topology: v5e:2x2
jax: 0.10.0
libtpu: 0.0.40
codegen_flags: <defaults>
</compile_context>

<pallas_src>
import numpy as np
import jax
import jax.numpy as jnp
from jax import lax
from jax.experimental import pallas as pl
from jax.experimental.pallas import tpu as pltpu

# ----------------------------- model dims -----------------------------------
INPUT_DIM = 1
LSTM_HIDDEN = 32          # lstm_output_dim
LATENT_DIM = 32
FC1_DIM = 128
FC2_DIM = 64
NUM_LAYERS = 3
LN_EPS = 1e-5
LANE = 128                # lane width == 4*H (gates)


# ----------------------------- parameter packing -----------------------------
def pack_params(params):
    """Pack all weights/biases into one lane-dense (R, 128) f32 buffer.

    Every block is zero-padded to 128 lanes and 8-row aligned so the kernel can take
    static, tile-aligned row-block views.  The MLP tail (fc2 / fused heads) is zero-padded
    to 128 columns so every matmul and the output store stay 128-lane dense.
    Returns (packed jnp array, {name: (row_offset, rows, logical_cols)}).
    """
    (wih0, whh0, b0, wih1, whh1, b1, wih2, whh2, b2,
     ln_g, ln_b, w1, bf1, w2, bf2, ws, bs, wsh, bsh) = [np.asarray(p, np.float32) for p in params]

    # fc2: (128, 64) -> (128, 128) with zero columns 64..127 (padded lanes stay exactly 0).
    w2p = np.zeros((FC1_DIM, LANE), np.float32); w2p[:, :FC2_DIM] = w2
    bf2p = np.zeros((1, LANE), np.float32);      bf2p[:, :FC2_DIM] = bf2

    # fused GPD heads: [ws | wsh] -> (64, 64), zero-padded to (128, 128) so it consumes the
    # zero-padded fc2 activations directly; bias likewise.
    whd = np.zeros((LANE, LANE), np.float32)
    whd[:FC2_DIM, :LATENT_DIM] = ws
    whd[:FC2_DIM, LATENT_DIM:2 * LATENT_DIM] = wsh
    bhd = np.zeros((1, LANE), np.float32)
    bhd[:, :LATENT_DIM] = bs
    bhd[:, LATENT_DIM:2 * LATENT_DIM] = bsh

    entries = [
        ("wih0", wih0), ("whh0", whh0), ("b0", b0),
        ("wih1", wih1), ("whh1", whh1), ("b1", b1),
        ("wih2", wih2), ("whh2", whh2), ("b2", b2),
        ("ln_g", ln_g), ("ln_b", ln_b),
        ("w1", w1), ("bf1", bf1),
        ("w2", w2p), ("bf2", bf2p),
        ("w_heads", whd), ("b_heads", bhd),
    ]

    blocks, offsets, row = [], {}, 0
    for name, arr in entries:
        if arr.ndim == 1:
            arr = arr[None, :]
        r, c = arr.shape
        assert c <= LANE
        buf = np.zeros((r, LANE), np.float32)
        buf[:, :c] = arr
        offsets[name] = (row, r, c)
        blocks.append(buf)
        pad = (-r) % 8                       # keep every block 8-row (sublane) aligned
        if pad:
            blocks.append(np.zeros((pad, LANE), np.float32))
        row += r + pad
    packed = np.concatenate(blocks, axis=0)
    return jnp.asarray(packed), offsets


# ----------------------------- Pallas kernel --------------------------------
def _make_kernel(offsets, T, B):
    H = LSTM_HIDDEN
    TB = T * B

    def load(p_ref, name):
        row, r, c = offsets[name]
        blk = p_ref[row:row + r, :]
        return blk if c == LANE else blk[:, :c]

    def sigmoid(x):
        # exact identity: sigma(x) = 0.5*tanh(x/2) + 0.5  (single EUP op, no divide)
        return 0.5 * jnp.tanh(0.5 * x) + 0.5

    def cell(pre, c):
        """One LSTM cell. pre: (B,128) holding the i|f|g|o pre-activations (PyTorch order)."""
        i = sigmoid(pre[:, 0 * H:1 * H])
        f = sigmoid(pre[:, 1 * H:2 * H])
        g = jnp.tanh(pre[:, 2 * H:3 * H])
        o = sigmoid(pre[:, 3 * H:4 * H])
        c_new = f * c + i * g
        h_new = o * jnp.tanh(c_new)
        return h_new, c_new

    def kernel(x_ref, p_ref, out_ref):
        # ---- load LSTM weights ONCE as full 128-lane blocks (no gate splitting) ----
        wih0 = load(p_ref, "wih0")          # (INPUT_DIM, 128)
        whh0 = load(p_ref, "whh0")          # (32, 128)
        b0 = load(p_ref, "b0")              # (1, 128)
        wih1 = load(p_ref, "wih1"); whh1 = load(p_ref, "whh1"); b1 = load(p_ref, "b1")
        wih2 = load(p_ref, "wih2"); whh2 = load(p_ref, "whh2"); b2 = load(p_ref, "b2")

        # pre-broadcast layer-1/2 biases once (implicit broadcasts are not CSE'd)
        b1_b = jnp.broadcast_to(b1, (B, LANE))
        b2_b = jnp.broadcast_to(b2, (B, LANE))

        # ---- hoisted layer-0 input projection: one lane-dense (T*B, 128) slab ----
        x = x_ref[...]                                   # (T*B, 128)
        if INPUT_DIM == 1:
            # x is lane-broadcast host-side; projection is an outer product -> pure VPU
            pg0 = x * jnp.broadcast_to(wih0, (TB, LANE)) + jnp.broadcast_to(b0, (TB, LANE))
        else:
            pg0 = (jnp.dot(x[:, :INPUT_DIM], wih0, preferred_element_type=jnp.float32)
                   + jnp.broadcast_to(b0, (TB, LANE)))

        zeros = jnp.zeros((B, H), jnp.float32)
        h0 = c0 = h1 = c1 = h2 = c2 = zeros

        # ---- fused 3-layer wavefront recurrence, fully unrolled (T is static) ----
        # 5 lane-dense (.,32)@(32,128) matmuls per timestep; full (layer,time) wavefront
        # visible to the scheduler.
        for t in range(T):
            pre0 = pg0[t * B:(t + 1) * B, :] + jnp.dot(
                h0, whh0, preferred_element_type=jnp.float32)
            h0, c0 = cell(pre0, c0)

            pre1 = (jnp.dot(h0, wih1, preferred_element_type=jnp.float32)
                    + jnp.dot(h1, whh1, preferred_element_type=jnp.float32) + b1_b)
            h1, c1 = cell(pre1, c1)

            pre2 = (jnp.dot(h1, wih2, preferred_element_type=jnp.float32)
                    + jnp.dot(h2, whh2, preferred_element_type=jnp.float32) + b2_b)
            h2, c2 = cell(pre2, c2)

        # ---- LayerNorm over the hidden dim (f32) ----
        ln_g = load(p_ref, "ln_g")
        ln_b = load(p_ref, "ln_b")
        mean = jnp.mean(h2, axis=-1, keepdims=True)
        var = jnp.mean((h2 - mean) ** 2, axis=-1, keepdims=True)
        hn = (h2 - mean) * lax.rsqrt(var + LN_EPS) * ln_g + ln_b

        # ---- MLP + fused GPD heads (all matmuls / stores 128-lane dense via zero padding) ----
        w1 = load(p_ref, "w1"); bf1 = load(p_ref, "bf1")
        w2 = load(p_ref, "w2"); bf2 = load(p_ref, "bf2")
        wh = load(p_ref, "w_heads"); bh = load(p_ref, "b_heads")

        hid = jnp.maximum(jnp.dot(hn, w1, preferred_element_type=jnp.float32) + bf1, 0.0)
        hid = jnp.maximum(jnp.dot(hid, w2, preferred_element_type=jnp.float32) + bf2, 0.0)
        # TODO(synk): nn.Dropout(0.3) is identity in eval mode; training-mode mask omitted.

        heads = jnp.dot(hid, wh, preferred_element_type=jnp.float32) + bh      # (B, 128)
        lane_idx = lax.broadcasted_iota(jnp.int32, heads.shape, 1)
        # lanes [0,32): exp -> z_scale ; lanes [32,64): clamp(1e-6) -> z_shape ; rest unused
        out_ref[...] = jnp.where(lane_idx < LATENT_DIM,
                                 jnp.exp(heads),
                                 jnp.maximum(heads, 1e-6))

    return kernel


# ----------------------------- wrapper ---------------------------------------
def encoder_forward(x, packed, offsets):
    """x: (batch, seq, input_dim) f32. Returns (z_scale_extreme, z_shape_extreme)."""
    B, T, in_dim = x.shape
    TB = T * B
    # time-major rows (r = t*B + b), presented as one lane-dense, 8-row-aligned slab
    x_t = jnp.transpose(x, (1, 0, 2)).reshape(TB, in_dim)
    if in_dim == 1:
        x_slab = jnp.broadcast_to(x_t, (TB, LANE)).astype(jnp.float32)
    else:
        x_slab = jnp.zeros((TB, LANE), jnp.float32).at[:, :in_dim].set(x_t)

    kernel = _make_kernel(offsets, T, B)
    out = pl.pallas_call(
        kernel,
        out_shape=jax.ShapeDtypeStruct((B, LANE), jnp.float32),
        in_specs=[pl.BlockSpec(memory_space=pltpu.MemorySpace.VMEM),
                  pl.BlockSpec(memory_space=pltpu.MemorySpace.VMEM)],
        out_specs=pl.BlockSpec(memory_space=pltpu.MemorySpace.VMEM),
    )(x_slab, packed)

    return out[:, :LATENT_DIM], out[:, LATENT_DIM:2 * LATENT_DIM]


# ----------------------------- parameter init --------------------------------
def _uniform(key, shape, bound):
    return jax.random.uniform(key, shape, jnp.float32, -bound, bound)


def init_params(key):
    """Deterministic init mirroring PyTorch's default U(-1/sqrt(fan), 1/sqrt(fan)).
    Returns a flat list (weights pre-transposed to (in_features, out_features))."""
    keys = iter(jax.random.split(key, 64))
    params = []

    H = LSTM_HIDDEN
    bound = 1.0 / np.sqrt(H)
    in_sizes = [INPUT_DIM, H, H]
    for layer in range(NUM_LAYERS):
        in_sz = in_sizes[layer]
        w_ih = _uniform(next(keys), (4 * H, in_sz), bound)
        w_hh = _uniform(next(keys), (4 * H, H), bound)
        b_ih = _uniform(next(keys), (4 * H,), bound)
        b_hh = _uniform(next(keys), (4 * H,), bound)
        params += [w_ih.T, w_hh.T, (b_ih + b_hh).reshape(1, 4 * H)]

    # LayerNorm(lstm_output_dim): gamma=1, beta=0
    params += [jnp.ones((1, H), jnp.float32), jnp.zeros((1, H), jnp.float32)]

    def linear(in_dim, out_dim):
        b = 1.0 / np.sqrt(in_dim)
        w = _uniform(next(keys), (out_dim, in_dim), b)
        bias = _uniform(next(keys), (out_dim,), b)
        return w.T, bias.reshape(1, out_dim)

    params += list(linear(H, FC1_DIM))            # fc1
    params += list(linear(FC1_DIM, FC2_DIM))      # fc2
    params += list(linear(FC2_DIM, LATENT_DIM))   # scale_layer_extreme
    params += list(linear(FC2_DIM, LATENT_DIM))   # shape_layer_extreme
    return params


# ----------------------------- pure-JAX reference -----------------------------
def reference_forward(x, params):
    (wih0, whh0, b0, wih1, whh1, b1, wih2, whh2, b2,
     ln_g, ln_b, w1, bf1, w2, bf2, ws, bs, wsh, bsh) = params
    B, T, _ = x.shape
    H = LSTM_HIDDEN

    def run_layer(seq, wih, whh, b):  # seq: (T, B, in)
        h = jnp.zeros((B, H), jnp.float32)
        c = jnp.zeros((B, H), jnp.float32)
        outs = []
        for t in range(T):
            gates = seq[t] @ wih + h @ whh + b
            i = jax.nn.sigmoid(gates[:, 0 * H:1 * H])
            f = jax.nn.sigmoid(gates[:, 1 * H:2 * H])
            g = jnp.tanh(gates[:, 2 * H:3 * H])
            o = jax.nn.sigmoid(gates[:, 3 * H:4 * H])
            c = f * c + i * g
            h = o * jnp.tanh(c)
            outs.append(h)
        return jnp.stack(outs, 0), h

    seq = jnp.transpose(x, (1, 0, 2))
    seq, _ = run_layer(seq, wih0, whh0, b0)
    seq, _ = run_layer(seq, wih1, whh1, b1)
    _, h_last = run_layer(seq, wih2, whh2, b2)

    mean = jnp.mean(h_last, -1, keepdims=True)
    var = jnp.mean((h_last - mean) ** 2, -1, keepdims=True)
    hn = (h_last - mean) / jnp.sqrt(var + LN_EPS) * ln_g + ln_b
    hid = jnp.maximum(hn @ w1 + bf1, 0.0)
    hid = jnp.maximum(hid @ w2 + bf2, 0.0)
    return jnp.exp(hid @ ws + bs), jnp.maximum(hid @ wsh + bsh, 1e-6)


# ----------------------------- main -------------------------------------------
if __name__ == "__main__":
    key = jax.random.PRNGKey(0)
    k_x, k_p = jax.random.split(key)

    batch, seq = 2, 8
    x = jax.random.normal(k_x, (batch, seq, INPUT_DIM), jnp.float32)
    params = init_params(k_p)
    packed, offsets = pack_params(params)

    z_scale, z_shape = encoder_forward(x, packed, offsets)
    jax.block_until_ready((z_scale, z_shape))

    ref_scale, ref_shape = reference_forward(x, params)
    np.testing.assert_allclose(np.asarray(z_scale), np.asarray(ref_scale), rtol=1e-3, atol=1e-4)
    np.testing.assert_allclose(np.asarray(z_shape), np.asarray(ref_shape), rtol=1e-3, atol=1e-4)

    print("KERNEL_OK")
</pallas_src>

<mosaic_0001>
module attributes {stable_mosaic.version = 11 : i64} {
  func.func @kernel(%arg0: memref<16x128xf32, #tpu.memory_space<vmem>>, %arg1: memref<520x128xf32, #tpu.memory_space<vmem>>, %arg2: memref<2x128xf32, #tpu.memory_space<vmem>>) attributes {dimension_semantics = [], scalar_prefetch = 0 : i64, scratch_operands = 0 : i64, tpu.core_type = #tpu.core_type<tc>} {
    %c0 = arith.constant 0 : index
    %c0_0 = arith.constant 0 : index
    %0 = vector.load %arg1[%c0, %c0_0] : memref<520x128xf32, #tpu.memory_space<vmem>>, vector<1x128xf32>
    %c8 = arith.constant 8 : index
    %c0_1 = arith.constant 0 : index
    %1 = vector.load %arg1[%c8, %c0_1] : memref<520x128xf32, #tpu.memory_space<vmem>>, vector<32x128xf32>
    %c40 = arith.constant 40 : index
    %c0_2 = arith.constant 0 : index
    %2 = vector.load %arg1[%c40, %c0_2] : memref<520x128xf32, #tpu.memory_space<vmem>>, vector<1x128xf32>
    %c48 = arith.constant 48 : index
    %c0_3 = arith.constant 0 : index
    %3 = vector.load %arg1[%c48, %c0_3] : memref<520x128xf32, #tpu.memory_space<vmem>>, vector<32x128xf32>
    %c80 = arith.constant 80 : index
    %c0_4 = arith.constant 0 : index
    %4 = vector.load %arg1[%c80, %c0_4] : memref<520x128xf32, #tpu.memory_space<vmem>>, vector<32x128xf32>
    %c112 = arith.constant 112 : index
    %c0_5 = arith.constant 0 : index
    %5 = vector.load %arg1[%c112, %c0_5] : memref<520x128xf32, #tpu.memory_space<vmem>>, vector<1x128xf32>
    %c120 = arith.constant 120 : index
    %c0_6 = arith.constant 0 : index
    %6 = vector.load %arg1[%c120, %c0_6] : memref<520x128xf32, #tpu.memory_space<vmem>>, vector<32x128xf32>
    %c152 = arith.constant 152 : index
    %c0_7 = arith.constant 0 : index
    %7 = vector.load %arg1[%c152, %c0_7] : memref<520x128xf32, #tpu.memory_space<vmem>>, vector<32x128xf32>
    %c184 = arith.constant 184 : index
    %c0_8 = arith.constant 0 : index
    %8 = vector.load %arg1[%c184, %c0_8] : memref<520x128xf32, #tpu.memory_space<vmem>>, vector<1x128xf32>
    %9 = vector.shape_cast %5 : vector<1x128xf32> to vector<1x128xf32>
    %10 = vector.broadcast %9 : vector<1x128xf32> to vector<2x128xf32>
    %11 = vector.shape_cast %8 : vector<1x128xf32> to vector<1x128xf32>
    %12 = vector.broadcast %11 : vector<1x128xf32> to vector<2x128xf32>
    %c0_9 = arith.constant 0 : index
    %c0_10 = arith.constant 0 : index
    %13 = vector.load %arg0[%c0_9, %c0_10] : memref<16x128xf32, #tpu.memory_space<vmem>>, vector<16x128xf32>
    %14 = vector.shape_cast %0 : vector<1x128xf32> to vector<1x128xf32>
    %15 = vector.broadcast %14 : vector<1x128xf32> to vector<16x128xf32>
    %16 = arith.mulf %13, %15 : vector<16x128xf32>
    %17 = vector.shape_cast %2 : vector<1x128xf32> to vector<1x128xf32>
    %18 = vector.broadcast %17 : vector<1x128xf32> to vector<16x128xf32>
    %19 = arith.addf %16, %18 : vector<16x128xf32>
    %cst = arith.constant 0.000000e+00 : f32
    %20 = vector.broadcast %cst : f32 to vector<2x32xf32>
    %21 = vector.extract_strided_slice %19 {offsets = [0, 0], sizes = [2, 128], strides = [1, 1]} : vector<16x128xf32> to vector<2x128xf32>
    %cst_11 = arith.constant dense<0.000000e+00> : vector<2x128xf32>
    %22 = tpu.matmul %20, %1, %cst_11 {dimension_numbers = #tpu.dot_dimension_numbers<[1], [0], [0], [1], [0, 0, 1, 1], [], []>} : vector<2x32xf32>, vector<32x128xf32>, vector<2x128xf32> -> vector<2x128xf32>
    %23 = arith.addf %21, %22 : vector<2x128xf32>
    %24 = vector.extract_strided_slice %23 {offsets = [0, 0], sizes = [2, 32], strides = [1, 1]} : vector<2x128xf32> to vector<2x32xf32>
    %cst_12 = arith.constant 5.000000e-01 : f32
    %25 = vector.broadcast %cst_12 : f32 to vector<2x32xf32>
    %26 = arith.mulf %25, %24 : vector<2x32xf32>
    %27 = math.tanh %26 : vector<2x32xf32>
    %cst_13 = arith.constant 5.000000e-01 : f32
    %28 = vector.broadcast %cst_13 : f32 to vector<2x32xf32>
    %29 = arith.mulf %28, %27 : vector<2x32xf32>
    %cst_14 = arith.constant 5.000000e-01 : f32
    %30 = vector.broadcast %cst_14 : f32 to vector<2x32xf32>
    %31 = arith.addf %29, %30 : vector<2x32xf32>
    %32 = vector.extract_strided_slice %23 {offsets = [0, 32], sizes = [2, 32], strides = [1, 1]} : vector<2x128xf32> to vector<2x32xf32>
    %cst_15 = arith.constant 5.000000e-01 : f32
    %33 = vector.broadcast %cst_15 : f32 to vector<2x32xf32>
    %34 = arith.mulf %33, %32 : vector<2x32xf32>
    %35 = math.tanh %34 : vector<2x32xf32>
    %cst_16 = arith.constant 5.000000e-01 : f32
    %36 = vector.broadcast %cst_16 : f32 to vector<2x32xf32>
    %37 = arith.mulf %36, %35 : vector<2x32xf32>
    %cst_17 = arith.constant 5.000000e-01 : f32
    %38 = vector.broadcast %cst_17 : f32 to vector<2x32xf32>
    %39 = arith.addf %37, %38 : vector<2x32xf32>
    %40 = vector.extract_strided_slice %23 {offsets = [0, 64], sizes = [2, 32], strides = [1, 1]} : vector<2x128xf32> to vector<2x32xf32>
    %41 = math.tanh %40 : vector<2x32xf32>
    %42 = vector.extract_strided_slice %23 {offsets = [0, 96], sizes = [2, 32], strides = [1, 1]} : vector<2x128xf32> to vector<2x32xf32>
    %cst_18 = arith.constant 5.000000e-01 : f32
    %43 = vector.broadcast %cst_18 : f32 to vector<2x32xf32>
    %44 = arith.mulf %43, %42 : vector<2x32xf32>
    %45 = math.tanh %44 : vector<2x32xf32>
    %cst_19 = arith.constant 5.000000e-01 : f32
    %46 = vector.broadcast %cst_19 : f32 to vector<2x32xf32>
    %47 = arith.mulf %46, %45 : vector<2x32xf32>
    %cst_20 = arith.constant 5.000000e-01 : f32
    %48 = vector.broadcast %cst_20 : f32 to vector<2x32xf32>
    %49 = arith.addf %47, %48 : vector<2x32xf32>
    %50 = arith.mulf %39, %20 : vector<2x32xf32>
    %51 = arith.mulf %31, %41 : vector<2x32xf32>
    %52 = arith.addf %50, %51 : vector<2x32xf32>
    %53 = math.tanh %52 : vector<2x32xf32>
    %54 = arith.mulf %49, %53 : vector<2x32xf32>
    %cst_21 = arith.constant dense<0.000000e+00> : vector<2x128xf32>
    %55 = tpu.matmul %54, %3, %cst_21 {dimension_numbers = #tpu.dot_dimension_numbers<[1], [0], [0], [1], [0, 0, 1, 1], [], []>} : vector<2x32xf32>, vector<32x128xf32>, vector<2x128xf32> -> vector<2x128xf32>
    %cst_22 = arith.constant dense<0.000000e+00> : vector<2x128xf32>
    %56 = tpu.matmul %20, %4, %cst_22 {dimension_numbers = #tpu.dot_dimension_numbers<[1], [0], [0], [1], [0, 0, 1, 1], [], []>} : vector<2x32xf32>, vector<32x128xf32>, vector<2x128xf32> -> vector<2x128xf32>
    %57 = arith.addf %55, %56 : vector<2x128xf32>
    %58 = arith.addf %57, %10 : vector<2x128xf32>
    %59 = vector.extract_strided_slice %58 {offsets = [0, 0], sizes = [2, 32], strides = [1, 1]} : vector<2x128xf32> to vector<2x32xf32>
    %cst_23 = arith.constant 5.000000e-01 : f32
    %60 = vector.broadcast %cst_23 : f32 to vector<2x32xf32>
    %61 = arith.mulf %60, %59 : vector<2x32xf32>
    %62 = math.tanh %61 : vector<2x32xf32>
    %cst_24 = arith.constant 5.000000e-01 : f32
    %63 = vector.broadcast %cst_24 : f32 to vector<2x32xf32>
    %64 = arith.mulf %63, %62 : vector<2x32xf32>
    %cst_25 = arith.constant 5.000000e-01 : f32
    %65 = vector.broadcast %cst_25 : f32 to vector<2x32xf32>
    %66 = arith.addf %64, %65 : vector<2x32xf32>
    %67 = vector.extract_strided_slice %58 {offsets = [0, 32], sizes = [2, 32], strides = [1, 1]} : vector<2x128xf32> to vector<2x32xf32>
    %cst_26 = arith.constant 5.000000e-01 : f32
    %68 = vector.broadcast %cst_26 : f32 to vector<2x32xf32>
    %69 = arith.mulf %68, %67 : vector<2x32xf32>
    %70 = math.tanh %69 : vector<2x32xf32>
    %cst_27 = arith.constant 5.000000e-01 : f32
    %71 = vector.broadcast %cst_27 : f32 to vector<2x32xf32>
    %72 = arith.mulf %71, %70 : vector<2x32xf32>
    %cst_28 = arith.constant 5.000000e-01 : f32
    %73 = vector.broadcast %cst_28 : f32 to vector<2x32xf32>
    %74 = arith.addf %72, %73 : vector<2x32xf32>
    %75 = vector.extract_strided_slice %58 {offsets = [0, 64], sizes = [2, 32], strides = [1, 1]} : vector<2x128xf32> to vector<2x32xf32>
    %76 = math.tanh %75 : vector<2x32xf32>
    %77 = vector.extract_strided_slice %58 {offsets = [0, 96], sizes = [2, 32], strides = [1, 1]} : vector<2x128xf32> to vector<2x32xf32>
    %cst_29 = arith.constant 5.000000e-01 : f32
    %78 = vector.broadcast %cst_29 : f32 to vector<2x32xf32>
    %79 = arith.mulf %78, %77 : vector<2x32xf32>
    %80 = math.tanh %79 : vector<2x32xf32>
    %cst_30 = arith.constant 5.000000e-01 : f32
    %81 = vector.broadcast %cst_30 : f32 to vector<2x32xf32>
    %82 = arith.mulf %81, %80 : vector<2x32xf32>
    %cst_31 = arith.constant 5.000000e-01 : f32
    %83 = vector.broadcast %cst_31 : f32 to vector<2x32xf32>
    %84 = arith.addf %82, %83 : vector<2x32xf32>
    %85 = arith.mulf %74, %20 : vector<2x32xf32>
    %86 = arith.mulf %66, %76 : vector<2x32xf32>
    %87 = arith.addf %85, %86 : vector<2x32xf32>
    %88 = math.tanh %87 : vector<2x32xf32>
    %89 = arith.mulf %84, %88 : vector<2x32xf32>
    %cst_32 = arith.constant dense<0.000000e+00> : vector<2x128xf32>
    %90 = tpu.matmul %89, %6, %cst_32 {dimension_numbers = #tpu.dot_dimension_numbers<[1], [0], [0], [1], [0, 0, 1, 1], [], []>} : vector<2x32xf32>, vector<32x128xf32>, vector<2x128xf32> -> vector<2x128xf32>
    %cst_33 = arith.constant dense<0.000000e+00> : vector<2x128xf32>
    %91 = tpu.matmul %20, %7, %cst_33 {dimension_numbers = #tpu.dot_dimension_numbers<[1], [0], [0], [1], [0, 0, 1, 1], [], []>} : vector<2x32xf32>, vector<32x128xf32>, vector<2x128xf32> -> vector<2x128xf32>
    %92 = arith.addf %90, %91 : vector<2x128xf32>
    %93 = arith.addf %92, %12 : vector<2x128xf32>
    %94 = vector.extract_strided_slice %93 {offsets = [0, 0], sizes = [2, 32], strides = [1, 1]} : vector<2x128xf32> to vector<2x32xf32>
    %cst_34 = arith.constant 5.000000e-01 : f32
    %95 = vector.broadcast %cst_34 : f32 to vector<2x32xf32>
    %96 = arith.mulf %95, %94 : vector<2x32xf32>
    %97 = math.tanh %96 : vector<2x32xf32>
    %cst_35 = arith.constant 5.000000e-01 : f32
    %98 = vector.broadcast %cst_35 : f32 to vector<2x32xf32>
    %99 = arith.mulf %98, %97 : vector<2x32xf32>
    %cst_36 = arith.constant 5.000000e-01 : f32
    %100 = vector.broadcast %cst_36 : f32 to vector<2x32xf32>
    %101 = arith.addf %99, %100 : vector<2x32xf32>
    %102 = vector.extract_strided_slice %93 {offsets = [0, 32], sizes = [2, 32], strides = [1, 1]} : vector<2x128xf32> to vector<2x32xf32>
    %cst_37 = arith.constant 5.000000e-01 : f32
    %103 = vector.broadcast %cst_37 : f32 to vector<2x32xf32>
    %104 = arith.mulf %103, %102 : vector<2x32xf32>
    %105 = math.tanh %104 : vector<2x32xf32>
    %cst_38 = arith.constant 5.000000e-01 : f32
    %106 = vector.broadcast %cst_38 : f32 to vector<2x32xf32>
    %107 = arith.mulf %106, %105 : vector<2x32xf32>
    %cst_39 = arith.constant 5.000000e-01 : f32
    %108 = vector.broadcast %cst_39 : f32 to vector<2x32xf32>
    %109 = arith.addf %107, %108 : vector<2x32xf32>
    %110 = vector.extract_strided_slice %93 {offsets = [0, 64], sizes = [2, 32], strides = [1, 1]} : vector<2x128xf32> to vector<2x32xf32>
    %111 = math.tanh %110 : vector<2x32xf32>
    %112 = vector.extract_strided_slice %93 {offsets = [0, 96], sizes = [2, 32], strides = [1, 1]} : vector<2x128xf32> to vector<2x32xf32>
    %cst_40 = arith.constant 5.000000e-01 : f32
    %113 = vector.broadcast %cst_40 : f32 to vector<2x32xf32>
    %114 = arith.mulf %113, %112 : vector<2x32xf32>
    %115 = math.tanh %114 : vector<2x32xf32>
    %cst_41 = arith.constant 5.000000e-01 : f32
    %116 = vector.broadcast %cst_41 : f32 to vector<2x32xf32>
    %117 = arith.mulf %116, %115 : vector<2x32xf32>
    %cst_42 = arith.constant 5.000000e-01 : f32
    %118 = vector.broadcast %cst_42 : f32 to vector<2x32xf32>
    %119 = arith.addf %117, %118 : vector<2x32xf32>
    %120 = arith.mulf %109, %20 : vector<2x32xf32>
    %121 = arith.mulf %101, %111 : vector<2x32xf32>
    %122 = arith.addf %120, %121 : vector<2x32xf32>
    %123 = math.tanh %122 : vector<2x32xf32>
    %124 = arith.mulf %119, %123 : vector<2x32xf32>
    %125 = vector.extract_strided_slice %19 {offsets = [2, 0], sizes = [2, 128], strides = [1, 1]} : vector<16x128xf32> to vector<2x128xf32>
    %cst_43 = arith.constant dense<0.000000e+00> : vector<2x128xf32>
    %126 = tpu.matmul %54, %1, %cst_43 {dimension_numbers = #tpu.dot_dimension_numbers<[1], [0], [0], [1], [0, 0, 1, 1], [], []>} : vector<2x32xf32>, vector<32x128xf32>, vector<2x128xf32> -> vector<2x128xf32>
    %127 = arith.addf %125, %126 : vector<2x128xf32>
    %128 = vector.extract_strided_slice %127 {offsets = [0, 0], sizes = [2, 32], strides = [1, 1]} : vector<2x128xf32> to vector<2x32xf32>
    %cst_44 = arith.constant 5.000000e-01 : f32
    %129 = vector.broadcast %cst_44 : f32 to vector<2x32xf32>
    %130 = arith.mulf %129, %128 : vector<2x32xf32>
    %131 = math.tanh %130 : vector<2x32xf32>
    %cst_45 = arith.constant 5.000000e-01 : f32
    %132 = vector.broadcast %cst_45 : f32 to vector<2x32xf32>
    %133 = arith.mulf %132, %131 : vector<2x32xf32>
    %cst_46 = arith.constant 5.000000e-01 : f32
    %134 = vector.broadcast %cst_46 : f32 to vector<2x32xf32>
    %135 = arith.addf %133, %134 : vector<2x32xf32>
    %136 = vector.extract_strided_slice %127 {offsets = [0, 32], sizes = [2, 32], strides = [1, 1]} : vector<2x128xf32> to vector<2x32xf32>
    %cst_47 = arith.constant 5.000000e-01 : f32
    %137 = vector.broadcast %cst_47 : f32 to vector<2x32xf32>
    %138 = arith.mulf %137, %136 : vector<2x32xf32>
    %139 = math.tanh %138 : vector<2x32xf32>
    %cst_48 = arith.constant 5.000000e-01 : f32
    %140 = vector.broadcast %cst_48 : f32 to vector<2x32xf32>
    %141 = arith.mulf %140, %139 : vector<2x32xf32>
    %cst_49 = arith.constant 5.000000e-01 : f32
    %142 = vector.broadcast %cst_49 : f32 to vector<2x32xf32>
    %143 = arith.addf %141, %142 : vector<2x32xf32>
    %144 = vector.extract_strided_slice %127 {offsets = [0, 64], sizes = [2, 32], strides = [1, 1]} : vector<2x128xf32> to vector<2x32xf32>
    %145 = math.tanh %144 : vector<2x32xf32>
    %146 = vector.extract_strided_slice %127 {offsets = [0, 96], sizes = [2, 32], strides = [1, 1]} : vector<2x128xf32> to vector<2x32xf32>
    %cst_50 = arith.constant 5.000000e-01 : f32
    %147 = vector.broadcast %cst_50 : f32 to vector<2x32xf32>
    %148 = arith.mulf %147, %146 : vector<2x32xf32>
    %149 = math.tanh %148 : vector<2x32xf32>
    %cst_51 = arith.constant 5.000000e-01 : f32
    %150 = vector.broadcast %cst_51 : f32 to vector<2x32xf32>
    %151 = arith.mulf %150, %149 : vector<2x32xf32>
    %cst_52 = arith.constant 5.000000e-01 : f32
    %152 = vector.broadcast %cst_52 : f32 to vector<2x32xf32>
    %153 = arith.addf %151, %152 : vector<2x32xf32>
    %154 = arith.mulf %143, %52 : vector<2x32xf32>
    %155 = arith.mulf %135, %145 : vector<2x32xf32>
    %156 = arith.addf %154, %155 : vector<2x32xf32>
    %157 = math.tanh %156 : vector<2x32xf32>
    %158 = arith.mulf %153, %157 : vector<2x32xf32>
    %cst_53 = arith.constant dense<0.000000e+00> : vector<2x128xf32>
    %159 = tpu.matmul %158, %3, %cst_53 {dimension_numbers = #tpu.dot_dimension_numbers<[1], [0], [0], [1], [0, 0, 1, 1], [], []>} : vector<2x32xf32>, vector<32x128xf32>, vector<2x128xf32> -> vector<2x128xf32>
    %cst_54 = arith.constant dense<0.000000e+00> : vector<2x128xf32>
    %160 = tpu.matmul %89, %4, %cst_54 {dimension_numbers = #tpu.dot_dimension_numbers<[1], [0], [0], [1], [0, 0, 1, 1], [], []>} : vector<2x32xf32>, vector<32x128xf32>, vector<2x128xf32> -> vector<2x128xf32>
    %161 = arith.addf %159, %160 : vector<2x128xf32>
    %162 = arith.addf %161, %10 : vector<2x128xf32>
    %163 = vector.extract_strided_slice %162 {offsets = [0, 0], sizes = [2, 32], strides = [1, 1]} : vector<2x128xf32> to vector<2x32xf32>
    %cst_55 = arith.constant 5.000000e-01 : f32
    %164 = vector.broadcast %cst_55 : f32 to vector<2x32xf32>
    %165 = arith.mulf %164, %163 : vector<2x32xf32>
    %166 = math.tanh %165 : vector<2x32xf32>
    %cst_56 = arith.constant 5.000000e-01 : f32
    %167 = vector.broadcast %cst_56 : f32 to vector<2x32xf32>
    %168 = arith.mulf %167, %166 : vector<2x32xf32>
    %cst_57 = arith.constant 5.000000e-01 : f32
    %169 = vector.broadcast %cst_57 : f32 to vector<2x32xf32>
    %170 = arith.addf %168, %169 : vector<2x32xf32>
    %171 = vector.extract_strided_slice %162 {offsets = [0, 32], sizes = [2, 32], strides = [1, 1]} : vector<2x128xf32> to vector<2x32xf32>
    %cst_58 = arith.constant 5.000000e-01 : f32
    %172 = vector.broadcast %cst_58 : f32 to vector<2x32xf32>
    %173 = arith.mulf %172, %171 : vector<2x32xf32>
    %174 = math.tanh %173 : vector<2x32xf32>
    %cst_59 = arith.constant 5.000000e-01 : f32
    %175 = vector.broadcast %cst_59 : f32 to vector<2x32xf32>
    %176 = arith.mulf %175, %174 : vector<2x32xf32>
    %cst_60 = arith.constant 5.000000e-01 : f32
    %177 = vector.broadcast %cst_60 : f32 to vector<2x32xf32>
    %178 = arith.addf %176, %177 : vector<2x32xf32>
    %179 = vector.extract_strided_slice %162 {offsets = [0, 64], sizes = [2, 32], strides = [1, 1]} : vector<2x128xf32> to vector<2x32xf32>
    %180 = math.tanh %179 : vector<2x32xf32>
    %181 = vector.extract_strided_slice %162 {offsets = [0, 96], sizes = [2, 32], strides = [1, 1]} : vector<2x128xf32> to vector<2x32xf32>
    %cst_61 = arith.constant 5.000000e-01 : f32
    %182 = vector.broadcast %cst_61 : f32 to vector<2x32xf32>
    %183 = arith.mulf %182, %181 : vector<2x32xf32>
    %184 = math.tanh %183 : vector<2x32xf32>
    %cst_62 = arith.constant 5.000000e-01 : f32
    %185 = vector.broadcast %cst_62 : f32 to vector<2x32xf32>
    %186 = arith.mulf %185, %184 : vector<2x32xf32>
    %cst_63 = arith.constant 5.000000e-01 : f32
    %187 = vector.broadcast %cst_63 : f32 to vector<2x32xf32>
    %188 = arith.addf %186, %187 : vector<2x32xf32>
    %189 = arith.mulf %178, %87 : vector<2x32xf32>
    %190 = arith.mulf %170, %180 : vector<2x32xf32>
    %191 = arith.addf %189, %190 : vector<2x32xf32>
    %192 = math.tanh %191 : vector<2x32xf32>
    %193 = arith.mulf %188, %192 : vector<2x32xf32>
    %cst_64 = arith.constant dense<0.000000e+00> : vector<2x128xf32>
    %194 = tpu.matmul %193, %6, %cst_64 {dimension_numbers = #tpu.dot_dimension_numbers<[1], [0], [0], [1], [0, 0, 1, 1], [], []>} : vector<2x32xf32>, vector<32x128xf32>, vector<2x128xf32> -> vector<2x128xf32>
    %cst_65 = arith.constant dense<0.000000e+00> : vector<2x128xf32>
    %195 = tpu.matmul %124, %7, %cst_65 {dimension_numbers = #tpu.dot_dimension_numbers<[1], [0], [0], [1], [0, 0, 1, 1], [], []>} : vector<2x32xf32>, vector<32x128xf32>, vector<2x128xf32> -> vector<2x128xf32>
    %196 = arith.addf %194, %195 : vector<2x128xf32>
    %197 = arith.addf %196, %12 : vector<2x128xf32>
    %198 = vector.extract_strided_slice %197 {offsets = [0, 0], sizes = [2, 32], strides = [1, 1]} : vector<2x128xf32> to vector<2x32xf32>
    %cst_66 = arith.constant 5.000000e-01 : f32
    %199 = vector.broadcast %cst_66 : f32 to vector<2x32xf32>
    %200 = arith.mulf %199, %198 : vector<2x32xf32>
    %201 = math.tanh %200 : vector<2x32xf32>
    %cst_67 = arith.constant 5.000000e-01 : f32
    %202 = vector.broadcast %cst_67 : f32 to vector<2x32xf32>
    %203 = arith.mulf %202, %201 : vector<2x32xf32>
    %cst_68 = arith.constant 5.000000e-01 : f32
    %204 = vector.broadcast %cst_68 : f32 to vector<2x32xf32>
    %205 = arith.addf %203, %204 : vector<2x32xf32>
    %206 = vector.extract_strided_slice %197 {offsets = [0, 32], sizes = [2, 32], strides = [1, 1]} : vector<2x128xf32> to vector<2x32xf32>
    %cst_69 = arith.constant 5.000000e-01 : f32
    %207 = vector.broadcast %cst_69 : f32 to vector<2x32xf32>
    %208 = arith.mulf %207, %206 : vector<2x32xf32>
    %209 = math.tanh %208 : vector<2x32xf32>
    %cst_70 = arith.constant 5.000000e-01 : f32
    %210 = vector.broadcast %cst_70 : f32 to vector<2x32xf32>
    %211 = arith.mulf %210, %209 : vector<2x32xf32>
    %cst_71 = arith.constant 5.000000e-01 : f32
    %212 = vector.broadcast %cst_71 : f32 to vector<2x32xf32>
    %213 = arith.addf %211, %212 : vector<2x32xf32>
    %214 = vector.extract_strided_slice %197 {offsets = [0, 64], sizes = [2, 32], strides = [1, 1]} : vector<2x128xf32> to vector<2x32xf32>
    %215 = math.tanh %214 : vector<2x32xf32>
    %216 = vector.extract_strided_slice %197 {offsets = [0, 96], sizes = [2, 32], strides = [1, 1]} : vector<2x128xf32> to vector<2x32xf32>
    %cst_72 = arith.constant 5.000000e-01 : f32
    %217 = vector.broadcast %cst_72 : f32 to vector<2x32xf32>
    %218 = arith.mulf %217, %216 : vector<2x32xf32>
    %219 = math.tanh %218 : vector<2x32xf32>
    %cst_73 = arith.constant 5.000000e-01 : f32
    %220 = vector.broadcast %cst_73 : f32 to vector<2x32xf32>
    %221 = arith.mulf %220, %219 : vector<2x32xf32>
    %cst_74 = arith.constant 5.000000e-01 : f32
    %222 = vector.broadcast %cst_74 : f32 to vector<2x32xf32>
    %223 = arith.addf %221, %222 : vector<2x32xf32>
    %224 = arith.mulf %213, %122 : vector<2x32xf32>
    %225 = arith.mulf %205, %215 : vector<2x32xf32>
    %226 = arith.addf %224, %225 : vector<2x32xf32>
    %227 = math.tanh %226 : vector<2x32xf32>
    %228 = arith.mulf %223, %227 : vector<2x32xf32>
    %229 = vector.extract_strided_slice %19 {offsets = [4, 0], sizes = [2, 128], strides = [1, 1]} : vector<16x128xf32> to vector<2x128xf32>
    %cst_75 = arith.constant dense<0.000000e+00> : vector<2x128xf32>
    %230 = tpu.matmul %158, %1, %cst_75 {dimension_numbers = #tpu.dot_dimension_numbers<[1], [0], [0], [1], [0, 0, 1, 1], [], []>} : vector<2x32xf32>, vector<32x128xf32>, vector<2x128xf32> -> vector<2x128xf32>
    %231 = arith.addf %229, %230 : vector<2x128xf32>
    %232 = vector.extract_strided_slice %231 {offsets = [0, 0], sizes = [2, 32], strides = [1, 1]} : vector<2x128xf32> to vector<2x32xf32>
    %cst_76 = arith.constant 5.000000e-01 : f32
    %233 = vector.broadcast %cst_76 : f32 to vector<2x32xf32>
    %234 = arith.mulf %233, %232 : vector<2x32xf32>
    %235 = math.tanh %234 : vector<2x32xf32>
    %cst_77 = arith.constant 5.000000e-01 : f32
    %236 = vector.broadcast %cst_77 : f32 to vector<2x32xf32>
    %237 = arith.mulf %236, %235 : vector<2x32xf32>
    %cst_78 = arith.constant 5.000000e-01 : f32
    %238 = vector.broadcast %cst_78 : f32 to vector<2x32xf32>
    %239 = arith.addf %237, %238 : vector<2x32xf32>
    %240 = vector.extract_strided_slice %231 {offsets = [0, 32], sizes = [2, 32], strides = [1, 1]} : vector<2x128xf32> to vector<2x32xf32>
    %cst_79 = arith.constant 5.000000e-01 : f32
    %241 = vector.broadcast %cst_79 : f32 to vector<2x32xf32>
    %242 = arith.mulf %241, %240 : vector<2x32xf32>
    %243 = math.tanh %242 : vector<2x32xf32>
    %cst_80 = arith.constant 5.000000e-01 : f32
    %244 = vector.broadcast %cst_80 : f32 to vector<2x32xf32>
    %245 = arith.mulf %244, %243 : vector<2x32xf32>
    %cst_81 = arith.constant 5.000000e-01 : f32
    %246 = vector.broadcast %cst_81 : f32 to vector<2x32xf32>
    %247 = arith.addf %245, %246 : vector<2x32xf32>
    %248 = vector.extract_strided_slice %231 {offsets = [0, 64], sizes = [2, 32], strides = [1, 1]} : vector<2x128xf32> to vector<2x32xf32>
    %249 = math.tanh %248 : vector<2x32xf32>
    %250 = vector.extract_strided_slice %231 {offsets = [0, 96], sizes = [2, 32], strides = [1, 1]} : vector<2x128xf32> to vector<2x32xf32>
    %cst_82 = arith.constant 5.000000e-01 : f32
    %251 = vector.broadcast %cst_82 : f32 to vector<2x32xf32>
    %252 = arith.mulf %251, %250 : vector<2x32xf32>
    %253 = math.tanh %252 : vector<2x32xf32>
    %cst_83 = arith.constant 5.000000e-01 : f32
    %254 = vector.broadcast %cst_83 : f32 to vector<2x32xf32>
    %255 = arith.mulf %254, %253 : vector<2x32xf32>
    %cst_84 = arith.constant 5.000000e-01 : f32
    %256 = vector.broadcast %cst_84 : f32 to vector<2x32xf32>
    %257 = arith.addf %255, %256 : vector<2x32xf32>
    %258 = arith.mulf %247, %156 : vector<2x32xf32>
    %259 = arith.mulf %239, %249 : vector<2x32xf32>
    %260 = arith.addf %258, %259 : vector<2x32xf32>
    %261 = math.tanh %260 : vector<2x32xf32>
    %262 = arith.mulf %257, %261 : vector<2x32xf32>
    %cst_85 = arith.constant dense<0.000000e+00> : vector<2x128xf32>
    %263 = tpu.matmul %262, %3, %cst_85 {dimension_numbers = #tpu.dot_dimension_numbers<[1], [0], [0], [1], [0, 0, 1, 1], [], []>} : vector<2x32xf32>, vector<32x128xf32>, vector<2x128xf32> -> vector<2x128xf32>
    %cst_86 = arith.constant dense<0.000000e+00> : vector<2x128xf32>
    %264 = tpu.matmul %193, %4, %cst_86 {dimension_numbers = #tpu.dot_dimension_numbers<[1], [0], [0], [1], [0, 0, 1, 1], [], []>} : vector<2x32xf32>, vector<32x128xf32>, vector<2x128xf32> -> vector<2x128xf32>
    %265 = arith.addf %263, %264 : vector<2x128xf32>
    %266 = arith.addf %265, %10 : vector<2x128xf32>
    %267 = vector.extract_strided_slice %266 {offsets = [0, 0], sizes = [2, 32], strides = [1, 1]} : vector<2x128xf32> to vector<2x32xf32>
    %cst_87 = arith.constant 5.000000e-01 : f32
    %268 = vector.broadcast %cst_87 : f32 to vector<2x32xf32>
    %269 = arith.mulf %268, %267 : vector<2x32xf32>
    %270 = math.tanh %269 : vector<2x32xf32>
    %cst_88 = arith.constant 5.000000e-01 : f32
    %271 = vector.broadcast %cst_88 : f32 to vector<2x32xf32>
    %272 = arith.mulf %271, %270 : vector<2x32xf32>
    %cst_89 = arith.constant 5.000000e-01 : f32
    %273 = vector.broadcast %cst_89 : f32 to vector<2x32xf32>
    %274 = arith.addf %272, %273 : vector<2x32xf32>
    %275 = vector.extract_strided_slice %266 {offsets = [0, 32], sizes = [2, 32], strides = [1, 1]} : vector<2x128xf32> to vector<2x32xf32>
    %cst_90 = arith.constant 5.000000e-01 : f32
    %276 = vector.broadcast %cst_90 : f32 to vector<2x32xf32>
    %277 = arith.mulf %276, %275 : vector<2x32xf32>
    %278 = math.tanh %277 : vector<2x32xf32>
    %cst_91 = arith.constant 5.000000e-01 : f32
    %279 = vector.broadcast %cst_91 : f32 to vector<2x32xf32>
    %280 = arith.mulf %279, %278 : vector<2x32xf32>
    %cst_92 = arith.constant 5.000000e-01 : f32
    %281 = vector.broadcast %cst_92 : f32 to vector<2x32xf32>
    %282 = arith.addf %280, %281 : vector<2x32xf32>
    %283 = vector.extract_strided_slice %266 {offsets = [0, 64], sizes = [2, 32], strides = [1, 1]} : vector<2x128xf32> to vector<2x32xf32>
    %284 = math.tanh %283 : vector<2x32xf32>
    %285 = vector.extract_strided_slice %266 {offsets = [0, 96], sizes = [2, 32], strides = [1, 1]} : vector<2x128xf32> to vector<2x32xf32>
    %cst_93 = arith.constant 5.000000e-01 : f32
    %286 = vector.broadcast %cst_93 : f32 to vector<2x32xf32>
    %287 = arith.mulf %286, %285 : vector<2x32xf32>
    %288 = math.tanh %287 : vector<2x32xf32>
    %cst_94 = arith.constant 5.000000e-01 : f32
    %289 = vector.broadcast %cst_94 : f32 to vector<2x32xf32>
    %290 = arith.mulf %289, %288 : vector<2x32xf32>
    %cst_95 = arith.constant 5.000000e-01 : f32
    %291 = vector.broadcast %cst_95 : f32 to vector<2x32xf32>
    %292 = arith.addf %290, %291 : vector<2x32xf32>
    %293 = arith.mulf %282, %191 : vector<2x32xf32>
    %294 = arith.mulf %274, %284 : vector<2x32xf32>
    %295 = arith.addf %293, %294 : vector<2x32xf32>
    %296 = math.tanh %295 : vector<2x32xf32>
    %297 = arith.mulf %292, %296 : vector<2x32xf32>
    %cst_96 = arith.constant dense<0.000000e+00> : vector<2x128xf32>
    %298 = tpu.matmul %297, %6, %cst_96 {dimension_numbers = #tpu.dot_dimension_numbers<[1], [0], [0], [1], [0, 0, 1, 1], [], []>} : vector<2x32xf32>, vector<32x128xf32>, vector<2x128xf32> -> vector<2x128xf32>
    %cst_97 = arith.constant dense<0.000000e+00> : vector<2x128xf32>
    %299 = tpu.matmul %228, %7, %cst_97 {dimension_numbers = #tpu.dot_dimension_numbers<[1], [0], [0], [1], [0, 0, 1, 1], [], []>} : vector<2x32xf32>, vector<32x128xf32>, vector<2x128xf32> -> vector<2x128xf32>
    %300 = arith.addf %298, %299 : vector<2x128xf32>
    %301 = arith.addf %300, %12 : vector<2x128xf32>
    %302 = vector.extract_strided_slice %301 {offsets = [0, 0], sizes = [2, 32], strides = [1, 1]} : vector<2x128xf32> to vector<2x32xf32>
    %cst_98 = arith.constant 5.000000e-01 : f32
    %303 = vector.broadcast %cst_98 : f32 to vector<2x32xf32>
    %304 = arith.mulf %303, %302 : vector<2x32xf32>
    %305 = math.tanh %304 : vector<2x32xf32>
    %cst_99 = arith.constant 5.000000e-01 : f32
    %306 = vector.broadcast %cst_99 : f32 to vector<2x32xf32>
    %307 = arith.mulf %306, %305 : vector<2x32xf32>
    %cst_100 = arith.constant 5.000000e-01 : f32
    %308 = vector.broadcast %cst_100 : f32 to vector<2x32xf32>
    %309 = arith.addf %307, %308 : vector<2x32xf32>
    %310 = vector.extract_strided_slice %301 {offsets = [0, 32], sizes = [2, 32], strides = [1, 1]} : vector<2x128xf32> to vector<2x32xf32>
    %cst_101 = arith.constant 5.000000e-01 : f32
    %311 = vector.broadcast %cst_101 : f32 to vector<2x32xf32>
    %312 = arith.mulf %311, %310 : vector<2x32xf32>
    %313 = math.tanh %312 : vector<2x32xf32>
    %cst_102 = arith.constant 5.000000e-01 : f32
    %314 = vector.broadcast %cst_102 : f32 to vector<2x32xf32>
    %315 = arith.mulf %314, %313 : vector<2x32xf32>
    %cst_103 = arith.constant 5.000000e-01 : f32
    %316 = vector.broadcast %cst_103 : f32 to vector<2x32xf32>
    %317 = arith.addf %315, %316 : vector<2x32xf32>
    %318 = vector.extract_strided_slice %301 {offsets = [0, 64], sizes = [2, 32], strides = [1, 1]} : vector<2x128xf32> to vector<2x32xf32>
    %319 = math.tanh %318 : vector<2x32xf32>
    %320 = vector.extract_strided_slice %301 {offsets = [0, 96], sizes = [2, 32], strides = [1, 1]} : vector<2x128xf32> to vector<2x32xf32>
    %cst_104 = arith.constant 5.000000e-01 : f32
    %321 = vector.broadcast %cst_104 : f32 to vector<2x32xf32>
    %322 = arith.mulf %321, %320 : vector<2x32xf32>
    %323 = math.tanh %322 : vector<2x32xf32>
    %cst_105 = arith.constant 5.000000e-01 : f32
    %324 = vector.broadcast %cst_105 : f32 to vector<2x32xf32>
    %325 = arith.mulf %324, %323 : vector<2x32xf32>
    %cst_106 = arith.constant 5.000000e-01 : f32
    %326 = vector.broadcast %cst_106 : f32 to vector<2x32xf32>
    %327 = arith.addf %325, %326 : vector<2x32xf32>
    %328 = arith.mulf %317, %226 : vector<2x32xf32>
    %329 = arith.mulf %309, %319 : vector<2x32xf32>
    %330 = arith.addf %328, %329 : vector<2x32xf32>
    %331 = math.tanh %330 : vector<2x32xf32>
    %332 = arith.mulf %327, %331 : vector<2x32xf32>
    %333 = vector.extract_strided_slice %19 {offsets = [6, 0], sizes = [2, 128], strides = [1, 1]} : vector<16x128xf32> to vector<2x128xf32>
    %cst_107 = arith.constant dense<0.000000e+00> : vector<2x128xf32>
    %334 = tpu.matmul %262, %1, %cst_107 {dimension_numbers = #tpu.dot_dimension_numbers<[1], [0], [0], [1], [0, 0, 1, 1], [], []>} : vector<2x32xf32>, vector<32x128xf32>, vector<2x128xf32> -> vector<2x128xf32>
    %335 = arith.addf %333, %334 : vector<2x128xf32>
    %336 = vector.extract_strided_slice %335 {offsets = [0, 0], sizes = [2, 32], strides = [1, 1]} : vector<2x128xf32> to vector<2x32xf32>
    %cst_108 = arith.constant 5.000000e-01 : f32
    %337 = vector.broadcast %cst_108 : f32 to vector<2x32xf32>
    %338 = arith.mulf %337, %336 : vector<2x32xf32>
    %339 = math.tanh %338 : vector<2x32xf32>
    %cst_109 = arith.constant 5.000000e-01 : f32
    %340 = vector.broadcast %cst_109 : f32 to vector<2x32xf32>
    %341 = arith.mulf %340, %339 : vector<2x32xf32>
    %cst_110 = arith.constant 5.000000e-01 : f32
    %342 = vector.broadcast %cst_110 : f32 to vector<2x32xf32>
    %343 = arith.addf %341, %342 : vector<2x32xf32>
    %344 = vector.extract_strided_slice %335 {offsets = [0, 32], sizes = [2, 32], strides = [1, 1]} : vector<2x128xf32> to vector<2x32xf32>
    %cst_111 = arith.constant 5.000000e-01 : f32
    %345 = vector.broadcast %cst_111 : f32 to vector<2x32xf32>
    %346 = arith.mulf %345, %344 : vector<2x32xf32>
    %347 = math.tanh %346 : vector<2x32xf32>
    %cst_112 = arith.constant 5.000000e-01 : f32
    %348 = vector.broadcast %cst_112 : f32 to vector<2x32xf32>
    %349 = arith.mulf %348, %347 : vector<2x32xf32>
    %cst_113 = arith.constant 5.000000e-01 : f32
    %350 = vector.broadcast %cst_113 : f32 to vector<2x32xf32>
    %351 = arith.addf %349, %350 : vector<2x32xf32>
    %352 = vector.extract_strided_slice %335 {offsets = [0, 64], sizes = [2, 32], strides = [1, 1]} : vector<2x128xf32> to vector<2x32xf32>
    %353 = math.tanh %352 : vector<2x32xf32>
    %354 = vector.extract_strided_slice %335 {offsets = [0, 96], sizes = [2, 32], strides = [1, 1]} : vector<2x128xf32> to vector<2x32xf32>
    %cst_114 = arith.constant 5.000000e-01 : f32
    %355 = vector.broadcast %cst_114 : f32 to vector<2x32xf32>
    %356 = arith.mulf %355, %354 : vector<2x32xf32>
    %357 = math.tanh %356 : vector<2x32xf32>
    %cst_115 = arith.constant 5.000000e-01 : f32
    %358 = vector.broadcast %cst_115 : f32 to vector<2x32xf32>
    %359 = arith.mulf %358, %357 : vector<2x32xf32>
    %cst_116 = arith.constant 5.000000e-01 : f32
    %360 = vector.broadcast %cst_116 : f32 to vector<2x32xf32>
    %361 = arith.addf %359, %360 : vector<2x32xf32>
    %362 = arith.mulf %351, %260 : vector<2x32xf32>
    %363 = arith.mulf %343, %353 : vector<2x32xf32>
    %364 = arith.addf %362, %363 : vector<2x32xf32>
    %365 = math.tanh %364 : vector<2x32xf32>
    %366 = arith.mulf %361, %365 : vector<2x32xf32>
    %cst_117 = arith.constant dense<0.000000e+00> : vector<2x128xf32>
    %367 = tpu.matmul %366, %3, %cst_117 {dimension_numbers = #tpu.dot_dimension_numbers<[1], [0], [0], [1], [0, 0, 1, 1], [], []>} : vector<2x32xf32>, vector<32x128xf32>, vector<2x128xf32> -> vector<2x128xf32>
    %cst_118 = arith.constant dense<0.000000e+00> : vector<2x128xf32>
    %368 = tpu.matmul %297, %4, %cst_118 {dimension_numbers = #tpu.dot_dimension_numbers<[1], [0], [0], [1], [0, 0, 1, 1], [], []>} : vector<2x32xf32>, vector<32x128xf32>, vector<2x128xf32> -> vector<2x128xf32>
    %369 = arith.addf %367, %368 : vector<2x128xf32>
    %370 = arith.addf %369, %10 : vector<2x128xf32>
    %371 = vector.extract_strided_slice %370 {offsets = [0, 0], sizes = [2, 32], strides = [1, 1]} : vector<2x128xf32> to vector<2x32xf32>
    %cst_119 = arith.constant 5.000000e-01 : f32
    %372 = vector.broadcast %cst_119 : f32 to vector<2x32xf32>
    %373 = arith.mulf %372, %371 : vector<2x32xf32>
    %374 = math.tanh %373 : vector<2x32xf32>
    %cst_120 = arith.constant 5.000000e-01 : f32
    %375 = vector.broadcast %cst_120 : f32 to vector<2x32xf32>
    %376 = arith.mulf %375, %374 : vector<2x32xf32>
    %cst_121 = arith.constant 5.000000e-01 : f32
    %377 = vector.broadcast %cst_121 : f32 to vector<2x32xf32>
    %378 = arith.addf %376, %377 : vector<2x32xf32>
    %379 = vector.extract_strided_slice %370 {offsets = [0, 32], sizes = [2, 32], strides = [1, 1]} : vector<2x128xf32> to vector<2x32xf32>
    %cst_122 = arith.constant 5.000000e-01 : f32
    %380 = vector.broadcast %cst_122 : f32 to vector<2x32xf32>
    %381 = arith.mulf %380, %379 : vector<2x32xf32>
    %382 = math.tanh %381 : vector<2x32xf32>
    %cst_123 = arith.constant 5.000000e-01 : f32
    %383 = vector.broadcast %cst_123 : f32 to vector<2x32xf32>
    %384 = arith.mulf %383, %382 : vector<2x32xf32>
    %cst_124 = arith.constant 5.000000e-01 : f32
    %385 = vector.broadcast %cst_124 : f32 to vector<2x32xf32>
    %386 = arith.addf %384, %385 : vector<2x32xf32>
    %387 = vector.extract_strided_slice %370 {offsets = [0, 64], sizes = [2, 32], strides = [1, 1]} : vector<2x128xf32> to vector<2x32xf32>
    %388 = math.tanh %387 : vector<2x32xf32>
    %389 = vector.extract_strided_slice %370 {offsets = [0, 96], sizes = [2, 32], strides = [1, 1]} : vector<2x128xf32> to vector<2x32xf32>
    %cst_125 = arith.constant 5.000000e-01 : f32
    %390 = vector.broadcast %cst_125 : f32 to vector<2x32xf32>
    %391 = arith.mulf %390, %389 : vector<2x32xf32>
    %392 = math.tanh %391 : vector<2x32xf32>
    %cst_126 = arith.constant 5.000000e-01 : f32
    %393 = vector.broadcast %cst_126 : f32 to vector<2x32xf32>
    %394 = arith.mulf %393, %392 : vector<2x32xf32>
    %cst_127 = arith.constant 5.000000e-01 : f32
    %395 = vector.broadcast %cst_127 : f32 to vector<2x32xf32>
    %396 = arith.addf %394, %395 : vector<2x32xf32>
    %397 = arith.mulf %386, %295 : vector<2x32xf32>
    %398 = arith.mulf %378, %388 : vector<2x32xf32>
    %399 = arith.addf %397, %398 : vector<2x32xf32>
    %400 = math.tanh %399 : vector<2x32xf32>
    %401 = arith.mulf %396, %400 : vector<2x32xf32>
    %cst_128 = arith.constant dense<0.000000e+00> : vector<2x128xf32>
    %402 = tpu.matmul %401, %6, %cst_128 {dimension_numbers = #tpu.dot_dimension_numbers<[1], [0], [0], [1], [0, 0, 1, 1], [], []>} : vector<2x32xf32>, vector<32x128xf32>, vector<2x128xf32> -> vector<2x128xf32>
    %cst_129 = arith.constant dense<0.000000e+00> : vector<2x128xf32>
    %403 = tpu.matmul %332, %7, %cst_129 {dimension_numbers = #tpu.dot_dimension_numbers<[1], [0], [0], [1], [0, 0, 1, 1], [], []>} : vector<2x32xf32>, vector<32x128xf32>, vector<2x128xf32> -> vector<2x128xf32>
    %404 = arith.addf %402, %403 : vector<2x128xf32>
    %405 = arith.addf %404, %12 : vector<2x128xf32>
    %406 = vector.extract_strided_slice %405 {offsets = [0, 0], sizes = [2, 32], strides = [1, 1]} : vector<2x128xf32> to vector<2x32xf32>
    %cst_130 = arith.constant 5.000000e-01 : f32
    %407 = vector.broadcast %cst_130 : f32 to vector<2x32xf32>
    %408 = arith.mulf %407, %406 : vector<2x32xf32>
    %409 = math.tanh %408 : vector<2x32xf32>
    %cst_131 = arith.constant 5.000000e-01 : f32
    %410 = vector.broadcast %cst_131 : f32 to vector<2x32xf32>
    %411 = arith.mulf %410, %409 : vector<2x32xf32>
    %cst_132 = arith.constant 5.000000e-01 : f32
    %412 = vector.broadcast %cst_132 : f32 to vector<2x32xf32>
    %413 = arith.addf %411, %412 : vector<2x32xf32>
    %414 = vector.extract_strided_slice %405 {offsets = [0, 32], sizes = [2, 32], strides = [1, 1]} : vector<2x128xf32> to vector<2x32xf32>
    %cst_133 = arith.constant 5.000000e-01 : f32
    %415 = vector.broadcast %cst_133 : f32 to vector<2x32xf32>
    %416 = arith.mulf %415, %414 : vector<2x32xf32>
    %417 = math.tanh %416 : vector<2x32xf32>
    %cst_134 = arith.constant 5.000000e-01 : f32
    %418 = vector.broadcast %cst_134 : f32 to vector<2x32xf32>
    %419 = arith.mulf %418, %417 : vector<2x32xf32>
    %cst_135 = arith.constant 5.000000e-01 : f32
    %420 = vector.broadcast %cst_135 : f32 to vector<2x32xf32>
    %421 = arith.addf %419, %420 : vector<2x32xf32>
    %422 = vector.extract_strided_slice %405 {offsets = [0, 64], sizes = [2, 32], strides = [1, 1]} : vector<2x128xf32> to vector<2x32xf32>
    %423 = math.tanh %422 : vector<2x32xf32>
    %424 = vector.extract_strided_slice %405 {offsets = [0, 96], sizes = [2, 32], strides = [1, 1]} : vector<2x128xf32> to vector<2x32xf32>
    %cst_136 = arith.constant 5.000000e-01 : f32
    %425 = vector.broadcast %cst_136 : f32 to vector<2x32xf32>
    %426 = arith.mulf %425, %424 : vector<2x32xf32>
    %427 = math.tanh %426 : vector<2x32xf32>
    %cst_137 = arith.constant 5.000000e-01 : f32
    %428 = vector.broadcast %cst_137 : f32 to vector<2x32xf32>
    %429 = arith.mulf %428, %427 : vector<2x32xf32>
    %cst_138 = arith.constant 5.000000e-01 : f32
    %430 = vector.broadcast %cst_138 : f32 to vector<2x32xf32>
    %431 = arith.addf %429, %430 : vector<2x32xf32>
    %432 = arith.mulf %421, %330 : vector<2x32xf32>
    %433 = arith.mulf %413, %423 : vector<2x32xf32>
    %434 = arith.addf %432, %433 : vector<2x32xf32>
    %435 = math.tanh %434 : vector<2x32xf32>
    %436 = arith.mulf %431, %435 : vector<2x32xf32>
    %437 = vector.extract_strided_slice %19 {offsets = [8, 0], sizes = [2, 128], strides = [1, 1]} : vector<16x128xf32> to vector<2x128xf32>
    %cst_139 = arith.constant dense<0.000000e+00> : vector<2x128xf32>
    %438 = tpu.matmul %366, %1, %cst_139 {dimension_numbers = #tpu.dot_dimension_numbers<[1], [0], [0], [1], [0, 0, 1, 1], [], []>} : vector<2x32xf32>, vector<32x128xf32>, vector<2x128xf32> -> vector<2x128xf32>
    %439 = arith.addf %437, %438 : vector<2x128xf32>
    %440 = vector.extract_strided_slice %439 {offsets = [0, 0], sizes = [2, 32], strides = [1, 1]} : vector<2x128xf32> to vector<2x32xf32>
    %cst_140 = arith.constant 5.000000e-01 : f32
    %441 = vector.broadcast %cst_140 : f32 to vector<2x32xf32>
    %442 = arith.mulf %441, %440 : vector<2x32xf32>
    %443 = math.tanh %442 : vector<2x32xf32>
    %cst_141 = arith.constant 5.000000e-01 : f32
    %444 = vector.broadcast %cst_141 : f32 to vector<2x32xf32>
    %445 = arith.mulf %444, %443 : vector<2x32xf32>
    %cst_142 = arith.constant 5.000000e-01 : f32
    %446 = vector.broadcast %cst_142 : f32 to vector<2x32xf32>
    %447 = arith.addf %445, %446 : vector<2x32xf32>
    %448 = vector.extract_strided_slice %439 {offsets = [0, 32], sizes = [2, 32], strides = [1, 1]} : vector<2x128xf32> to vector<2x32xf32>
    %cst_143 = arith.constant 5.000000e-01 : f32
    %449 = vector.broadcast %cst_143 : f32 to vector<2x32xf32>
    %450 = arith.mulf %449, %448 : vector<2x32xf32>
    %451 = math.tanh %450 : vector<2x32xf32>
    %cst_144 = arith.constant 5.000000e-01 : f32
    %452 = vector.broadcast %cst_144 : f32 to vector<2x32xf32>
    %453 = arith.mulf %452, %451 : vector<2x32xf32>
    %cst_145 = arith.constant 5.000000e-01 : f32
    %454 = vector.broadcast %cst_145 : f32 to vector<2x32xf32>
    %455 = arith.addf %453, %454 : vector<2x32xf32>
    %456 = vector.extract_strided_slice %439 {offsets = [0, 64], sizes = [2, 32], strides = [1, 1]} : vector<2x128xf32> to vector<2x32xf32>
    %457 = math.tanh %456 : vector<2x32xf32>
    %458 = vector.extract_strided_slice %439 {offsets = [0, 96], sizes = [2, 32], strides = [1, 1]} : vector<2x128xf32> to vector<2x32xf32>
    %cst_146 = arith.constant 5.000000e-01 : f32
    %459 = vector.broadcast %cst_146 : f32 to vector<2x32xf32>
    %460 = arith.mulf %459, %458 : vector<2x32xf32>
    %461 = math.tanh %460 : vector<2x32xf32>
    %cst_147 = arith.constant 5.000000e-01 : f32
    %462 = vector.broadcast %cst_147 : f32 to vector<2x32xf32>
    %463 = arith.mulf %462, %461 : vector<2x32xf32>
    %cst_148 = arith.constant 5.000000e-01 : f32
    %464 = vector.broadcast %cst_148 : f32 to vector<2x32xf32>
    %465 = arith.addf %463, %464 : vector<2x32xf32>
    %466 = arith.mulf %455, %364 : vector<2x32xf32>
    %467 = arith.mulf %447, %457 : vector<2x32xf32>
    %468 = arith.addf %466, %467 : vector<2x32xf32>
    %469 = math.tanh %468 : vector<2x32xf32>
    %470 = arith.mulf %465, %469 : vector<2x32xf32>
    %cst_149 = arith.constant dense<0.000000e+00> : vector<2x128xf32>
    %471 = tpu.matmul %470, %3, %cst_149 {dimension_numbers = #tpu.dot_dimension_numbers<[1], [0], [0], [1], [0, 0, 1, 1], [], []>} : vector<2x32xf32>, vector<32x128xf32>, vector<2x128xf32> -> vector<2x128xf32>
    %cst_150 = arith.constant dense<0.000000e+00> : vector<2x128xf32>
    %472 = tpu.matmul %401, %4, %cst_150 {dimension_numbers = #tpu.dot_dimension_numbers<[1], [0], [0], [1], [0, 0, 1, 1], [], []>} : vector<2x32xf32>, vector<32x128xf32>, vector<2x128xf32> -> vector<2x128xf32>
    %473 = arith.addf %471, %472 : vector<2x128xf32>
    %474 = arith.addf %473, %10 : vector<2x128xf32>
    %475 = vector.extract_strided_slice %474 {offsets = [0, 0], sizes = [2, 32], strides = [1, 1]} : vector<2x128xf32> to vector<2x32xf32>
    %cst_151 = arith.constant 5.000000e-01 : f32
    %476 = vector.broadcast %cst_151 : f32 to vector<2x32xf32>
    %477 = arith.mulf %476, %475 : vector<2x32xf32>
    %478 = math.tanh %477 : vector<2x32xf32>
    %cst_152 = arith.constant 5.000000e-01 : f32
    %479 = vector.broadcast %cst_152 : f32 to vector<2x32xf32>
    %480 = arith.mulf %479, %478 : vector<2x32xf32>
    %cst_153 = arith.constant 5.000000e-01 : f32
    %481 = vector.broadcast %cst_153 : f32 to vector<2x32xf32>
    %482 = arith.addf %480, %481 : vector<2x32xf32>
    %483 = vector.extract_strided_slice %474 {offsets = [0, 32], sizes = [2, 32], strides = [1, 1]} : vector<2x128xf32> to vector<2x32xf32>
    %cst_154 = arith.constant 5.000000e-01 : f32
    %484 = vector.broadcast %cst_154 : f32 to vector<2x32xf32>
    %485 = arith.mulf %484, %483 : vector<2x32xf32>
    %486 = math.tanh %485 : vector<2x32xf32>
    %cst_155 = arith.constant 5.000000e-01 : f32
    %487 = vector.broadcast %cst_155 : f32 to vector<2x32xf32>
    %488 = arith.mulf %487, %486 : vector<2x32xf32>
    %cst_156 = arith.constant 5.000000e-01 : f32
    %489 = vector.broadcast %cst_156 : f32 to vector<2x32xf32>
    %490 = arith.addf %488, %489 : vector<2x32xf32>
    %491 = vector.extract_strided_slice %474 {offsets = [0, 64], sizes = [2, 32], strides = [1, 1]} : vector<2x128xf32> to vector<2x32xf32>
    %492 = math.tanh %491 : vector<2x32xf32>
    %493 = vector.extract_strided_slice %474 {offsets = [0, 96], sizes = [2, 32], strides = [1, 1]} : vector<2x128xf32> to vector<2x32xf32>
    %cst_157 = arith.constant 5.000000e-01 : f32
    %494 = vector.broadcast %cst_157 : f32 to vector<2x32xf32>
    %495 = arith.mulf %494, %493 : vector<2x32xf32>
    %496 = math.tanh %495 : vector<2x32xf32>
    %cst_158 = arith.constant 5.000000e-01 : f32
    %497 = vector.broadcast %cst_158 : f32 to vector<2x32xf32>
    %498 = arith.mulf %497, %496 : vector<2x32xf32>
    %cst_159 = arith.constant 5.000000e-01 : f32
    %499 = vector.broadcast %cst_159 : f32 to vector<2x32xf32>
    %500 = arith.addf %498, %499 : vector<2x32xf32>
    %501 = arith.mulf %490, %399 : vector<2x32xf32>
    %502 = arith.mulf %482, %492 : vector<2x32xf32>
    %503 = arith.addf %501, %502 : vector<2x32xf32>
    %504 = math.tanh %503 : vector<2x32xf32>
    %505 = arith.mulf %500, %504 : vector<2x32xf32>
    %cst_160 = arith.constant dense<0.000000e+00> : vector<2x128xf32>
    %506 = tpu.matmul %505, %6, %cst_160 {dimension_numbers = #tpu.dot_dimension_numbers<[1], [0], [0], [1], [0, 0, 1, 1], [], []>} : vector<2x32xf32>, vector<32x128xf32>, vector<2x128xf32> -> vector<2x128xf32>
    %cst_161 = arith.constant dense<0.000000e+00> : vector<2x128xf32>
    %507 = tpu.matmul %436, %7, %cst_161 {dimension_numbers = #tpu.dot_dimension_numbers<[1], [0], [0], [1], [0, 0, 1, 1], [], []>} : vector<2x32xf32>, vector<32x128xf32>, vector<2x128xf32> -> vector<2x128xf32>
    %508 = arith.addf %506, %507 : vector<2x128xf32>
    %509 = arith.addf %508, %12 : vector<2x128xf32>
    %510 = vector.extract_strided_slice %509 {offsets = [0, 0], sizes = [2, 32], strides = [1, 1]} : vector<2x128xf32> to vector<2x32xf32>
    %cst_162 = arith.constant 5.000000e-01 : f32
    %511 = vector.broadcast %cst_162 : f32 to vector<2x32xf32>
    %512 = arith.mulf %511, %510 : vector<2x32xf32>
    %513 = math.tanh %512 : vector<2x32xf32>
    %cst_163 = arith.constant 5.000000e-01 : f32
    %514 = vector.broadcast %cst_163 : f32 to vector<2x32xf32>
    %515 = arith.mulf %514, %513 : vector<2x32xf32>
    %cst_164 = arith.constant 5.000000e-01 : f32
    %516 = vector.broadcast %cst_164 : f32 to vector<2x32xf32>
    %517 = arith.addf %515, %516 : vector<2x32xf32>
    %518 = vector.extract_strided_slice %509 {offsets = [0, 32], sizes = [2, 32], strides = [1, 1]} : vector<2x128xf32> to vector<2x32xf32>
    %cst_165 = arith.constant 5.000000e-01 : f32
    %519 = vector.broadcast %cst_165 : f32 to vector<2x32xf32>
    %520 = arith.mulf %519, %518 : vector<2x32xf32>
    %521 = math.tanh %520 : vector<2x32xf32>
    %cst_166 = arith.constant 5.000000e-01 : f32
    %522 = vector.broadcast %cst_166 : f32 to vector<2x32xf32>
    %523 = arith.mulf %522, %521 : vector<2x32xf32>
    %cst_167 = arith.constant 5.000000e-01 : f32
    %524 = vector.broadcast %cst_167 : f32 to vector<2x32xf32>
    %525 = arith.addf %523, %524 : vector<2x32xf32>
    %526 = vector.extract_strided_slice %509 {offsets = [0, 64], sizes = [2, 32], strides = [1, 1]} : vector<2x128xf32> to vector<2x32xf32>
    %527 = math.tanh %526 : vector<2x32xf32>
    %528 = vector.extract_strided_slice %509 {offsets = [0, 96], sizes = [2, 32], strides = [1, 1]} : vector<2x128xf32> to vector<2x32xf32>
    %cst_168 = arith.constant 5.000000e-01 : f32
    %529 = vector.broadcast %cst_168 : f32 to vector<2x32xf32>
    %530 = arith.mulf %529, %528 : vector<2x32xf32>
    %531 = math.tanh %530 : vector<2x32xf32>
    %cst_169 = arith.constant 5.000000e-01 : f32
    %532 = vector.broadcast %cst_169 : f32 to vector<2x32xf32>
    %533 = arith.mulf %532, %531 : vector<2x32xf32>
    %cst_170 = arith.constant 5.000000e-01 : f32
    %534 = vector.broadcast %cst_170 : f32 to vector<2x32xf32>
    %535 = arith.addf %533, %534 : vector<2x32xf32>
    %536 = arith.mulf %525, %434 : vector<2x32xf32>
    %537 = arith.mulf %517, %527 : vector<2x32xf32>
    %538 = arith.addf %536, %537 : vector<2x32xf32>
    %539 = math.tanh %538 : vector<2x32xf32>
    %540 = arith.mulf %535, %539 : vector<2x32xf32>
    %541 = vector.extract_strided_slice %19 {offsets = [10, 0], sizes = [2, 128], strides = [1, 1]} : vector<16x128xf32> to vector<2x128xf32>
    %cst_171 = arith.constant dense<0.000000e+00> : vector<2x128xf32>
    %542 = tpu.matmul %470, %1, %cst_171 {dimension_numbers = #tpu.dot_dimension_numbers<[1], [0], [0], [1], [0, 0, 1, 1], [], []>} : vector<2x32xf32>, vector<32x128xf32>, vector<2x128xf32> -> vector<2x128xf32>
    %543 = arith.addf %541, %542 : vector<2x128xf32>
    %544 = vector.extract_strided_slice %543 {offsets = [0, 0], sizes = [2, 32], strides = [1, 1]} : vector<2x128xf32> to vector<2x32xf32>
    %cst_172 = arith.constant 5.000000e-01 : f32
    %545 = vector.broadcast %cst_172 : f32 to vector<2x32xf32>
    %546 = arith.mulf %545, %544 : vector<2x32xf32>
    %547 = math.tanh %546 : vector<2x32xf32>
    %cst_173 = arith.constant 5.000000e-01 : f32
    %548 = vector.broadcast %cst_173 : f32 to vector<2x32xf32>
    %549 = arith.mulf %548, %547 : vector<2x32xf32>
    %cst_174 = arith.constant 5.000000e-01 : f32
    %550 = vector.broadcast %cst_174 : f32 to vector<2x32xf32>
    %551 = arith.addf %549, %550 : vector<2x32xf32>
    %552 = vector.extract_strided_slice %543 {offsets = [0, 32], sizes = [2, 32], strides = [1, 1]} : vector<2x128xf32> to vector<2x32xf32>
    %cst_175 = arith.constant 5.000000e-01 : f32
    %553 = vector.broadcast %cst_175 : f32 to vector<2x32xf32>
    %554 = arith.mulf %553, %552 : vector<2x32xf32>
    %555 = math.tanh %554 : vector<2x32xf32>
    %cst_176 = arith.constant 5.000000e-01 : f32
    %556 = vector.broadcast %cst_176 : f32 to vector<2x32xf32>
    %557 = arith.mulf %556, %555 : vector<2x32xf32>
    %cst_177 = arith.constant 5.000000e-01 : f32
    %558 = vector.broadcast %cst_177 : f32 to vector<2x32xf32>
    %559 = arith.addf %557, %558 : vector<2x32xf32>
    %560 = vector.extract_strided_slice %543 {offsets = [0, 64], sizes = [2, 32], strides = [1, 1]} : vector<2x128xf32> to vector<2x32xf32>
    %561 = math.tanh %560 : vector<2x32xf32>
    %562 = vector.extract_strided_slice %543 {offsets = [0, 96], sizes = [2, 32], strides = [1, 1]} : vector<2x128xf32> to vector<2x32xf32>
    %cst_178 = arith.constant 5.000000e-01 : f32
    %563 = vector.broadcast %cst_178 : f32 to vector<2x32xf32>
    %564 = arith.mulf %563, %562 : vector<2x32xf32>
    %565 = math.tanh %564 : vector<2x32xf32>
    %cst_179 = arith.constant 5.000000e-01 : f32
    %566 = vector.broadcast %cst_179 : f32 to vector<2x32xf32>
    %567 = arith.mulf %566, %565 : vector<2x32xf32>
    %cst_180 = arith.constant 5.000000e-01 : f32
    %568 = vector.broadcast %cst_180 : f32 to vector<2x32xf32>
    %569 = arith.addf %567, %568 : vector<2x32xf32>
    %570 = arith.mulf %559, %468 : vector<2x32xf32>
    %571 = arith.mulf %551, %561 : vector<2x32xf32>
    %572 = arith.addf %570, %571 : vector<2x32xf32>
    %573 = math.tanh %572 : vector<2x32xf32>
    %574 = arith.mulf %569, %573 : vector<2x32xf32>
    %cst_181 = arith.constant dense<0.000000e+00> : vector<2x128xf32>
    %575 = tpu.matmul %574, %3, %cst_181 {dimension_numbers = #tpu.dot_dimension_numbers<[1], [0], [0], [1], [0, 0, 1, 1], [], []>} : vector<2x32xf32>, vector<32x128xf32>, vector<2x128xf32> -> vector<2x128xf32>
    %cst_182 = arith.constant dense<0.000000e+00> : vector<2x128xf32>
    %576 = tpu.matmul %505, %4, %cst_182 {dimension_numbers = #tpu.dot_dimension_numbers<[1], [0], [0], [1], [0, 0, 1, 1], [], []>} : vector<2x32xf32>, vector<32x128xf32>, vector<2x128xf32> -> vector<2x128xf32>
    %577 = arith.addf %575, %576 : vector<2x128xf32>
    %578 = arith.addf %577, %10 : vector<2x128xf32>
    %579 = vector.extract_strided_slice %578 {offsets = [0, 0], sizes = [2, 32], strides = [1, 1]} : vector<2x128xf32> to vector<2x32xf32>
    %cst_183 = arith.constant 5.000000e-01 : f32
    %580 = vector.broadcast %cst_183 : f32 to vector<2x32xf32>
    %581 = arith.mulf %580, %579 : vector<2x32xf32>
    %582 = math.tanh %581 : vector<2x32xf32>
    %cst_184 = arith.constant 5.000000e-01 : f32
    %583 = vector.broadcast %cst_184 : f32 to vector<2x32xf32>
    %584 = arith.mulf %583, %582 : vector<2x32xf32>
    %cst_185 = arith.constant 5.000000e-01 : f32
    %585 = vector.broadcast %cst_185 : f32 to vector<2x32xf32>
    %586 = arith.addf %584, %585 : vector<2x32xf32>
    %587 = vector.extract_strided_slice %578 {offsets = [0, 32], sizes = [2, 32], strides = [1, 1]} : vector<2x128xf32> to vector<2x32xf32>
    %cst_186 = arith.constant 5.000000e-01 : f32
    %588 = vector.broadcast %cst_186 : f32 to vector<2x32xf32>
    %589 = arith.mulf %588, %587 : vector<2x32xf32>
    %590 = math.tanh %589 : vector<2x32xf32>
    %cst_187 = arith.constant 5.000000e-01 : f32
    %591 = vector.broadcast %cst_187 : f32 to vector<2x32xf32>
    %592 = arith.mulf %591, %590 : vector<2x32xf32>
    %cst_188 = arith.constant 5.000000e-01 : f32
    %593 = vector.broadcast %cst_188 : f32 to vector<2x32xf32>
    %594 = arith.addf %592, %593 : vector<2x32xf32>
    %595 = vector.extract_strided_slice %578 {offsets = [0, 64], sizes = [2, 32], strides = [1, 1]} : vector<2x128xf32> to vector<2x32xf32>
    %596 = math.tanh %595 : vector<2x32xf32>
    %597 = vector.extract_strided_slice %578 {offsets = [0, 96], sizes = [2, 32], strides = [1, 1]} : vector<2x128xf32> to vector<2x32xf32>
    %cst_189 = arith.constant 5.000000e-01 : f32
    %598 = vector.broadcast %cst_189 : f32 to vector<2x32xf32>
    %599 = arith.mulf %598, %597 : vector<2x32xf32>
    %600 = math.tanh %599 : vector<2x32xf32>
    %cst_190 = arith.constant 5.000000e-01 : f32
    %601 = vector.broadcast %cst_190 : f32 to vector<2x32xf32>
    %602 = arith.mulf %601, %600 : vector<2x32xf32>
    %cst_191 = arith.constant 5.000000e-01 : f32
    %603 = vector.broadcast %cst_191 : f32 to vector<2x32xf32>
    %604 = arith.addf %602, %603 : vector<2x32xf32>
    %605 = arith.mulf %594, %503 : vector<2x32xf32>
    %606 = arith.mulf %586, %596 : vector<2x32xf32>
    %607 = arith.addf %605, %606 : vector<2x32xf32>
    %608 = math.tanh %607 : vector<2x32xf32>
    %609 = arith.mulf %604, %608 : vector<2x32xf32>
    %cst_192 = arith.constant dense<0.000000e+00> : vector<2x128xf32>
    %610 = tpu.matmul %609, %6, %cst_192 {dimension_numbers = #tpu.dot_dimension_numbers<[1], [0], [0], [1], [0, 0, 1, 1], [], []>} : vector<2x32xf32>, vector<32x128xf32>, vector<2x128xf32> -> vector<2x128xf32>
    %cst_193 = arith.constant dense<0.000000e+00> : vector<2x128xf32>
    %611 = tpu.matmul %540, %7, %cst_193 {dimension_numbers = #tpu.dot_dimension_numbers<[1], [0], [0], [1], [0, 0, 1, 1], [], []>} : vector<2x32xf32>, vector<32x128xf32>, vector<2x128xf32> -> vector<2x128xf32>
    %612 = arith.addf %610, %611 : vector<2x128xf32>
    %613 = arith.addf %612, %12 : vector<2x128xf32>
    %614 = vector.extract_strided_slice %613 {offsets = [0, 0], sizes = [2, 32], strides = [1, 1]} : vector<2x128xf32> to vector<2x32xf32>
    %cst_194 = arith.constant 5.000000e-01 : f32
    %615 = vector.broadcast %cst_194 : f32 to vector<2x32xf32>
    %616 = arith.mulf %615, %614 : vector<2x32xf32>
    %617 = math.tanh %616 : vector<2x32xf32>
    %cst_195 = arith.constant 5.000000e-01 : f32
    %618 = vector.broadcast %cst_195 : f32 to vector<2x32xf32>
    %619 = arith.mulf %618, %617 : vector<2x32xf32>
    %cst_196 = arith.constant 5.000000e-01 : f32
    %620 = vector.broadcast %cst_196 : f32 to vector<2x32xf32>
    %621 = arith.addf %619, %620 : vector<2x32xf32>
    %622 = vector.extract_strided_slice %613 {offsets = [0, 32], sizes = [2, 32], strides = [1, 1]} : vector<2x128xf32> to vector<2x32xf32>
    %cst_197 = arith.constant 5.000000e-01 : f32
    %623 = vector.broadcast %cst_197 : f32 to vector<2x32xf32>
    %624 = arith.mulf %623, %622 : vector<2x32xf32>
    %625 = math.tanh %624 : vector<2x32xf32>
    %cst_198 = arith.constant 5.000000e-01 : f32
    %626 = vector.broadcast %cst_198 : f32 to vector<2x32xf32>
    %627 = arith.mulf %626, %625 : vector<2x32xf32>
    %cst_199 = arith.constant 5.000000e-01 : f32
    %628 = vector.broadcast %cst_199 : f32 to vector<2x32xf32>
    %629 = arith.addf %627, %628 : vector<2x32xf32>
    %630 = vector.extract_strided_slice %613 {offsets = [0, 64], sizes = [2, 32], strides = [1, 1]} : vector<2x128xf32> to vector<2x32xf32>
    %631 = math.tanh %630 : vector<2x32xf32>
    %632 = vector.extract_strided_slice %613 {offsets = [0, 96], sizes = [2, 32], strides = [1, 1]} : vector<2x128xf32> to vector<2x32xf32>
    %cst_200 = arith.constant 5.000000e-01 : f32
    %633 = vector.broadcast %cst_200 : f32 to vector<2x32xf32>
    %634 = arith.mulf %633, %632 : vector<2x32xf32>
    %635 = math.tanh %634 : vector<2x32xf32>
    %cst_201 = arith.constant 5.000000e-01 : f32
    %636 = vector.broadcast %cst_201 : f32 to vector<2x32xf32>
    %637 = arith.mulf %636, %635 : vector<2x32xf32>
    %cst_202 = arith.constant 5.000000e-01 : f32
    %638 = vector.broadcast %cst_202 : f32 to vector<2x32xf32>
    %639 = arith.addf %637, %638 : vector<2x32xf32>
    %640 = arith.mulf %629, %538 : vector<2x32xf32>
    %641 = arith.mulf %621, %631 : vector<2x32xf32>
    %642 = arith.addf %640, %641 : vector<2x32xf32>
    %643 = math.tanh %642 : vector<2x32xf32>
    %644 = arith.mulf %639, %643 : vector<2x32xf32>
    %645 = vector.extract_strided_slice %19 {offsets = [12, 0], sizes = [2, 128], strides = [1, 1]} : vector<16x128xf32> to vector<2x128xf32>
    %cst_203 = arith.constant dense<0.000000e+00> : vector<2x128xf32>
    %646 = tpu.matmul %574, %1, %cst_203 {dimension_numbers = #tpu.dot_dimension_numbers<[1], [0], [0], [1], [0, 0, 1, 1], [], []>} : vector<2x32xf32>, vector<32x128xf32>, vector<2x128xf32> -> vector<2x128xf32>
    %647 = arith.addf %645, %646 : vector<2x128xf32>
    %648 = vector.extract_strided_slice %647 {offsets = [0, 0], sizes = [2, 32], strides = [1, 1]} : vector<2x128xf32> to vector<2x32xf32>
    %cst_204 = arith.constant 5.000000e-01 : f32
    %649 = vector.broadcast %cst_204 : f32 to vector<2x32xf32>
    %650 = arith.mulf %649, %648 : vector<2x32xf32>
    %651 = math.tanh %650 : vector<2x32xf32>
    %cst_205 = arith.constant 5.000000e-01 : f32
    %652 = vector.broadcast %cst_205 : f32 to vector<2x32xf32>
    %653 = arith.mulf %652, %651 : vector<2x32xf32>
    %cst_206 = arith.constant 5.000000e-01 : f32
    %654 = vector.broadcast %cst_206 : f32 to vector<2x32xf32>
    %655 = arith.addf %653, %654 : vector<2x32xf32>
    %656 = vector.extract_strided_slice %647 {offsets = [0, 32], sizes = [2, 32], strides = [1, 1]} : vector<2x128xf32> to vector<2x32xf32>
    %cst_207 = arith.constant 5.000000e-01 : f32
    %657 = vector.broadcast %cst_207 : f32 to vector<2x32xf32>
    %658 = arith.mulf %657, %656 : vector<2x32xf32>
    %659 = math.tanh %658 : vector<2x32xf32>
    %cst_208 = arith.constant 5.000000e-01 : f32
    %660 = vector.broadcast %cst_208 : f32 to vector<2x32xf32>
    %661 = arith.mulf %660, %659 : vector<2x32xf32>
    %cst_209 = arith.constant 5.000000e-01 : f32
    %662 = vector.broadcast %cst_209 : f32 to vector<2x32xf32>
    %663 = arith.addf %661, %662 : vector<2x32xf32>
    %664 = vector.extract_strided_slice %647 {offsets = [0, 64], sizes = [2, 32], strides = [1, 1]} : vector<2x128xf32> to vector<2x32xf32>
    %665 = math.tanh %664 : vector<2x32xf32>
    %666 = vector.extract_strided_slice %647 {offsets = [0, 96], sizes = [2, 32], strides = [1, 1]} : vector<2x128xf32> to vector<2x32xf32>
    %cst_210 = arith.constant 5.000000e-01 : f32
    %667 = vector.broadcast %cst_210 : f32 to vector<2x32xf32>
    %668 = arith.mulf %667, %666 : vector<2x32xf32>
    %669 = math.tanh %668 : vector<2x32xf32>
    %cst_211 = arith.constant 5.000000e-01 : f32
    %670 = vector.broadcast %cst_211 : f32 to vector<2x32xf32>
    %671 = arith.mulf %670, %669 : vector<2x32xf32>
    %cst_212 = arith.constant 5.000000e-01 : f32
    %672 = vector.broadcast %cst_212 : f32 to vector<2x32xf32>
    %673 = arith.addf %671, %672 : vector<2x32xf32>
    %674 = arith.mulf %663, %572 : vector<2x32xf32>
    %675 = arith.mulf %655, %665 : vector<2x32xf32>
    %676 = arith.addf %674, %675 : vector<2x32xf32>
    %677 = math.tanh %676 : vector<2x32xf32>
    %678 = arith.mulf %673, %677 : vector<2x32xf32>
    %cst_213 = arith.constant dense<0.000000e+00> : vector<2x128xf32>
    %679 = tpu.matmul %678, %3, %cst_213 {dimension_numbers = #tpu.dot_dimension_numbers<[1], [0], [0], [1], [0, 0, 1, 1], [], []>} : vector<2x32xf32>, vector<32x128xf32>, vector<2x128xf32> -> vector<2x128xf32>
    %cst_214 = arith.constant dense<0.000000e+00> : vector<2x128xf32>
    %680 = tpu.matmul %609, %4, %cst_214 {dimension_numbers = #tpu.dot_dimension_numbers<[1], [0], [0], [1], [0, 0, 1, 1], [], []>} : vector<2x32xf32>, vector<32x128xf32>, vector<2x128xf32> -> vector<2x128xf32>
    %681 = arith.addf %679, %680 : vector<2x128xf32>
    %682 = arith.addf %681, %10 : vector<2x128xf32>
    %683 = vector.extract_strided_slice %682 {offsets = [0, 0], sizes = [2, 32], strides = [1, 1]} : vector<2x128xf32> to vector<2x32xf32>
    %cst_215 = arith.constant 5.000000e-01 : f32
    %684 = vector.broadcast %cst_215 : f32 to vector<2x32xf32>
    %685 = arith.mulf %684, %683 : vector<2x32xf32>
    %686 = math.tanh %685 : vector<2x32xf32>
    %cst_216 = arith.constant 5.000000e-01 : f32
    %687 = vector.broadcast %cst_216 : f32 to vector<2x32xf32>
    %688 = arith.mulf %687, %686 : vector<2x32xf32>
    %cst_217 = arith.constant 5.000000e-01 : f32
    %689 = vector.broadcast %cst_217 : f32 to vector<2x32xf32>
    %690 = arith.addf %688, %689 : vector<2x32xf32>
    %691 = vector.extract_strided_slice %682 {offsets = [0, 32], sizes = [2, 32], strides = [1, 1]} : vector<2x128xf32> to vector<2x32xf32>
    %cst_218 = arith.constant 5.000000e-01 : f32
    %692 = vector.broadcast %cst_218 : f32 to vector<2x32xf32>
    %693 = arith.mulf %692, %691 : vector<2x32xf32>
    %694 = math.tanh %693 : vector<2x32xf32>
    %cst_219 = arith.constant 5.000000e-01 : f32
    %695 = vector.broadcast %cst_219 : f32 to vector<2x32xf32>
    %696 = arith.mulf %695, %694 : vector<2x32xf32>
    %cst_220 = arith.constant 5.000000e-01 : f32
    %697 = vector.broadcast %cst_220 : f32 to vector<2x32xf32>
    %698 = arith.addf %696, %697 : vector<2x32xf32>
    %699 = vector.extract_strided_slice %682 {offsets = [0, 64], sizes = [2, 32], strides = [1, 1]} : vector<2x128xf32> to vector<2x32xf32>
    %700 = math.tanh %699 : vector<2x32xf32>
    %701 = vector.extract_strided_slice %682 {offsets = [0, 96], sizes = [2, 32], strides = [1, 1]} : vector<2x128xf32> to vector<2x32xf32>
    %cst_221 = arith.constant 5.000000e-01 : f32
    %702 = vector.broadcast %cst_221 : f32 to vector<2x32xf32>
    %703 = arith.mulf %702, %701 : vector<2x32xf32>
    %704 = math.tanh %703 : vector<2x32xf32>
    %cst_222 = arith.constant 5.000000e-01 : f32
    %705 = vector.broadcast %cst_222 : f32 to vector<2x32xf32>
    %706 = arith.mulf %705, %704 : vector<2x32xf32>
    %cst_223 = arith.constant 5.000000e-01 : f32
    %707 = vector.broadcast %cst_223 : f32 to vector<2x32xf32>
    %708 = arith.addf %706, %707 : vector<2x32xf32>
    %709 = arith.mulf %698, %607 : vector<2x32xf32>
    %710 = arith.mulf %690, %700 : vector<2x32xf32>
    %711 = arith.addf %709, %710 : vector<2x32xf32>
    %712 = math.tanh %711 : vector<2x32xf32>
    %713 = arith.mulf %708, %712 : vector<2x32xf32>
    %cst_224 = arith.constant dense<0.000000e+00> : vector<2x128xf32>
    %714 = tpu.matmul %713, %6, %cst_224 {dimension_numbers = #tpu.dot_dimension_numbers<[1], [0], [0], [1], [0, 0, 1, 1], [], []>} : vector<2x32xf32>, vector<32x128xf32>, vector<2x128xf32> -> vector<2x128xf32>
    %cst_225 = arith.constant dense<0.000000e+00> : vector<2x128xf32>
    %715 = tpu.matmul %644, %7, %cst_225 {dimension_numbers = #tpu.dot_dimension_numbers<[1], [0], [0], [1], [0, 0, 1, 1], [], []>} : vector<2x32xf32>, vector<32x128xf32>, vector<2x128xf32> -> vector<2x128xf32>
    %716 = arith.addf %714, %715 : vector<2x128xf32>
    %717 = arith.addf %716, %12 : vector<2x128xf32>
    %718 = vector.extract_strided_slice %717 {offsets = [0, 0], sizes = [2, 32], strides = [1, 1]} : vector<2x128xf32> to vector<2x32xf32>
    %cst_226 = arith.constant 5.000000e-01 : f32
    %719 = vector.broadcast %cst_226 : f32 to vector<2x32xf32>
    %720 = arith.mulf %719, %718 : vector<2x32xf32>
    %721 = math.tanh %720 : vector<2x32xf32>
    %cst_227 = arith.constant 5.000000e-01 : f32
    %722 = vector.broadcast %cst_227 : f32 to vector<2x32xf32>
    %723 = arith.mulf %722, %721 : vector<2x32xf32>
    %cst_228 = arith.constant 5.000000e-01 : f32
    %724 = vector.broadcast %cst_228 : f32 to vector<2x32xf32>
    %725 = arith.addf %723, %724 : vector<2x32xf32>
    %726 = vector.extract_strided_slice %717 {offsets = [0, 32], sizes = [2, 32], strides = [1, 1]} : vector<2x128xf32> to vector<2x32xf32>
    %cst_229 = arith.constant 5.000000e-01 : f32
    %727 = vector.broadcast %cst_229 : f32 to vector<2x32xf32>
    %728 = arith.mulf %727, %726 : vector<2x32xf32>
    %729 = math.tanh %728 : vector<2x32xf32>
    %cst_230 = arith.constant 5.000000e-01 : f32
    %730 = vector.broadcast %cst_230 : f32 to vector<2x32xf32>
    %731 = arith.mulf %730, %729 : vector<2x32xf32>
    %cst_231 = arith.constant 5.000000e-01 : f32
    %732 = vector.broadcast %cst_231 : f32 to vector<2x32xf32>
    %733 = arith.addf %731, %732 : vector<2x32xf32>
    %734 = vector.extract_strided_slice %717 {offsets = [0, 64], sizes = [2, 32], strides = [1, 1]} : vector<2x128xf32> to vector<2x32xf32>
    %735 = math.tanh %734 : vector<2x32xf32>
    %736 = vector.extract_strided_slice %717 {offsets = [0, 96], sizes = [2, 32], strides = [1, 1]} : vector<2x128xf32> to vector<2x32xf32>
    %cst_232 = arith.constant 5.000000e-01 : f32
    %737 = vector.broadcast %cst_232 : f32 to vector<2x32xf32>
    %738 = arith.mulf %737, %736 : vector<2x32xf32>
    %739 = math.tanh %738 : vector<2x32xf32>
    %cst_233 = arith.constant 5.000000e-01 : f32
    %740 = vector.broadcast %cst_233 : f32 to vector<2x32xf32>
    %741 = arith.mulf %740, %739 : vector<2x32xf32>
    %cst_234 = arith.constant 5.000000e-01 : f32
    %742 = vector.broadcast %cst_234 : f32 to vector<2x32xf32>
    %743 = arith.addf %741, %742 : vector<2x32xf32>
    %744 = arith.mulf %733, %642 : vector<2x32xf32>
    %745 = arith.mulf %725, %735 : vector<2x32xf32>
    %746 = arith.addf %744, %745 : vector<2x32xf32>
    %747 = math.tanh %746 : vector<2x32xf32>
    %748 = arith.mulf %743, %747 : vector<2x32xf32>
    %749 = vector.extract_strided_slice %19 {offsets = [14, 0], sizes = [2, 128], strides = [1, 1]} : vector<16x128xf32> to vector<2x128xf32>
    %cst_235 = arith.constant dense<0.000000e+00> : vector<2x128xf32>
    %750 = tpu.matmul %678, %1, %cst_235 {dimension_numbers = #tpu.dot_dimension_numbers<[1], [0], [0], [1], [0, 0, 1, 1], [], []>} : vector<2x32xf32>, vector<32x128xf32>, vector<2x128xf32> -> vector<2x128xf32>
    %751 = arith.addf %749, %750 : vector<2x128xf32>
    %752 = vector.extract_strided_slice %751 {offsets = [0, 0], sizes = [2, 32], strides = [1, 1]} : vector<2x128xf32> to vector<2x32xf32>
    %cst_236 = arith.constant 5.000000e-01 : f32
    %753 = vector.broadcast %cst_236 : f32 to vector<2x32xf32>
    %754 = arith.mulf %753, %752 : vector<2x32xf32>
    %755 = math.tanh %754 : vector<2x32xf32>
    %cst_237 = arith.constant 5.000000e-01 : f32
    %756 = vector.broadcast %cst_237 : f32 to vector<2x32xf32>
    %757 = arith.mulf %756, %755 : vector<2x32xf32>
    %cst_238 = arith.constant 5.000000e-01 : f32
    %758 = vector.broadcast %cst_238 : f32 to vector<2x32xf32>
    %759 = arith.addf %757, %758 : vector<2x32xf32>
    %760 = vector.extract_strided_slice %751 {offsets = [0, 32], sizes = [2, 32], strides = [1, 1]} : vector<2x128xf32> to vector<2x32xf32>
    %cst_239 = arith.constant 5.000000e-01 : f32
    %761 = vector.broadcast %cst_239 : f32 to vector<2x32xf32>
    %762 = arith.mulf %761, %760 : vector<2x32xf32>
    %763 = math.tanh %762 : vector<2x32xf32>
    %cst_240 = arith.constant 5.000000e-01 : f32
    %764 = vector.broadcast %cst_240 : f32 to vector<2x32xf32>
    %765 = arith.mulf %764, %763 : vector<2x32xf32>
    %cst_241 = arith.constant 5.000000e-01 : f32
    %766 = vector.broadcast %cst_241 : f32 to vector<2x32xf32>
    %767 = arith.addf %765, %766 : vector<2x32xf32>
    %768 = vector.extract_strided_slice %751 {offsets = [0, 64], sizes = [2, 32], strides = [1, 1]} : vector<2x128xf32> to vector<2x32xf32>
    %769 = math.tanh %768 : vector<2x32xf32>
    %770 = vector.extract_strided_slice %751 {offsets = [0, 96], sizes = [2, 32], strides = [1, 1]} : vector<2x128xf32> to vector<2x32xf32>
    %cst_242 = arith.constant 5.000000e-01 : f32
    %771 = vector.broadcast %cst_242 : f32 to vector<2x32xf32>
    %772 = arith.mulf %771, %770 : vector<2x32xf32>
    %773 = math.tanh %772 : vector<2x32xf32>
    %cst_243 = arith.constant 5.000000e-01 : f32
    %774 = vector.broadcast %cst_243 : f32 to vector<2x32xf32>
    %775 = arith.mulf %774, %773 : vector<2x32xf32>
    %cst_244 = arith.constant 5.000000e-01 : f32
    %776 = vector.broadcast %cst_244 : f32 to vector<2x32xf32>
    %777 = arith.addf %775, %776 : vector<2x32xf32>
    %778 = arith.mulf %767, %676 : vector<2x32xf32>
    %779 = arith.mulf %759, %769 : vector<2x32xf32>
    %780 = arith.addf %778, %779 : vector<2x32xf32>
    %781 = math.tanh %780 : vector<2x32xf32>
    %782 = arith.mulf %777, %781 : vector<2x32xf32>
    %cst_245 = arith.constant dense<0.000000e+00> : vector<2x128xf32>
    %783 = tpu.matmul %782, %3, %cst_245 {dimension_numbers = #tpu.dot_dimension_numbers<[1], [0], [0], [1], [0, 0, 1, 1], [], []>} : vector<2x32xf32>, vector<32x128xf32>, vector<2x128xf32> -> vector<2x128xf32>
    %cst_246 = arith.constant dense<0.000000e+00> : vector<2x128xf32>
    %784 = tpu.matmul %713, %4, %cst_246 {dimension_numbers = #tpu.dot_dimension_numbers<[1], [0], [0], [1], [0, 0, 1, 1], [], []>} : vector<2x32xf32>, vector<32x128xf32>, vector<2x128xf32> -> vector<2x128xf32>
    %785 = arith.addf %783, %784 : vector<2x128xf32>
    %786 = arith.addf %785, %10 : vector<2x128xf32>
    %787 = vector.extract_strided_slice %786 {offsets = [0, 0], sizes = [2, 32], strides = [1, 1]} : vector<2x128xf32> to vector<2x32xf32>
    %cst_247 = arith.constant 5.000000e-01 : f32
    %788 = vector.broadcast %cst_247 : f32 to vector<2x32xf32>
    %789 = arith.mulf %788, %787 : vector<2x32xf32>
    %790 = math.tanh %789 : vector<2x32xf32>
    %cst_248 = arith.constant 5.000000e-01 : f32
    %791 = vector.broadcast %cst_248 : f32 to vector<2x32xf32>
    %792 = arith.mulf %791, %790 : vector<2x32xf32>
    %cst_249 = arith.constant 5.000000e-01 : f32
    %793 = vector.broadcast %cst_249 : f32 to vector<2x32xf32>
    %794 = arith.addf %792, %793 : vector<2x32xf32>
    %795 = vector.extract_strided_slice %786 {offsets = [0, 32], sizes = [2, 32], strides = [1, 1]} : vector<2x128xf32> to vector<2x32xf32>
    %cst_250 = arith.constant 5.000000e-01 : f32
    %796 = vector.broadcast %cst_250 : f32 to vector<2x32xf32>
    %797 = arith.mulf %796, %795 : vector<2x32xf32>
    %798 = math.tanh %797 : vector<2x32xf32>
    %cst_251 = arith.constant 5.000000e-01 : f32
    %799 = vector.broadcast %cst_251 : f32 to vector<2x32xf32>
    %800 = arith.mulf %799, %798 : vector<2x32xf32>
    %cst_252 = arith.constant 5.000000e-01 : f32
    %801 = vector.broadcast %cst_252 : f32 to vector<2x32xf32>
    %802 = arith.addf %800, %801 : vector<2x32xf32>
    %803 = vector.extract_strided_slice %786 {offsets = [0, 64], sizes = [2, 32], strides = [1, 1]} : vector<2x128xf32> to vector<2x32xf32>
    %804 = math.tanh %803 : vector<2x32xf32>
    %805 = vector.extract_strided_slice %786 {offsets = [0, 96], sizes = [2, 32], strides = [1, 1]} : vector<2x128xf32> to vector<2x32xf32>
    %cst_253 = arith.constant 5.000000e-01 : f32
    %806 = vector.broadcast %cst_253 : f32 to vector<2x32xf32>
    %807 = arith.mulf %806, %805 : vector<2x32xf32>
    %808 = math.tanh %807 : vector<2x32xf32>
    %cst_254 = arith.constant 5.000000e-01 : f32
    %809 = vector.broadcast %cst_254 : f32 to vector<2x32xf32>
    %810 = arith.mulf %809, %808 : vector<2x32xf32>
    %cst_255 = arith.constant 5.000000e-01 : f32
    %811 = vector.broadcast %cst_255 : f32 to vector<2x32xf32>
    %812 = arith.addf %810, %811 : vector<2x32xf32>
    %813 = arith.mulf %802, %711 : vector<2x32xf32>
    %814 = arith.mulf %794, %804 : vector<2x32xf32>
    %815 = arith.addf %813, %814 : vector<2x32xf32>
    %816 = math.tanh %815 : vector<2x32xf32>
    %817 = arith.mulf %812, %816 : vector<2x32xf32>
    %cst_256 = arith.constant dense<0.000000e+00> : vector<2x128xf32>
    %818 = tpu.matmul %817, %6, %cst_256 {dimension_numbers = #tpu.dot_dimension_numbers<[1], [0], [0], [1], [0, 0, 1, 1], [], []>} : vector<2x32xf32>, vector<32x128xf32>, vector<2x128xf32> -> vector<2x128xf32>
    %cst_257 = arith.constant dense<0.000000e+00> : vector<2x128xf32>
    %819 = tpu.matmul %748, %7, %cst_257 {dimension_numbers = #tpu.dot_dimension_numbers<[1], [0], [0], [1], [0, 0, 1, 1], [], []>} : vector<2x32xf32>, vector<32x128xf32>, vector<2x128xf32> -> vector<2x128xf32>
    %820 = arith.addf %818, %819 : vector<2x128xf32>
    %821 = arith.addf %820, %12 : vector<2x128xf32>
    %822 = vector.extract_strided_slice %821 {offsets = [0, 0], sizes = [2, 32], strides = [1, 1]} : vector<2x128xf32> to vector<2x32xf32>
    %cst_258 = arith.constant 5.000000e-01 : f32
    %823 = vector.broadcast %cst_258 : f32 to vector<2x32xf32>
    %824 = arith.mulf %823, %822 : vector<2x32xf32>
    %825 = math.tanh %824 : vector<2x32xf32>
    %cst_259 = arith.constant 5.000000e-01 : f32
    %826 = vector.broadcast %cst_259 : f32 to vector<2x32xf32>
    %827 = arith.mulf %826, %825 : vector<2x32xf32>
    %cst_260 = arith.constant 5.000000e-01 : f32
    %828 = vector.broadcast %cst_260 : f32 to vector<2x32xf32>
    %829 = arith.addf %827, %828 : vector<2x32xf32>
    %830 = vector.extract_strided_slice %821 {offsets = [0, 32], sizes = [2, 32], strides = [1, 1]} : vector<2x128xf32> to vector<2x32xf32>
    %cst_261 = arith.constant 5.000000e-01 : f32
    %831 = vector.broadcast %cst_261 : f32 to vector<2x32xf32>
    %832 = arith.mulf %831, %830 : vector<2x32xf32>
    %833 = math.tanh %832 : vector<2x32xf32>
    %cst_262 = arith.constant 5.000000e-01 : f32
    %834 = vector.broadcast %cst_262 : f32 to vector<2x32xf32>
    %835 = arith.mulf %834, %833 : vector<2x32xf32>
    %cst_263 = arith.constant 5.000000e-01 : f32
    %836 = vector.broadcast %cst_263 : f32 to vector<2x32xf32>
    %837 = arith.addf %835, %836 : vector<2x32xf32>
    %838 = vector.extract_strided_slice %821 {offsets = [0, 64], sizes = [2, 32], strides = [1, 1]} : vector<2x128xf32> to vector<2x32xf32>
    %839 = math.tanh %838 : vector<2x32xf32>
    %840 = vector.extract_strided_slice %821 {offsets = [0, 96], sizes = [2, 32], strides = [1, 1]} : vector<2x128xf32> to vector<2x32xf32>
    %cst_264 = arith.constant 5.000000e-01 : f32
    %841 = vector.broadcast %cst_264 : f32 to vector<2x32xf32>
    %842 = arith.mulf %841, %840 : vector<2x32xf32>
    %843 = math.tanh %842 : vector<2x32xf32>
    %cst_265 = arith.constant 5.000000e-01 : f32
    %844 = vector.broadcast %cst_265 : f32 to vector<2x32xf32>
    %845 = arith.mulf %844, %843 : vector<2x32xf32>
    %cst_266 = arith.constant 5.000000e-01 : f32
    %846 = vector.broadcast %cst_266 : f32 to vector<2x32xf32>
    %847 = arith.addf %845, %846 : vector<2x32xf32>
    %848 = arith.mulf %837, %746 : vector<2x32xf32>
    %849 = arith.mulf %829, %839 : vector<2x32xf32>
    %850 = arith.addf %848, %849 : vector<2x32xf32>
    %851 = math.tanh %850 : vector<2x32xf32>
    %852 = arith.mulf %847, %851 : vector<2x32xf32>
    %c192 = arith.constant 192 : index
    %c0_267 = arith.constant 0 : index
    %853 = vector.load %arg1[%c192, %c0_267] : memref<520x128xf32, #tpu.memory_space<vmem>>, vector<1x128xf32>
    %854 = vector.extract_strided_slice %853 {offsets = [0, 0], sizes = [1, 32], strides = [1, 1]} : vector<1x128xf32> to vector<1x32xf32>
    %c200 = arith.constant 200 : index
    %c0_268 = arith.constant 0 : index
    %855 = vector.load %arg1[%c200, %c0_268] : memref<520x128xf32, #tpu.memory_space<vmem>>, vector<1x128xf32>
    %856 = vector.extract_strided_slice %855 {offsets = [0, 0], sizes = [1, 32], strides = [1, 1]} : vector<1x128xf32> to vector<1x32xf32>
    %cst_269 = arith.constant dense<0.000000e+00> : vector<2xf32>
    %857 = vector.multi_reduction <add>, %852, %cst_269 [1] : vector<2x32xf32> to vector<2xf32>
    %858 = vector.shape_cast %857 : vector<2xf32> to vector<2x1xf32>
    %cst_270 = arith.constant 3.200000e+01 : f32
    %859 = vector.broadcast %cst_270 : f32 to vector<2x1xf32>
    %860 = arith.divf %858, %859 : vector<2x1xf32>
    %861 = vector.broadcast %860 : vector<2x1xf32> to vector<2x32xf32>
    %862 = arith.subf %852, %861 : vector<2x32xf32>
    %863 = arith.mulf %862, %862 : vector<2x32xf32>
    %cst_271 = arith.constant dense<0.000000e+00> : vector<2xf32>
    %864 = vector.multi_reduction <add>, %863, %cst_271 [1] : vector<2x32xf32> to vector<2xf32>
    %865 = vector.shape_cast %864 : vector<2xf32> to vector<2x1xf32>
    %cst_272 = arith.constant 3.200000e+01 : f32
    %866 = vector.broadcast %cst_272 : f32 to vector<2x1xf32>
    %867 = arith.divf %865, %866 : vector<2x1xf32>
    %868 = vector.broadcast %860 : vector<2x1xf32> to vector<2x32xf32>
    %869 = arith.subf %852, %868 : vector<2x32xf32>
    %cst_273 = arith.constant 9.99999974E-6 : f32
    %870 = vector.broadcast %cst_273 : f32 to vector<2x1xf32>
    %871 = arith.addf %867, %870 : vector<2x1xf32>
    %872 = math.rsqrt %871 : vector<2x1xf32>
    %873 = vector.broadcast %872 : vector<2x1xf32> to vector<2x32xf32>
    %874 = arith.mulf %869, %873 : vector<2x32xf32>
    %875 = vector.broadcast %854 : vector<1x32xf32> to vector<2x32xf32>
    %876 = arith.mulf %874, %875 : vector<2x32xf32>
    %877 = vector.broadcast %856 : vector<1x32xf32> to vector<2x32xf32>
    %878 = arith.addf %876, %877 : vector<2x32xf32>
    %c208 = arith.constant 208 : index
    %c0_274 = arith.constant 0 : index
    %879 = vector.load %arg1[%c208, %c0_274] : memref<520x128xf32, #tpu.memory_space<vmem>>, vector<32x128xf32>
    %c240 = arith.constant 240 : index
    %c0_275 = arith.constant 0 : index
    %880 = vector.load %arg1[%c240, %c0_275] : memref<520x128xf32, #tpu.memory_space<vmem>>, vector<1x128xf32>
    %c248 = arith.constant 248 : index
    %c0_276 = arith.constant 0 : index
    %881 = vector.load %arg1[%c248, %c0_276] : memref<520x128xf32, #tpu.memory_space<vmem>>, vector<128x128xf32>
    %c376 = arith.constant 376 : index
    %c0_277 = arith.constant 0 : index
    %882 = vector.load %arg1[%c376, %c0_277] : memref<520x128xf32, #tpu.memory_space<vmem>>, vector<1x128xf32>
    %c384 = arith.constant 384 : index
    %c0_278 = arith.constant 0 : index
    %883 = vector.load %arg1[%c384, %c0_278] : memref<520x128xf32, #tpu.memory_space<vmem>>, vector<128x128xf32>
    %c512 = arith.constant 512 : index
    %c0_279 = arith.constant 0 : index
    %884 = vector.load %arg1[%c512, %c0_279] : memref<520x128xf32, #tpu.memory_space<vmem>>, vector<1x128xf32>
    %cst_280 = arith.constant dense<0.000000e+00> : vector<2x128xf32>
    %885 = tpu.matmul %878, %879, %cst_280 {dimension_numbers = #tpu.dot_dimension_numbers<[1], [0], [0], [1], [0, 0, 1, 1], [], []>} : vector<2x32xf32>, vector<32x128xf32>, vector<2x128xf32> -> vector<2x128xf32>
    %886 = vector.broadcast %880 : vector<1x128xf32> to vector<2x128xf32>
    %887 = arith.addf %885, %886 : vector<2x128xf32>
    %cst_281 = arith.constant 0.000000e+00 : f32
    %888 = vector.broadcast %cst_281 : f32 to vector<2x128xf32>
    %889 = arith.maximumf %887, %888 : vector<2x128xf32>
    %cst_282 = arith.constant dense<0.000000e+00> : vector<2x128xf32>
    %890 = tpu.matmul %889, %881, %cst_282 {dimension_numbers = #tpu.dot_dimension_numbers<[1], [0], [0], [1], [0, 0, 1, 1], [], []>} : vector<2x128xf32>, vector<128x128xf32>, vector<2x128xf32> -> vector<2x128xf32>
    %891 = vector.broadcast %882 : vector<1x128xf32> to vector<2x128xf32>
    %892 = arith.addf %890, %891 : vector<2x128xf32>
    %cst_283 = arith.constant 0.000000e+00 : f32
    %893 = vector.broadcast %cst_283 : f32 to vector<2x128xf32>
    %894 = arith.maximumf %892, %893 : vector<2x128xf32>
    %cst_284 = arith.constant dense<0.000000e+00> : vector<2x128xf32>
    %895 = tpu.matmul %894, %883, %cst_284 {dimension_numbers = #tpu.dot_dimension_numbers<[1], [0], [0], [1], [0, 0, 1, 1], [], []>} : vector<2x128xf32>, vector<128x128xf32>, vector<2x128xf32> -> vector<2x128xf32>
    %896 = vector.broadcast %884 : vector<1x128xf32> to vector<2x128xf32>
    %897 = arith.addf %895, %896 : vector<2x128xf32>
    %898 = tpu.iota {dimensions = array<i32: 1>} : vector<2x128xi32>
    %c32_i32 = arith.constant 32 : i32
    %899 = vector.broadcast %c32_i32 : i32 to vector<2x128xi32>
    %900 = arith.cmpi slt, %898, %899 : vector<2x128xi32>
    %901 = math.exp %897 : vector<2x128xf32>
    %cst_285 = arith.constant 9.99999997E-7 : f32
    %902 = vector.broadcast %cst_285 : f32 to vector<2x128xf32>
    %903 = arith.maximumf %897, %902 : vector<2x128xf32>
    %904 = arith.select %900, %901, %903 : vector<2x128xi1>, vector<2x128xf32>
    %c0_286 = arith.constant 0 : index
    %c0_287 = arith.constant 0 : index
    %905 = vector.load %arg2[%c0_286, %c0_287] : memref<2x128xf32, #tpu.memory_space<vmem>>, vector<2x128xf32>
    tpu.vector_store %arg2[%c0_286, %c0_287], %904 {strides = array<i32>} : memref<2x128xf32, #tpu.memory_space<vmem>>, vector<2x128xf32>,
    return
  }
}

</mosaic_0001>

<llo_original>
// kernel: tpu_custom_call.1
$region0: #{tpu_custom_call.1}
  #allocation0 [shape = 'u32[]', space=smem, size = 0x4, offset = 0x4, fixed_abs, tag = 'smem constant byte address 0x4 - core index']
  #allocation1 [shape = 'u32[72,128]{1,0:T(1,128)}', space=vmem, size = 0x9000, scoped, tag = 'internal scratch']
  %s0 = inlined_call_operand.hbm [shape: f32[16,128], index: 0, kind: input, shape index: {}]
  %s1 = inlined_call_operand.hbm [shape: f32[520,128], index: 1, kind: input, shape index: {}]
  %s2 = inlined_call_operand.hbm [shape: f32[2,128], index: 2, kind: output, shape index: {}]
  %s3 = sld [smem:[#allocation0]]
  $region26: #{tpu_custom_call.1} parent=0
    _
  %s5 = ssub.s32 1, %s3
  %s6 = scalar_select 0, %s5, %s3
  $region1: #{tpu_custom_call.1} parent=0
    #allocation2 [shape = 'u8[8192]{0}', space=vmem, size = 0x2000, scoped, tag = 'input window, operand 0, single buffered']
    #allocation3 [shape = 's32[1]{0}', space=sflag, size = 0x4, scoped, tag = 'scoped memory for tpu_custom_call.1']
    #allocation4 [shape = 's32[1]{0}', space=sflag, size = 0x4, scoped, tag = 'scoped memory for tpu_custom_call.1']
    #allocation5 [shape = 'u8[266240]{0}', space=vmem, size = 0x41000, scoped, tag = 'input window, operand 1, single buffered']
    #allocation6 [shape = 's32[1]{0}', space=sflag, size = 0x4, scoped, tag = 'scoped memory for tpu_custom_call.1']
    #allocation7 [shape = 'u8[1024]{0}', space=vmem, size = 0x400, scoped, tag = 'output window, operand 0, single buffered']
    %7 = vsyncpa [#allocation3], 0
    %8 = vsyncpa [#allocation6], 0
    %9 = vsyncpa [#allocation4], 0
    // Predicated region
    $region2: #{tpu_custom_call.1} parent=1 // pred_check
      _
    $region3: #{tpu_custom_call.1} parent=1 // pred_check_branch
      %11 = sbr.rel (0) target = $region5
    $region4: #{tpu_custom_call.1} parent=1 // pred_region
      %13 = vsyncadd [#allocation3], 0
      %s14 = sshll.u32 %s0, 4
      %s15 = int_to_ptr.hbm [resolvable:$true] %s14
      %s16 = sshll.u32 [#allocation2], 4
      %s17 = int_to_ptr.vmem [resolvable:$true] %s16
      %22 = dma.hbm_to_vmem [thread:$0]  %s15, 256, %s17, [#allocation3], 128, 128, 8
    $region5: #{tpu_custom_call.1} parent=1 // pred_fallthru
      _
    // Predicated region
    $region6: #{tpu_custom_call.1} parent=1 // pred_check
      _
    $region7: #{tpu_custom_call.1} parent=1 // pred_check_branch
      %24 = sbr.rel (0) target = $region9
    $region8: #{tpu_custom_call.1} parent=1 // pred_region
      %26 = vsyncadd [#allocation6], 0
      %s27 = sshll.u32 %s1, 4
      %s28 = int_to_ptr.hbm [resolvable:$true] %s27
      %s29 = sshll.u32 [#allocation5], 4
      %s30 = int_to_ptr.vmem [resolvable:$true] %s29
      %35 = dma.hbm_to_vmem [thread:$0]  %s28, 8320, %s30, [#allocation6], 128, 128, 8
    $region9: #{tpu_custom_call.1} parent=1 // pred_fallthru
      _
    // Predicated region
    $region10: #{tpu_custom_call.1} parent=1 // pred_check
      _
    $region11: #{tpu_custom_call.1} parent=1 // pred_check_branch
      %37 = sbr.rel (0) target = $region13
    $region12: #{tpu_custom_call.1} parent=1 // pred_region
      %39 = dma.done [#allocation3], 256
    $region13: #{tpu_custom_call.1} parent=1 // pred_fallthru
      _
    // Predicated region
    $region14: #{tpu_custom_call.1} parent=1 // pred_check
      _
    $region15: #{tpu_custom_call.1} parent=1 // pred_check_branch
      %41 = sbr.rel (0) target = $region17
    $region16: #{tpu_custom_call.1} parent=1 // pred_region
      %43 = dma.done [#allocation6], 8320
    $region17: #{tpu_custom_call.1} parent=1 // pred_fallthru
      _
    %v44 = vld [vmem:[#allocation5] sm:$0x1]
    %v45 = vld [vmem:[#allocation5 + $0x8] sm:$0xff]
    %v46 = vld [vmem:[#allocation5 + $0x10] sm:$0xff]
    %v47 = vld [vmem:[#allocation5 + $0x18] sm:$0xff]
    %v48 = vld [vmem:[#allocation5 + $0x20] sm:$0xff]
    %v49 = vld [vmem:[#allocation5 + $0x28] sm:$0x1]
    %v50 = vld [vmem:[#allocation5 + $0x30] sm:$0xff]
    %v51 = vld [vmem:[#allocation5 + $0x38] sm:$0xff]
    %v52 = vld [vmem:[#allocation5 + $0x40] sm:$0xff]
    %v53 = vld [vmem:[#allocation5 + $0x48] sm:$0xff]
    %v54 = vld [vmem:[#allocation5 + $0x50] sm:$0xff]
    %v55 = vld [vmem:[#allocation5 + $0x58] sm:$0xff]
    %v56 = vld [vmem:[#allocation5 + $0x60] sm:$0xff]
    %v57 = vld [vmem:[#allocation5 + $0x68] sm:$0xff]
    %v58 = vld [vmem:[#allocation5 + $0x70] sm:$0x1]
    %v59 = vld [vmem:[#allocation5 + $0x78] sm:$0xff]
    %v60 = vld [vmem:[#allocation5 + $0x80] sm:$0xff]
    %v61 = vld [vmem:[#allocation5 + $0x88] sm:$0xff]
    %v62 = vld [vmem:[#allocation5 + $0x90] sm:$0xff]
    %v63 = vld [vmem:[#allocation5 + $0x98] sm:$0xff]
    %v64 = vld [vmem:[#allocation5 + $0xa0] sm:$0xff]
    %v65 = vld [vmem:[#allocation5 + $0xa8] sm:$0xff]
    %v66 = vld [vmem:[#allocation5 + $0xb0] sm:$0xff]
    %v67 = vld [vmem:[#allocation5 + $0xb8] sm:$0x1]
    %v68 = vperm.slane %v58, 0
    %v69 = vperm.slane %v67, 0
    %v70 = vld [vmem:[#allocation2] sm:$0xff]
    %v71 = vld [vmem:[#allocation2 + $0x8] sm:$0xff]
    %v72 = vperm.slane %v44, 0
    %v73 = vmul.f32 %v70, %v72
    %v74 = vmul.f32 %v71, %v72
    %v75 = vperm.slane %v49, 0
    %v76 = vadd.f32 %v73, %v75
    %v77 = vadd.f32 %v74, %v75
    %vm78 = vcmask 261120
    %v80 = vsel %vm78, 0.0, 0
    %82 = vmatpush.msra.mxu0 0.0
    %83 = vmatpush.msra.mxu0 0.0
    %84 = vmatpush.msra.mxu0 0.0
    %85 = vmatpush.msra.mxu0 0.0
    %86 = vmatpush.msra.mxu0 0.0
    %87 = vmatpush.msra.mxu0 0.0
    %88 = vmatpush.msra.mxu0 0.0
    %89 = vmatpush.msra.mxu0 0.0
    %90 = vmatpush.msra.mxu0 0.0
    %91 = vmatpush.msra.mxu0 0.0
    %92 = vmatpush.msra.mxu0 0.0
    %93 = vmatpush.msra.mxu0 0.0
    %94 = vmatpush.msra.mxu0 %v48
    %95 = vmatpush.msra.mxu0 %v47
    %96 = vmatpush.msra.mxu0 %v46
    %97 = vmatpush.msra.mxu0 %v45
    %98 = vmatmul.f32.gmra.mxu0 %v80
    %v99 = vpop.f32.mrf.mxu0
    %v100 = vadd.f32 0.0, %v99
    %101 = vdwg.mxu0
    %v102 = vadd.f32 %v76, %v100
    %v103 = vmul.f32 %v102, 0.5
    %v104 = vtanh.pop %v103
    %v105 = vmul.f32 %v104, 0.5
    %v106 = vadd.f32 %v105, 0.5
    %v107 = vtanh.pop %v102
    %v108 = vmul.f32 %v106, 0.0
    %110 = vrot.lane.b32.xlu0 %v107, 64
    %v111 = vpop.permute.xlu0 %110
    %v113 = vmul.f32 %v106, %v111
    %115 = vrot.lane.b32.xlu0 %v113, 32
    %v116 = vpop.permute.xlu0 %115
    %v118 = vadd.f32 %v108, %v116
    %v119 = vtanh.pop %v118
    %121 = vrot.lane.b32.xlu0 %v119, 64
    %v122 = vpop.permute.xlu0 %121
    %v124 = vmul.f32 %v106, %v122
    %125 = vmatpush.msra.mxu0 0.0
    %126 = vmatpush.msra.mxu0 0.0
    %127 = vmatpush.msra.mxu0 0.0
    %128 = vmatpush.msra.mxu0 0.0
    %129 = vmatpush.msra.mxu0 0.0
    %130 = vmatpush.msra.mxu0 0.0
    %131 = vmatpush.msra.mxu0 0.0
    %132 = vmatpush.msra.mxu0 0.0
    %133 = vmatpush.msra.mxu0 0.0
    %134 = vmatpush.msra.mxu0 0.0
    %135 = vmatpush.msra.mxu0 0.0
    %136 = vmatpush.msra.mxu0 0.0
    %137 = vmatpush.msra.mxu0 %v57
    %138 = vmatpush.msra.mxu0 %v56
    %139 = vmatpush.msra.mxu0 %v55
    %140 = vmatpush.msra.mxu0 %v54
    %141 = vmatmul.f32.gmra.mxu0 %v80
    %v142 = vpop.f32.mrf.mxu0
    %v143 = vadd.f32 0.0, %v142
    %144 = vdwg.mxu0
    %146 = vrot.lane.b32.xlu0 %v124, 32
    %v147 = vpop.permute.xlu0 %146
    %v148 = vsel %vm78, %v147, 0
    %150 = vmatpush.msra.mxu0 0.0
    %151 = vmatpush.msra.mxu0 0.0
    %152 = vmatpush.msra.mxu0 0.0
    %153 = vmatpush.msra.mxu0 0.0
    %154 = vmatpush.msra.mxu0 0.0
    %155 = vmatpush.msra.mxu0 0.0
    %156 = vmatpush.msra.mxu0 0.0
    %157 = vmatpush.msra.mxu0 0.0
    %158 = vmatpush.msra.mxu0 0.0
    %159 = vmatpush.msra.mxu0 0.0
    %160 = vmatpush.msra.mxu0 0.0
    %161 = vmatpush.msra.mxu0 0.0
    %162 = vmatpush.msra.mxu0 %v53
    %163 = vmatpush.msra.mxu0 %v52
    %164 = vmatpush.msra.mxu0 %v51
    %165 = vmatpush.msra.mxu0 %v50
    %166 = vmatmul.f32.gmra.mxu0 %v148
    %v167 = vpop.f32.mrf.mxu0
    %v168 = vadd.f32 %v143, %v167
    %169 = vdwg.mxu0
    %v170 = vadd.f32 %v168, %v68
    %v171 = vmul.f32 %v170, 0.5
    %v172 = vtanh.pop %v171
    %v173 = vmul.f32 %v172, 0.5
    %v174 = vadd.f32 %v173, 0.5
    %v175 = vtanh.pop %v170
    %v176 = vmul.f32 %v174, 0.0
    %178 = vrot.lane.b32.xlu0 %v175, 64
    %v179 = vpop.permute.xlu0 %178
    %v181 = vmul.f32 %v174, %v179
    %183 = vrot.lane.b32.xlu0 %v181, 32
    %v184 = vpop.permute.xlu0 %183
    %v186 = vadd.f32 %v176, %v184
    %v187 = vtanh.pop %v186
    %189 = vrot.lane.b32.xlu0 %v187, 64
    %v190 = vpop.permute.xlu0 %189
    %v192 = vmul.f32 %v174, %v190
    %193 = vmatpush.msra.mxu0 0.0
    %194 = vmatpush.msra.mxu0 0.0
    %195 = vmatpush.msra.mxu0 0.0
    %196 = vmatpush.msra.mxu0 0.0
    %197 = vmatpush.msra.mxu0 0.0
    %198 = vmatpush.msra.mxu0 0.0
    %199 = vmatpush.msra.mxu0 0.0
    %200 = vmatpush.msra.mxu0 0.0
    %201 = vmatpush.msra.mxu0 0.0
    %202 = vmatpush.msra.mxu0 0.0
    %203 = vmatpush.msra.mxu0 0.0
    %204 = vmatpush.msra.mxu0 0.0
    %205 = vmatpush.msra.mxu0 %v66
    %206 = vmatpush.msra.mxu0 %v65
    %207 = vmatpush.msra.mxu0 %v64
    %208 = vmatpush.msra.mxu0 %v63
    %209 = vmatmul.f32.gmra.mxu0 %v80
    %v210 = vpop.f32.mrf.mxu0
    %v211 = vadd.f32 0.0, %v210
    %212 = vdwg.mxu0
    %214 = vrot.lane.b32.xlu0 %v192, 32
    %v215 = vpop.permute.xlu0 %214
    %v216 = vsel %vm78, %v215, 0
    %218 = vmatpush.msra.mxu0 0.0
    %219 = vmatpush.msra.mxu0 0.0
    %220 = vmatpush.msra.mxu0 0.0
    %221 = vmatpush.msra.mxu0 0.0
    %222 = vmatpush.msra.mxu0 0.0
    %223 = vmatpush.msra.mxu0 0.0
    %224 = vmatpush.msra.mxu0 0.0
    %225 = vmatpush.msra.mxu0 0.0
    %226 = vmatpush.msra.mxu0 0.0
    %227 = vmatpush.msra.mxu0 0.0
    %228 = vmatpush.msra.mxu0 0.0
    %229 = vmatpush.msra.mxu0 0.0
    %230 = vmatpush.msra.mxu0 %v62
    %231 = vmatpush.msra.mxu0 %v61
    %232 = vmatpush.msra.mxu0 %v60
    %233 = vmatpush.msra.mxu0 %v59
    %234 = vmatmul.f32.gmra.mxu0 %v216
    %v235 = vpop.f32.mrf.mxu0
    %v236 = vadd.f32 %v211, %v235
    %237 = vdwg.mxu0
    %v238 = vadd.f32 %v236, %v69
    %v239 = vmul.f32 %v238, 0.5
    %v240 = vtanh.pop %v239
    %v241 = vmul.f32 %v240, 0.5
    %v242 = vadd.f32 %v241, 0.5
    %v243 = vtanh.pop %v238
    %v244 = vmul.f32 %v242, 0.0
    %246 = vrot.lane.b32.xlu0 %v243, 64
    %v247 = vpop.permute.xlu0 %246
    %v249 = vmul.f32 %v242, %v247
    %251 = vrot.lane.b32.xlu0 %v249, 32
    %v252 = vpop.permute.xlu0 %251
    %v254 = vadd.f32 %v244, %v252
    %v255 = vtanh.pop %v254
    %257 = vrot.lane.b32.xlu0 %v255, 64
    %v258 = vpop.permute.xlu0 %257
    %v260 = vmul.f32 %v242, %v258
    %261 = vmatpush.msra.mxu0 0.0
    %262 = vmatpush.msra.mxu0 0.0
    %263 = vmatpush.msra.mxu0 0.0
    %264 = vmatpush.msra.mxu0 0.0
    %265 = vmatpush.msra.mxu0 0.0
    %266 = vmatpush.msra.mxu0 0.0
    %267 = vmatpush.msra.mxu0 0.0
    %268 = vmatpush.msra.mxu0 0.0
    %269 = vmatpush.msra.mxu0 0.0
    %270 = vmatpush.msra.mxu0 0.0
    %271 = vmatpush.msra.mxu0 0.0
    %272 = vmatpush.msra.mxu0 0.0
    %273 = vmatpush.msra.mxu0 %v48
    %274 = vmatpush.msra.mxu0 %v47
    %275 = vmatpush.msra.mxu0 %v46
    %276 = vmatpush.msra.mxu0 %v45
    %277 = vmatmul.f32.gmra.mxu0 %v148
    %v278 = vpop.f32.mrf.mxu0
    %v279 = vadd.f32 0.0, %v278
    %280 = vdwg.mxu0
    %v282 = vrot.slane %v279, 6
    %v284 = vadd.f32 %v76, %v282
    %v285 = vmul.f32 %v284, 0.5
    %v286 = vtanh.pop %v285
    %v287 = vmul.f32 %v286, 0.5
    %v288 = vadd.f32 %v287, 0.5
    %v289 = vtanh.pop %v284
    %v291 = vrot.slane %v118, 6
    %v293 = vmul.f32 %v288, %v291
    %295 = vrot.lane.b32.xlu0 %v289, 64
    %v296 = vpop.permute.xlu0 %295
    %v298 = vmul.f32 %v288, %v296
    %300 = vrot.lane.b32.xlu0 %v298, 32
    %v301 = vpop.permute.xlu0 %300
    %v303 = vadd.f32 %v293, %v301
    %v304 = vtanh.pop %v303
    %306 = vrot.lane.b32.xlu0 %v304, 64
    %v307 = vpop.permute.xlu0 %306
    %v309 = vmul.f32 %v288, %v307
    %310 = vmatpush.msra.mxu0 0.0
    %311 = vmatpush.msra.mxu0 0.0
    %312 = vmatpush.msra.mxu0 0.0
    %313 = vmatpush.msra.mxu0 0.0
    %314 = vmatpush.msra.mxu0 0.0
    %315 = vmatpush.msra.mxu0 0.0
    %316 = vmatpush.msra.mxu0 0.0
    %317 = vmatpush.msra.mxu0 0.0
    %318 = vmatpush.msra.mxu0 0.0
    %319 = vmatpush.msra.mxu0 0.0
    %320 = vmatpush.msra.mxu0 0.0
    %321 = vmatpush.msra.mxu0 0.0
    %322 = vmatpush.msra.mxu0 %v57
    %323 = vmatpush.msra.mxu0 %v56
    %324 = vmatpush.msra.mxu0 %v55
    %325 = vmatpush.msra.mxu0 %v54
    %326 = vmatmul.f32.gmra.mxu0 %v216
    %v327 = vpop.f32.mrf.mxu0
    %v328 = vadd.f32 0.0, %v327
    %329 = vdwg.mxu0
    %v331 = vrot.slane %v309, 2
    %332 = vrot.lane.b32.xlu0 %v331, 32
    %v333 = vpop.permute.xlu0 %332
    %v334 = vsel %vm78, %v333, 0
    %336 = vmatpush.msra.mxu0 0.0
    %337 = vmatpush.msra.mxu0 0.0
    %338 = vmatpush.msra.mxu0 0.0
    %339 = vmatpush.msra.mxu0 0.0
    %340 = vmatpush.msra.mxu0 0.0
    %341 = vmatpush.msra.mxu0 0.0
    %342 = vmatpush.msra.mxu0 0.0
    %343 = vmatpush.msra.mxu0 0.0
    %344 = vmatpush.msra.mxu0 0.0
    %345 = vmatpush.msra.mxu0 0.0
    %346 = vmatpush.msra.mxu0 0.0
    %347 = vmatpush.msra.mxu0 0.0
    %348 = vmatpush.msra.mxu0 %v53
    %349 = vmatpush.msra.mxu0 %v52
    %350 = vmatpush.msra.mxu0 %v51
    %351 = vmatpush.msra.mxu0 %v50
    %352 = vmatmul.f32.gmra.mxu0 %v334
    %v353 = vpop.f32.mrf.mxu0
    %v354 = vadd.f32 %v328, %v353
    %355 = vdwg.mxu0
    %v356 = vadd.f32 %v354, %v68
    %v357 = vmul.f32 %v356, 0.5
    %v358 = vtanh.pop %v357
    %v359 = vmul.f32 %v358, 0.5
    %v360 = vadd.f32 %v359, 0.5
    %v361 = vtanh.pop %v356
    %v362 = vmul.f32 %v360, %v186
    %364 = vrot.lane.b32.xlu0 %v361, 64
    %v365 = vpop.permute.xlu0 %364
    %v367 = vmul.f32 %v360, %v365
    %369 = vrot.lane.b32.xlu0 %v367, 32
    %v370 = vpop.permute.xlu0 %369
    %v372 = vadd.f32 %v362, %v370
    %v373 = vtanh.pop %v372
    %375 = vrot.lane.b32.xlu0 %v373, 64
    %v376 = vpop.permute.xlu0 %375
    %v378 = vmul.f32 %v360, %v376
    %380 = vrot.lane.b32.xlu0 %v260, 32
    %v381 = vpop.permute.xlu0 %380
    %v382 = vsel %vm78, %v381, 0
    %384 = vmatpush.msra.mxu0 0.0
    %385 = vmatpush.msra.mxu0 0.0
    %386 = vmatpush.msra.mxu0 0.0
    %387 = vmatpush.msra.mxu0 0.0
    %388 = vmatpush.msra.mxu0 0.0
    %389 = vmatpush.msra.mxu0 0.0
    %390 = vmatpush.msra.mxu0 0.0
    %391 = vmatpush.msra.mxu0 0.0
    %392 = vmatpush.msra.mxu0 0.0
    %393 = vmatpush.msra.mxu0 0.0
    %394 = vmatpush.msra.mxu0 0.0
    %395 = vmatpush.msra.mxu0 0.0
    %396 = vmatpush.msra.mxu0 %v66
    %397 = vmatpush.msra.mxu0 %v65
    %398 = vmatpush.msra.mxu0 %v64
    %399 = vmatpush.msra.mxu0 %v63
    %400 = vmatmul.f32.gmra.mxu0 %v382
    %v401 = vpop.f32.mrf.mxu0
    %v402 = vadd.f32 0.0, %v401
    %403 = vdwg.mxu0
    %405 = vrot.lane.b32.xlu0 %v378, 32
    %v406 = vpop.permute.xlu0 %405
    %v407 = vsel %vm78, %v406, 0
    %409 = vmatpush.msra.mxu0 0.0
    %410 = vmatpush.msra.mxu0 0.0
    %411 = vmatpush.msra.mxu0 0.0
    %412 = vmatpush.msra.mxu0 0.0
    %413 = vmatpush.msra.mxu0 0.0
    %414 = vmatpush.msra.mxu0 0.0
    %415 = vmatpush.msra.mxu0 0.0
    %416 = vmatpush.msra.mxu0 0.0
    %417 = vmatpush.msra.mxu0 0.0
    %418 = vmatpush.msra.mxu0 0.0
    %419 = vmatpush.msra.mxu0 0.0
    %420 = vmatpush.msra.mxu0 0.0
    %421 = vmatpush.msra.mxu0 %v62
    %422 = vmatpush.msra.mxu0 %v61
    %423 = vmatpush.msra.mxu0 %v60
    %424 = vmatpush.msra.mxu0 %v59
    %425 = vmatmul.f32.gmra.mxu0 %v407
    %v426 = vpop.f32.mrf.mxu0
    %v427 = vadd.f32 %v402, %v426
    %428 = vdwg.mxu0
    %v429 = vadd.f32 %v427, %v69
    %v430 = vmul.f32 %v429, 0.5
    %v431 = vtanh.pop %v430
    %v432 = vmul.f32 %v431, 0.5
    %v433 = vadd.f32 %v432, 0.5
    %v434 = vtanh.pop %v429
    %v435 = vmul.f32 %v433, %v254
    %437 = vrot.lane.b32.xlu0 %v434, 64
    %v438 = vpop.permute.xlu0 %437
    %v440 = vmul.f32 %v433, %v438
    %442 = vrot.lane.b32.xlu0 %v440, 32
    %v443 = vpop.permute.xlu0 %442
    %v445 = vadd.f32 %v435, %v443
    %v446 = vtanh.pop %v445
    %448 = vrot.lane.b32.xlu0 %v446, 64
    %v449 = vpop.permute.xlu0 %448
    %v451 = vmul.f32 %v433, %v449
    %452 = vmatpush.msra.mxu0 0.0
    %453 = vmatpush.msra.mxu0 0.0
    %454 = vmatpush.msra.mxu0 0.0
    %455 = vmatpush.msra.mxu0 0.0
    %456 = vmatpush.msra.mxu0 0.0
    %457 = vmatpush.msra.mxu0 0.0
    %458 = vmatpush.msra.mxu0 0.0
    %459 = vmatpush.msra.mxu0 0.0
    %460 = vmatpush.msra.mxu0 0.0
    %461 = vmatpush.msra.mxu0 0.0
    %462 = vmatpush.msra.mxu0 0.0
    %463 = vmatpush.msra.mxu0 0.0
    %464 = vmatpush.msra.mxu0 %v48
    %465 = vmatpush.msra.mxu0 %v47
    %466 = vmatpush.msra.mxu0 %v46
    %467 = vmatpush.msra.mxu0 %v45
    %468 = vmatmul.f32.gmra.mxu0 %v334
    %v469 = vpop.f32.mrf.mxu0
    %v470 = vadd.f32 0.0, %v469
    %471 = vdwg.mxu0
    %v473 = vrot.slane %v470, 4
    %v475 = vadd.f32 %v76, %v473
    %v476 = vmul.f32 %v475, 0.5
    %v477 = vtanh.pop %v476
    %v478 = vmul.f32 %v477, 0.5
    %v479 = vadd.f32 %v478, 0.5
    %v480 = vtanh.pop %v475
    %v482 = vrot.slane %v303, 6
    %v484 = vmul.f32 %v479, %v482
    %486 = vrot.lane.b32.xlu0 %v480, 64
    %v487 = vpop.permute.xlu0 %486
    %v489 = vmul.f32 %v479, %v487
    %491 = vrot.lane.b32.xlu0 %v489, 32
    %v492 = vpop.permute.xlu0 %491
    %v494 = vadd.f32 %v484, %v492
    %v495 = vtanh.pop %v494
    %497 = vrot.lane.b32.xlu0 %v495, 64
    %v498 = vpop.permute.xlu0 %497
    %v500 = vmul.f32 %v479, %v498
    %501 = vmatpush.msra.mxu0 0.0
    %502 = vmatpush.msra.mxu0 0.0
    %503 = vmatpush.msra.mxu0 0.0
    %504 = vmatpush.msra.mxu0 0.0
    %505 = vmatpush.msra.mxu0 0.0
    %506 = vmatpush.msra.mxu0 0.0
    %507 = vmatpush.msra.mxu0 0.0
    %508 = vmatpush.msra.mxu0 0.0
    %509 = vmatpush.msra.mxu0 0.0
    %510 = vmatpush.msra.mxu0 0.0
    %511 = vmatpush.msra.mxu0 0.0
    %512 = vmatpush.msra.mxu0 0.0
    %513 = vmatpush.msra.mxu0 %v57
    %514 = vmatpush.msra.mxu0 %v56
    %515 = vmatpush.msra.mxu0 %v55
    %516 = vmatpush.msra.mxu0 %v54
    %517 = vmatmul.f32.gmra.mxu0 %v407
    %v518 = vpop.f32.mrf.mxu0
    %v519 = vadd.f32 0.0, %v518
    %520 = vdwg.mxu0
    %v522 = vrot.slane %v500, 4
    %523 = vrot.lane.b32.xlu0 %v522, 32
    %v524 = vpop.permute.xlu0 %523
    %v525 = vsel %vm78, %v524, 0
    %527 = vmatpush.msra.mxu0 0.0
    %528 = vmatpush.msra.mxu0 0.0
    %529 = vmatpush.msra.mxu0 0.0
    %530 = vmatpush.msra.mxu0 0.0
    %531 = vmatpush.msra.mxu0 0.0
    %532 = vmatpush.msra.mxu0 0.0
    %533 = vmatpush.msra.mxu0 0.0
    %534 = vmatpush.msra.mxu0 0.0
    %535 = vmatpush.msra.mxu0 0.0
    %536 = vmatpush.msra.mxu0 0.0
    %537 = vmatpush.msra.mxu0 0.0
    %538 = vmatpush.msra.mxu0 0.0
    %539 = vmatpush.msra.mxu0 %v53
    %540 = vmatpush.msra.mxu0 %v52
    %541 = vmatpush.msra.mxu0 %v51
    %542 = vmatpush.msra.mxu0 %v50
    %543 = vmatmul.f32.gmra.mxu0 %v525
    %v544 = vpop.f32.mrf.mxu0
    %v545 = vadd.f32 %v519, %v544
    %546 = vdwg.mxu0
    %v547 = vadd.f32 %v545, %v68
    %v548 = vmul.f32 %v547, 0.5
    %v549 = vtanh.pop %v548
    %v550 = vmul.f32 %v549, 0.5
    %v551 = vadd.f32 %v550, 0.5
    %v552 = vtanh.pop %v547
    %v553 = vmul.f32 %v551, %v372
    %555 = vrot.lane.b32.xlu0 %v552, 64
    %v556 = vpop.permute.xlu0 %555
    %v558 = vmul.f32 %v551, %v556
    %560 = vrot.lane.b32.xlu0 %v558, 32
    %v561 = vpop.permute.xlu0 %560
    %v563 = vadd.f32 %v553, %v561
    %v564 = vtanh.pop %v563
    %566 = vrot.lane.b32.xlu0 %v564, 64
    %v567 = vpop.permute.xlu0 %566
    %v569 = vmul.f32 %v551, %v567
    %571 = vrot.lane.b32.xlu0 %v451, 32
    %v572 = vpop.permute.xlu0 %571
    %v573 = vsel %vm78, %v572, 0
    %575 = vmatpush.msra.mxu0 0.0
    %576 = vmatpush.msra.mxu0 0.0
    %577 = vmatpush.msra.mxu0 0.0
    %578 = vmatpush.msra.mxu0 0.0
    %579 = vmatpush.msra.mxu0 0.0
    %580 = vmatpush.msra.mxu0 0.0
    %581 = vmatpush.msra.mxu0 0.0
    %582 = vmatpush.msra.mxu0 0.0
    %583 = vmatpush.msra.mxu0 0.0
    %584 = vmatpush.msra.mxu0 0.0
    %585 = vmatpush.msra.mxu0 0.0
    %586 = vmatpush.msra.mxu0 0.0
    %587 = vmatpush.msra.mxu0 %v66
    %588 = vmatpush.msra.mxu0 %v65
    %589 = vmatpush.msra.mxu0 %v64
    %590 = vmatpush.msra.mxu0 %v63
    %591 = vmatmul.f32.gmra.mxu0 %v573
    %v592 = vpop.f32.mrf.mxu0
    %v593 = vadd.f32 0.0, %v592
    %594 = vdwg.mxu0
    %596 = vrot.lane.b32.xlu0 %v569, 32
    %v597 = vpop.permute.xlu0 %596
    %v598 = vsel %vm78, %v597, 0
    %600 = vmatpush.msra.mxu0 0.0
    %601 = vmatpush.msra.mxu0 0.0
    %602 = vmatpush.msra.mxu0 0.0
    %603 = vmatpush.msra.mxu0 0.0
    %604 = vmatpush.msra.mxu0 0.0
    %605 = vmatpush.msra.mxu0 0.0
    %606 = vmatpush.msra.mxu0 0.0
    %607 = vmatpush.msra.mxu0 0.0
    %608 = vmatpush.msra.mxu0 0.0
    %609 = vmatpush.msra.mxu0 0.0
    %610 = vmatpush.msra.mxu0 0.0
    %611 = vmatpush.msra.mxu0 0.0
    %612 = vmatpush.msra.mxu0 %v62
    %613 = vmatpush.msra.mxu0 %v61
    %614 = vmatpush.msra.mxu0 %v60
    %615 = vmatpush.msra.mxu0 %v59
    %616 = vmatmul.f32.gmra.mxu0 %v598
    %v617 = vpop.f32.mrf.mxu0
    %v618 = vadd.f32 %v593, %v617
    %619 = vdwg.mxu0
    %v620 = vadd.f32 %v618, %v69
    %v621 = vmul.f32 %v620, 0.5
    %v622 = vtanh.pop %v621
    %v623 = vmul.f32 %v622, 0.5
    %v624 = vadd.f32 %v623, 0.5
    %v625 = vtanh.pop %v620
    %v626 = vmul.f32 %v624, %v445
    %628 = vrot.lane.b32.xlu0 %v625, 64
    %v629 = vpop.permute.xlu0 %628
    %v631 = vmul.f32 %v624, %v629
    %633 = vrot.lane.b32.xlu0 %v631, 32
    %v634 = vpop.permute.xlu0 %633
    %v636 = vadd.f32 %v626, %v634
    %v637 = vtanh.pop %v636
    %639 = vrot.lane.b32.xlu0 %v637, 64
    %v640 = vpop.permute.xlu0 %639
    %v642 = vmul.f32 %v624, %v640
    %643 = vmatpush.msra.mxu0 0.0
    %644 = vmatpush.msra.mxu0 0.0
    %645 = vmatpush.msra.mxu0 0.0
    %646 = vmatpush.msra.mxu0 0.0
    %647 = vmatpush.msra.mxu0 0.0
    %648 = vmatpush.msra.mxu0 0.0
    %649 = vmatpush.msra.mxu0 0.0
    %650 = vmatpush.msra.mxu0 0.0
    %651 = vmatpush.msra.mxu0 0.0
    %652 = vmatpush.msra.mxu0 0.0
    %653 = vmatpush.msra.mxu0 0.0
    %654 = vmatpush.msra.mxu0 0.0
    %655 = vmatpush.msra.mxu0 %v48
    %656 = vmatpush.msra.mxu0 %v47
    %657 = vmatpush.msra.mxu0 %v46
    %658 = vmatpush.msra.mxu0 %v45
    %659 = vmatmul.f32.gmra.mxu0 %v525
    %v660 = vpop.f32.mrf.mxu0
    %v661 = vadd.f32 0.0, %v660
    %662 = vdwg.mxu0
    %v664 = vrot.slane %v661, 2
    %v666 = vadd.f32 %v76, %v664
    %v667 = vmul.f32 %v666, 0.5
    %v668 = vtanh.pop %v667
    %v669 = vmul.f32 %v668, 0.5
    %v670 = vadd.f32 %v669, 0.5
    %v671 = vtanh.pop %v666
    %v673 = vrot.slane %v494, 6
    %v675 = vmul.f32 %v670, %v673
    %677 = vrot.lane.b32.xlu0 %v671, 64
    %v678 = vpop.permute.xlu0 %677
    %v680 = vmul.f32 %v670, %v678
    %682 = vrot.lane.b32.xlu0 %v680, 32
    %v683 = vpop.permute.xlu0 %682
    %v685 = vadd.f32 %v675, %v683
    %v686 = vtanh.pop %v685
    %688 = vrot.lane.b32.xlu0 %v686, 64
    %v689 = vpop.permute.xlu0 %688
    %v691 = vmul.f32 %v670, %v689
    %692 = vmatpush.msra.mxu0 0.0
    %693 = vmatpush.msra.mxu0 0.0
    %694 = vmatpush.msra.mxu0 0.0
    %695 = vmatpush.msra.mxu0 0.0
    %696 = vmatpush.msra.mxu0 0.0
    %697 = vmatpush.msra.mxu0 0.0
    %698 = vmatpush.msra.mxu0 0.0
    %699 = vmatpush.msra.mxu0 0.0
    %700 = vmatpush.msra.mxu0 0.0
    %701 = vmatpush.msra.mxu0 0.0
    %702 = vmatpush.msra.mxu0 0.0
    %703 = vmatpush.msra.mxu0 0.0
    %704 = vmatpush.msra.mxu0 %v57
    %705 = vmatpush.msra.mxu0 %v56
    %706 = vmatpush.msra.mxu0 %v55
    %707 = vmatpush.msra.mxu0 %v54
    %708 = vmatmul.f32.gmra.mxu0 %v598
    %v709 = vpop.f32.mrf.mxu0
    %v710 = vadd.f32 0.0, %v709
    %711 = vdwg.mxu0
    %v713 = vrot.slane %v691, 6
    %714 = vrot.lane.b32.xlu0 %v713, 32
    %v715 = vpop.permute.xlu0 %714
    %v716 = vsel %vm78, %v715, 0
    %718 = vmatpush.msra.mxu0 0.0
    %719 = vmatpush.msra.mxu0 0.0
    %720 = vmatpush.msra.mxu0 0.0
    %721 = vmatpush.msra.mxu0 0.0
    %722 = vmatpush.msra.mxu0 0.0
    %723 = vmatpush.msra.mxu0 0.0
    %724 = vmatpush.msra.mxu0 0.0
    %725 = vmatpush.msra.mxu0 0.0
    %726 = vmatpush.msra.mxu0 0.0
    %727 = vmatpush.msra.mxu0 0.0
    %728 = vmatpush.msra.mxu0 0.0
    %729 = vmatpush.msra.mxu0 0.0
    %730 = vmatpush.msra.mxu0 %v53
    %731 = vmatpush.msra.mxu0 %v52
    %732 = vmatpush.msra.mxu0 %v51
    %733 = vmatpush.msra.mxu0 %v50
    %734 = vmatmul.f32.gmra.mxu0 %v716
    %v735 = vpop.f32.mrf.mxu0
    %v736 = vadd.f32 %v710, %v735
    %737 = vdwg.mxu0
    %v738 = vadd.f32 %v736, %v68
    %v739 = vmul.f32 %v738, 0.5
    %v740 = vtanh.pop %v739
    %v741 = vmul.f32 %v740, 0.5
    %v742 = vadd.f32 %v741, 0.5
    %v743 = vtanh.pop %v738
    %v744 = vmul.f32 %v742, %v563
    %746 = vrot.lane.b32.xlu0 %v743, 64
    %v747 = vpop.permute.xlu0 %746
    %v749 = vmul.f32 %v742, %v747
    %751 = vrot.lane.b32.xlu0 %v749, 32
    %v752 = vpop.permute.xlu0 %751
    %v754 = vadd.f32 %v744, %v752
    %v755 = vtanh.pop %v754
    %757 = vrot.lane.b32.xlu0 %v755, 64
    %v758 = vpop.permute.xlu0 %757
    %v760 = vmul.f32 %v742, %v758
    %762 = vrot.lane.b32.xlu0 %v642, 32
    %v763 = vpop.permute.xlu0 %762
    %v764 = vsel %vm78, %v763, 0
    %766 = vmatpush.msra.mxu0 0.0
    %767 = vmatpush.msra.mxu0 0.0
    %768 = vmatpush.msra.mxu0 0.0
    %769 = vmatpush.msra.mxu0 0.0
    %770 = vmatpush.msra.mxu0 0.0
    %771 = vmatpush.msra.mxu0 0.0
    %772 = vmatpush.msra.mxu0 0.0
    %773 = vmatpush.msra.mxu0 0.0
    %774 = vmatpush.msra.mxu0 0.0
    %775 = vmatpush.msra.mxu0 0.0
    %776 = vmatpush.msra.mxu0 0.0
    %777 = vmatpush.msra.mxu0 0.0
    %778 = vmatpush.msra.mxu0 %v66
    %779 = vmatpush.msra.mxu0 %v65
    %780 = vmatpush.msra.mxu0 %v64
    %781 = vmatpush.msra.mxu0 %v63
    %782 = vmatmul.f32.gmra.mxu0 %v764
    %v783 = vpop.f32.mrf.mxu0
    %v784 = vadd.f32 0.0, %v783
    %785 = vdwg.mxu0
    %787 = vrot.lane.b32.xlu0 %v760, 32
    %v788 = vpop.permute.xlu0 %787
    %v789 = vsel %vm78, %v788, 0
    %791 = vmatpush.msra.mxu0 0.0
    %792 = vmatpush.msra.mxu0 0.0
    %793 = vmatpush.msra.mxu0 0.0
    %794 = vmatpush.msra.mxu0 0.0
    %795 = vmatpush.msra.mxu0 0.0
    %796 = vmatpush.msra.mxu0 0.0
    %797 = vmatpush.msra.mxu0 0.0
    %798 = vmatpush.msra.mxu0 0.0
    %799 = vmatpush.msra.mxu0 0.0
    %800 = vmatpush.msra.mxu0 0.0
    %801 = vmatpush.msra.mxu0 0.0
    %802 = vmatpush.msra.mxu0 0.0
    %803 = vmatpush.msra.mxu0 %v62
    %804 = vmatpush.msra.mxu0 %v61
    %805 = vmatpush.msra.mxu0 %v60
    %806 = vmatpush.msra.mxu0 %v59
    %807 = vmatmul.f32.gmra.mxu0 %v789
    %v808 = vpop.f32.mrf.mxu0
    %v809 = vadd.f32 %v784, %v808
    %810 = vdwg.mxu0
    %v811 = vadd.f32 %v809, %v69
    %v812 = vmul.f32 %v811, 0.5
    %v813 = vtanh.pop %v812
    %v814 = vmul.f32 %v813, 0.5
    %v815 = vadd.f32 %v814, 0.5
    %v816 = vtanh.pop %v811
    %v817 = vmul.f32 %v815, %v636
    %819 = vrot.lane.b32.xlu0 %v816, 64
    %v820 = vpop.permute.xlu0 %819
    %v822 = vmul.f32 %v815, %v820
    %824 = vrot.lane.b32.xlu0 %v822, 32
    %v825 = vpop.permute.xlu0 %824
    %v827 = vadd.f32 %v817, %v825
    %v828 = vtanh.pop %v827
    %830 = vrot.lane.b32.xlu0 %v828, 64
    %v831 = vpop.permute.xlu0 %830
    %v833 = vmul.f32 %v815, %v831
    %834 = vmatpush.msra.mxu0 0.0
    %835 = vmatpush.msra.mxu0 0.0
    %836 = vmatpush.msra.mxu0 0.0
    %837 = vmatpush.msra.mxu0 0.0
    %838 = vmatpush.msra.mxu0 0.0
    %839 = vmatpush.msra.mxu0 0.0
    %840 = vmatpush.msra.mxu0 0.0
    %841 = vmatpush.msra.mxu0 0.0
    %842 = vmatpush.msra.mxu0 0.0
    %843 = vmatpush.msra.mxu0 0.0
    %844 = vmatpush.msra.mxu0 0.0
    %845 = vmatpush.msra.mxu0 0.0
    %846 = vmatpush.msra.mxu0 %v48
    %847 = vmatpush.msra.mxu0 %v47
    %848 = vmatpush.msra.mxu0 %v46
    %849 = vmatpush.msra.mxu0 %v45
    %850 = vmatmul.f32.gmra.mxu0 %v716
    %v851 = vpop.f32.mrf.mxu0
    %v852 = vadd.f32 0.0, %v851
    %853 = vdwg.mxu0
    %v854 = vadd.f32 %v77, %v852
    %v855 = vmul.f32 %v854, 0.5
    %v856 = vtanh.pop %v855
    %v857 = vmul.f32 %v856, 0.5
    %v858 = vadd.f32 %v857, 0.5
    %v859 = vtanh.pop %v854
    %v861 = vrot.slane %v685, 6
    %v863 = vmul.f32 %v858, %v861
    %865 = vrot.lane.b32.xlu0 %v859, 64
    %v866 = vpop.permute.xlu0 %865
    %v868 = vmul.f32 %v858, %v866
    %870 = vrot.lane.b32.xlu0 %v868, 32
    %v871 = vpop.permute.xlu0 %870
    %v873 = vadd.f32 %v863, %v871
    %v874 = vtanh.pop %v873
    %876 = vrot.lane.b32.xlu0 %v874, 64
    %v877 = vpop.permute.xlu0 %876
    %v879 = vmul.f32 %v858, %v877
    %880 = vmatpush.msra.mxu0 0.0
    %881 = vmatpush.msra.mxu0 0.0
    %882 = vmatpush.msra.mxu0 0.0
    %883 = vmatpush.msra.mxu0 0.0
    %884 = vmatpush.msra.mxu0 0.0
    %885 = vmatpush.msra.mxu0 0.0
    %886 = vmatpush.msra.mxu0 0.0
    %887 = vmatpush.msra.mxu0 0.0
    %888 = vmatpush.msra.mxu0 0.0
    %889 = vmatpush.msra.mxu0 0.0
    %890 = vmatpush.msra.mxu0 0.0
    %891 = vmatpush.msra.mxu0 0.0
    %892 = vmatpush.msra.mxu0 %v57
    %893 = vmatpush.msra.mxu0 %v56
    %894 = vmatpush.msra.mxu0 %v55
    %895 = vmatpush.msra.mxu0 %v54
    %896 = vmatmul.f32.gmra.mxu0 %v789
    %v897 = vpop.f32.mrf.mxu0
    %v898 = vadd.f32 0.0, %v897
    %899 = vdwg.mxu0
    %901 = vrot.lane.b32.xlu0 %v879, 32
    %v902 = vpop.permute.xlu0 %901
    %v903 = vsel %vm78, %v902, 0
    %905 = vmatpush.msra.mxu0 0.0
    %906 = vmatpush.msra.mxu0 0.0
    %907 = vmatpush.msra.mxu0 0.0
    %908 = vmatpush.msra.mxu0 0.0
    %909 = vmatpush.msra.mxu0 0.0
    %910 = vmatpush.msra.mxu0 0.0
    %911 = vmatpush.msra.mxu0 0.0
    %912 = vmatpush.msra.mxu0 0.0
    %913 = vmatpush.msra.mxu0 0.0
    %914 = vmatpush.msra.mxu0 0.0
    %915 = vmatpush.msra.mxu0 0.0
    %916 = vmatpush.msra.mxu0 0.0
    %917 = vmatpush.msra.mxu0 %v53
    %918 = vmatpush.msra.mxu0 %v52
    %919 = vmatpush.msra.mxu0 %v51
    %920 = vmatpush.msra.mxu0 %v50
    %921 = vmatmul.f32.gmra.mxu0 %v903
    %v922 = vpop.f32.mrf.mxu0
    %v923 = vadd.f32 %v898, %v922
    %924 = vdwg.mxu0
    %v925 = vadd.f32 %v923, %v68
    %v926 = vmul.f32 %v925, 0.5
    %v927 = vtanh.pop %v926
    %v928 = vmul.f32 %v927, 0.5
    %v929 = vadd.f32 %v928, 0.5
    %v930 = vtanh.pop %v925
    %v931 = vmul.f32 %v929, %v754
    %933 = vrot.lane.b32.xlu0 %v930, 64
    %v934 = vpop.permute.xlu0 %933
    %v936 = vmul.f32 %v929, %v934
    %938 = vrot.lane.b32.xlu0 %v936, 32
    %v939 = vpop.permute.xlu0 %938
    %v941 = vadd.f32 %v931, %v939
    %v942 = vtanh.pop %v941
    %944 = vrot.lane.b32.xlu0 %v942, 64
    %v945 = vpop.permute.xlu0 %944
    %v947 = vmul.f32 %v929, %v945
    %949 = vrot.lane.b32.xlu0 %v833, 32
    %v950 = vpop.permute.xlu0 %949
    %v951 = vsel %vm78, %v950, 0
    %953 = vmatpush.msra.mxu0 0.0
    %954 = vmatpush.msra.mxu0 0.0
    %955 = vmatpush.msra.mxu0 0.0
    %956 = vmatpush.msra.mxu0 0.0
    %957 = vmatpush.msra.mxu0 0.0
    %958 = vmatpush.msra.mxu0 0.0
    %959 = vmatpush.msra.mxu0 0.0
    %960 = vmatpush.msra.mxu0 0.0
    %961 = vmatpush.msra.mxu0 0.0
    %962 = vmatpush.msra.mxu0 0.0
    %963 = vmatpush.msra.mxu0 0.0
    %964 = vmatpush.msra.mxu0 0.0
    %965 = vmatpush.msra.mxu0 %v66
    %966 = vmatpush.msra.mxu0 %v65
    %967 = vmatpush.msra.mxu0 %v64
    %968 = vmatpush.msra.mxu0 %v63
    %969 = vmatmul.f32.gmra.mxu0 %v951
    %v970 = vpop.f32.mrf.mxu0
    %v971 = vadd.f32 0.0, %v970
    %972 = vdwg.mxu0
    %974 = vrot.lane.b32.xlu0 %v947, 32
    %v975 = vpop.permute.xlu0 %974
    %v976 = vsel %vm78, %v975, 0
    %978 = vmatpush.msra.mxu0 0.0
    %979 = vmatpush.msra.mxu0 0.0
    %980 = vmatpush.msra.mxu0 0.0
    %981 = vmatpush.msra.mxu0 0.0
    %982 = vmatpush.msra.mxu0 0.0
    %983 = vmatpush.msra.mxu0 0.0
    %984 = vmatpush.msra.mxu0 0.0
    %985 = vmatpush.msra.mxu0 0.0
    %986 = vmatpush.msra.mxu0 0.0
    %987 = vmatpush.msra.mxu0 0.0
    %988 = vmatpush.msra.mxu0 0.0
    %989 = vmatpush.msra.mxu0 0.0
    %990 = vmatpush.msra.mxu0 %v62
    %991 = vmatpush.msra.mxu0 %v61
    %992 = vmatpush.msra.mxu0 %v60
    %993 = vmatpush.msra.mxu0 %v59
    %994 = vmatmul.f32.gmra.mxu0 %v976
    %v995 = vpop.f32.mrf.mxu0
    %v996 = vadd.f32 %v971, %v995
    %997 = vdwg.mxu0
    %v998 = vadd.f32 %v996, %v69
    %v999 = vmul.f32 %v998, 0.5
    %v1000 = vtanh.pop %v999
    %v1001 = vmul.f32 %v1000, 0.5
    %v1002 = vadd.f32 %v1001, 0.5
    %v1003 = vtanh.pop %v998
    %v1004 = vmul.f32 %v1002, %v827
    %1006 = vrot.lane.b32.xlu0 %v1003, 64
    %v1007 = vpop.permute.xlu0 %1006
    %v1009 = vmul.f32 %v1002, %v1007
    %1011 = vrot.lane.b32.xlu0 %v1009, 32
    %v1012 = vpop.permute.xlu0 %1011
    %v1014 = vadd.f32 %v1004, %v1012
    %v1015 = vtanh.pop %v1014
    %1017 = vrot.lane.b32.xlu0 %v1015, 64
    %v1018 = vpop.permute.xlu0 %1017
    %v1020 = vmul.f32 %v1002, %v1018
    %1021 = vmatpush.msra.mxu0 0.0
    %1022 = vmatpush.msra.mxu0 0.0
    %1023 = vmatpush.msra.mxu0 0.0
    %1024 = vmatpush.msra.mxu0 0.0
    %1025 = vmatpush.msra.mxu0 0.0
    %1026 = vmatpush.msra.mxu0 0.0
    %1027 = vmatpush.msra.mxu0 0.0
    %1028 = vmatpush.msra.mxu0 0.0
    %1029 = vmatpush.msra.mxu0 0.0
    %1030 = vmatpush.msra.mxu0 0.0
    %1031 = vmatpush.msra.mxu0 0.0
    %1032 = vmatpush.msra.mxu0 0.0
    %1033 = vmatpush.msra.mxu0 %v48
    %1034 = vmatpush.msra.mxu0 %v47
    %1035 = vmatpush.msra.mxu0 %v46
    %1036 = vmatpush.msra.mxu0 %v45
    %1037 = vmatmul.f32.gmra.mxu0 %v903
    %v1038 = vpop.f32.mrf.mxu0
    %v1039 = vadd.f32 0.0, %v1038
    %1040 = vdwg.mxu0
    %v1042 = vrot.slane %v1039, 6
    %v1044 = vadd.f32 %v77, %v1042
    %v1045 = vmul.f32 %v1044, 0.5
    %v1046 = vtanh.pop %v1045
    %v1047 = vmul.f32 %v1046, 0.5
    %v1048 = vadd.f32 %v1047, 0.5
    %v1049 = vtanh.pop %v1044
    %v1051 = vrot.slane %v873, 6
    %v1053 = vmul.f32 %v1048, %v1051
    %1055 = vrot.lane.b32.xlu0 %v1049, 64
    %v1056 = vpop.permute.xlu0 %1055
    %v1058 = vmul.f32 %v1048, %v1056
    %1060 = vrot.lane.b32.xlu0 %v1058, 32
    %v1061 = vpop.permute.xlu0 %1060
    %v1063 = vadd.f32 %v1053, %v1061
    %v1064 = vtanh.pop %v1063
    %1066 = vrot.lane.b32.xlu0 %v1064, 64
    %v1067 = vpop.permute.xlu0 %1066
    %v1069 = vmul.f32 %v1048, %v1067
    %1070 = vmatpush.msra.mxu0 0.0
    %1071 = vmatpush.msra.mxu0 0.0
    %1072 = vmatpush.msra.mxu0 0.0
    %1073 = vmatpush.msra.mxu0 0.0
    %1074 = vmatpush.msra.mxu0 0.0
    %1075 = vmatpush.msra.mxu0 0.0
    %1076 = vmatpush.msra.mxu0 0.0
    %1077 = vmatpush.msra.mxu0 0.0
    %1078 = vmatpush.msra.mxu0 0.0
    %1079 = vmatpush.msra.mxu0 0.0
    %1080 = vmatpush.msra.mxu0 0.0
    %1081 = vmatpush.msra.mxu0 0.0
    %1082 = vmatpush.msra.mxu0 %v57
    %1083 = vmatpush.msra.mxu0 %v56
    %1084 = vmatpush.msra.mxu0 %v55
    %1085 = vmatpush.msra.mxu0 %v54
    %1086 = vmatmul.f32.gmra.mxu0 %v976
    %v1087 = vpop.f32.mrf.mxu0
    %v1088 = vadd.f32 0.0, %v1087
    %1089 = vdwg.mxu0
    %v1091 = vrot.slane %v1069, 2
    %1092 = vrot.lane.b32.xlu0 %v1091, 32
    %v1093 = vpop.permute.xlu0 %1092
    %v1094 = vsel %vm78, %v1093, 0
    %1096 = vmatpush.msra.mxu0 0.0
    %1097 = vmatpush.msra.mxu0 0.0
    %1098 = vmatpush.msra.mxu0 0.0
    %1099 = vmatpush.msra.mxu0 0.0
    %1100 = vmatpush.msra.mxu0 0.0
    %1101 = vmatpush.msra.mxu0 0.0
    %1102 = vmatpush.msra.mxu0 0.0
    %1103 = vmatpush.msra.mxu0 0.0
    %1104 = vmatpush.msra.mxu0 0.0
    %1105 = vmatpush.msra.mxu0 0.0
    %1106 = vmatpush.msra.mxu0 0.0
    %1107 = vmatpush.msra.mxu0 0.0
    %1108 = vmatpush.msra.mxu0 %v53
    %1109 = vmatpush.msra.mxu0 %v52
    %1110 = vmatpush.msra.mxu0 %v51
    %1111 = vmatpush.msra.mxu0 %v50
    %1112 = vmatmul.f32.gmra.mxu0 %v1094
    %v1113 = vpop.f32.mrf.mxu0
    %v1114 = vadd.f32 %v1088, %v1113
    %1115 = vdwg.mxu0
    %v1116 = vadd.f32 %v1114, %v68
    %v1117 = vmul.f32 %v1116, 0.5
    %v1118 = vtanh.pop %v1117
    %v1119 = vmul.f32 %v1118, 0.5
    %v1120 = vadd.f32 %v1119, 0.5
    %v1121 = vtanh.pop %v1116
    %v1122 = vmul.f32 %v1120, %v941
    %1124 = vrot.lane.b32.xlu0 %v1121, 64
    %v1125 = vpop.permute.xlu0 %1124
    %v1127 = vmul.f32 %v1120, %v1125
    %1129 = vrot.lane.b32.xlu0 %v1127, 32
    %v1130 = vpop.permute.xlu0 %1129
    %v1132 = vadd.f32 %v1122, %v1130
    %v1133 = vtanh.pop %v1132
    %1135 = vrot.lane.b32.xlu0 %v1133, 64
    %v1136 = vpop.permute.xlu0 %1135
    %v1138 = vmul.f32 %v1120, %v1136
    %1140 = vrot.lane.b32.xlu0 %v1020, 32
    %v1141 = vpop.permute.xlu0 %1140
    %v1142 = vsel %vm78, %v1141, 0
    %1144 = vmatpush.msra.mxu0 0.0
    %1145 = vmatpush.msra.mxu0 0.0
    %1146 = vmatpush.msra.mxu0 0.0
    %1147 = vmatpush.msra.mxu0 0.0
    %1148 = vmatpush.msra.mxu0 0.0
    %1149 = vmatpush.msra.mxu0 0.0
    %1150 = vmatpush.msra.mxu0 0.0
    %1151 = vmatpush.msra.mxu0 0.0
    %1152 = vmatpush.msra.mxu0 0.0
    %1153 = vmatpush.msra.mxu0 0.0
    %1154 = vmatpush.msra.mxu0 0.0
    %1155 = vmatpush.msra.mxu0 0.0
    %1156 = vmatpush.msra.mxu0 %v66
    %1157 = vmatpush.msra.mxu0 %v65
    %1158 = vmatpush.msra.mxu0 %v64
    %1159 = vmatpush.msra.mxu0 %v63
    %1160 = vmatmul.f32.gmra.mxu0 %v1142
    %v1161 = vpop.f32.mrf.mxu0
    %v1162 = vadd.f32 0.0, %v1161
    %1163 = vdwg.mxu0
    %1165 = vrot.lane.b32.xlu0 %v1138, 32
    %v1166 = vpop.permute.xlu0 %1165
    %v1167 = vsel %vm78, %v1166, 0
    %1169 = vmatpush.msra.mxu0 0.0
    %1170 = vmatpush.msra.mxu0 0.0
    %1171 = vmatpush.msra.mxu0 0.0
    %1172 = vmatpush.msra.mxu0 0.0
    %1173 = vmatpush.msra.mxu0 0.0
    %1174 = vmatpush.msra.mxu0 0.0
    %1175 = vmatpush.msra.mxu0 0.0
    %1176 = vmatpush.msra.mxu0 0.0
    %1177 = vmatpush.msra.mxu0 0.0
    %1178 = vmatpush.msra.mxu0 0.0
    %1179 = vmatpush.msra.mxu0 0.0
    %1180 = vmatpush.msra.mxu0 0.0
    %1181 = vmatpush.msra.mxu0 %v62
    %1182 = vmatpush.msra.mxu0 %v61
    %1183 = vmatpush.msra.mxu0 %v60
    %1184 = vmatpush.msra.mxu0 %v59
    %1185 = vmatmul.f32.gmra.mxu0 %v1167
    %v1186 = vpop.f32.mrf.mxu0
    %v1187 = vadd.f32 %v1162, %v1186
    %1188 = vdwg.mxu0
    %v1189 = vadd.f32 %v1187, %v69
    %v1190 = vmul.f32 %v1189, 0.5
    %v1191 = vtanh.pop %v1190
    %v1192 = vmul.f32 %v1191, 0.5
    %v1193 = vadd.f32 %v1192, 0.5
    %v1194 = vtanh.pop %v1189
    %v1195 = vmul.f32 %v1193, %v1014
    %1197 = vrot.lane.b32.xlu0 %v1194, 64
    %v1198 = vpop.permute.xlu0 %1197
    %v1200 = vmul.f32 %v1193, %v1198
    %1202 = vrot.lane.b32.xlu0 %v1200, 32
    %v1203 = vpop.permute.xlu0 %1202
    %v1205 = vadd.f32 %v1195, %v1203
    %v1206 = vtanh.pop %v1205
    %1208 = vrot.lane.b32.xlu0 %v1206, 64
    %v1209 = vpop.permute.xlu0 %1208
    %v1211 = vmul.f32 %v1193, %v1209
    %1212 = vmatpush.msra.mxu0 0.0
    %1213 = vmatpush.msra.mxu0 0.0
    %1214 = vmatpush.msra.mxu0 0.0
    %1215 = vmatpush.msra.mxu0 0.0
    %1216 = vmatpush.msra.mxu0 0.0
    %1217 = vmatpush.msra.mxu0 0.0
    %1218 = vmatpush.msra.mxu0 0.0
    %1219 = vmatpush.msra.mxu0 0.0
    %1220 = vmatpush.msra.mxu0 0.0
    %1221 = vmatpush.msra.mxu0 0.0
    %1222 = vmatpush.msra.mxu0 0.0
    %1223 = vmatpush.msra.mxu0 0.0
    %1224 = vmatpush.msra.mxu0 %v48
    %1225 = vmatpush.msra.mxu0 %v47
    %1226 = vmatpush.msra.mxu0 %v46
    %1227 = vmatpush.msra.mxu0 %v45
    %1228 = vmatmul.f32.gmra.mxu0 %v1094
    %v1229 = vpop.f32.mrf.mxu0
    %v1230 = vadd.f32 0.0, %v1229
    %1231 = vdwg.mxu0
    %v1233 = vrot.slane %v1230, 4
    %v1235 = vadd.f32 %v77, %v1233
    %v1236 = vmul.f32 %v1235, 0.5
    %v1237 = vtanh.pop %v1236
    %v1238 = vmul.f32 %v1237, 0.5
    %v1239 = vadd.f32 %v1238, 0.5
    %v1240 = vtanh.pop %v1235
    %v1242 = vrot.slane %v1063, 6
    %v1244 = vmul.f32 %v1239, %v1242
    %1246 = vrot.lane.b32.xlu0 %v1240, 64
    %v1247 = vpop.permute.xlu0 %1246
    %v1249 = vmul.f32 %v1239, %v1247
    %1251 = vrot.lane.b32.xlu0 %v1249, 32
    %v1252 = vpop.permute.xlu0 %1251
    %v1254 = vadd.f32 %v1244, %v1252
    %v1255 = vtanh.pop %v1254
    %1257 = vrot.lane.b32.xlu0 %v1255, 64
    %v1258 = vpop.permute.xlu0 %1257
    %v1260 = vmul.f32 %v1239, %v1258
    %1261 = vmatpush.msra.mxu0 0.0
    %1262 = vmatpush.msra.mxu0 0.0
    %1263 = vmatpush.msra.mxu0 0.0
    %1264 = vmatpush.msra.mxu0 0.0
    %1265 = vmatpush.msra.mxu0 0.0
    %1266 = vmatpush.msra.mxu0 0.0
    %1267 = vmatpush.msra.mxu0 0.0
    %1268 = vmatpush.msra.mxu0 0.0
    %1269 = vmatpush.msra.mxu0 0.0
    %1270 = vmatpush.msra.mxu0 0.0
    %1271 = vmatpush.msra.mxu0 0.0
    %1272 = vmatpush.msra.mxu0 0.0
    %1273 = vmatpush.msra.mxu0 %v57
    %1274 = vmatpush.msra.mxu0 %v56
    %1275 = vmatpush.msra.mxu0 %v55
    %1276 = vmatpush.msra.mxu0 %v54
    %1277 = vmatmul.f32.gmra.mxu0 %v1167
    %v1278 = vpop.f32.mrf.mxu0
    %v1279 = vadd.f32 0.0, %v1278
    %1280 = vdwg.mxu0
    %v1282 = vrot.slane %v1260, 4
    %1283 = vrot.lane.b32.xlu0 %v1282, 32
    %v1284 = vpop.permute.xlu0 %1283
    %v1285 = vsel %vm78, %v1284, 0
    %1287 = vmatpush.msra.mxu0 0.0
    %1288 = vmatpush.msra.mxu0 0.0
    %1289 = vmatpush.msra.mxu0 0.0
    %1290 = vmatpush.msra.mxu0 0.0
    %1291 = vmatpush.msra.mxu0 0.0
    %1292 = vmatpush.msra.mxu0 0.0
    %1293 = vmatpush.msra.mxu0 0.0
    %1294 = vmatpush.msra.mxu0 0.0
    %1295 = vmatpush.msra.mxu0 0.0
    %1296 = vmatpush.msra.mxu0 0.0
    %1297 = vmatpush.msra.mxu0 0.0
    %1298 = vmatpush.msra.mxu0 0.0
    %1299 = vmatpush.msra.mxu0 %v53
    %1300 = vmatpush.msra.mxu0 %v52
    %1301 = vmatpush.msra.mxu0 %v51
    %1302 = vmatpush.msra.mxu0 %v50
    %1303 = vmatmul.f32.gmra.mxu0 %v1285
    %v1304 = vpop.f32.mrf.mxu0
    %v1305 = vadd.f32 %v1279, %v1304
    %1306 = vdwg.mxu0
    %v1307 = vadd.f32 %v1305, %v68
    %v1308 = vmul.f32 %v1307, 0.5
    %v1309 = vtanh.pop %v1308
    %v1310 = vmul.f32 %v1309, 0.5
    %v1311 = vadd.f32 %v1310, 0.5
    %v1312 = vtanh.pop %v1307
    %v1313 = vmul.f32 %v1311, %v1132
    %1315 = vrot.lane.b32.xlu0 %v1312, 64
    %v1316 = vpop.permute.xlu0 %1315
    %v1318 = vmul.f32 %v1311, %v1316
    %1320 = vrot.lane.b32.xlu0 %v1318, 32
    %v1321 = vpop.permute.xlu0 %1320
    %v1323 = vadd.f32 %v1313, %v1321
    %v1324 = vtanh.pop %v1323
    %1326 = vrot.lane.b32.xlu0 %v1324, 64
    %v1327 = vpop.permute.xlu0 %1326
    %v1329 = vmul.f32 %v1311, %v1327
    %1331 = vrot.lane.b32.xlu0 %v1211, 32
    %v1332 = vpop.permute.xlu0 %1331
    %v1333 = vsel %vm78, %v1332, 0
    %1335 = vmatpush.msra.mxu0 0.0
    %1336 = vmatpush.msra.mxu0 0.0
    %1337 = vmatpush.msra.mxu0 0.0
    %1338 = vmatpush.msra.mxu0 0.0
    %1339 = vmatpush.msra.mxu0 0.0
    %1340 = vmatpush.msra.mxu0 0.0
    %1341 = vmatpush.msra.mxu0 0.0
    %1342 = vmatpush.msra.mxu0 0.0
    %1343 = vmatpush.msra.mxu0 0.0
    %1344 = vmatpush.msra.mxu0 0.0
    %1345 = vmatpush.msra.mxu0 0.0
    %1346 = vmatpush.msra.mxu0 0.0
    %1347 = vmatpush.msra.mxu0 %v66
    %1348 = vmatpush.msra.mxu0 %v65
    %1349 = vmatpush.msra.mxu0 %v64
    %1350 = vmatpush.msra.mxu0 %v63
    %1351 = vmatmul.f32.gmra.mxu0 %v1333
    %v1352 = vpop.f32.mrf.mxu0
    %v1353 = vadd.f32 0.0, %v1352
    %1354 = vdwg.mxu0
    %1356 = vrot.lane.b32.xlu0 %v1329, 32
    %v1357 = vpop.permute.xlu0 %1356
    %v1358 = vsel %vm78, %v1357, 0
    %1360 = vmatpush.msra.mxu0 0.0
    %1361 = vmatpush.msra.mxu0 0.0
    %1362 = vmatpush.msra.mxu0 0.0
    %1363 = vmatpush.msra.mxu0 0.0
    %1364 = vmatpush.msra.mxu0 0.0
    %1365 = vmatpush.msra.mxu0 0.0
    %1366 = vmatpush.msra.mxu0 0.0
    %1367 = vmatpush.msra.mxu0 0.0
    %1368 = vmatpush.msra.mxu0 0.0
    %1369 = vmatpush.msra.mxu0 0.0
    %1370 = vmatpush.msra.mxu0 0.0
    %1371 = vmatpush.msra.mxu0 0.0
    %1372 = vmatpush.msra.mxu0 %v62
    %1373 = vmatpush.msra.mxu0 %v61
    %1374 = vmatpush.msra.mxu0 %v60
    %1375 = vmatpush.msra.mxu0 %v59
    %1376 = vmatmul.f32.gmra.mxu0 %v1358
    %v1377 = vpop.f32.mrf.mxu0
    %v1378 = vadd.f32 %v1353, %v1377
    %1379 = vdwg.mxu0
    %v1380 = vadd.f32 %v1378, %v69
    %v1381 = vmul.f32 %v1380, 0.5
    %v1382 = vtanh.pop %v1381
    %v1383 = vmul.f32 %v1382, 0.5
    %v1384 = vadd.f32 %v1383, 0.5
    %v1385 = vtanh.pop %v1380
    %v1386 = vmul.f32 %v1384, %v1205
    %1388 = vrot.lane.b32.xlu0 %v1385, 64
    %v1389 = vpop.permute.xlu0 %1388
    %v1391 = vmul.f32 %v1384, %v1389
    %1393 = vrot.lane.b32.xlu0 %v1391, 32
    %v1394 = vpop.permute.xlu0 %1393
    %v1396 = vadd.f32 %v1386, %v1394
    %v1397 = vtanh.pop %v1396
    %1399 = vrot.lane.b32.xlu0 %v1397, 64
    %v1400 = vpop.permute.xlu0 %1399
    %v1402 = vmul.f32 %v1384, %v1400
    %1403 = vmatpush.msra.mxu0 0.0
    %1404 = vmatpush.msra.mxu0 0.0
    %1405 = vmatpush.msra.mxu0 0.0
    %1406 = vmatpush.msra.mxu0 0.0
    %1407 = vmatpush.msra.mxu0 0.0
    %1408 = vmatpush.msra.mxu0 0.0
    %1409 = vmatpush.msra.mxu0 0.0
    %1410 = vmatpush.msra.mxu0 0.0
    %1411 = vmatpush.msra.mxu0 0.0
    %1412 = vmatpush.msra.mxu0 0.0
    %1413 = vmatpush.msra.mxu0 0.0
    %1414 = vmatpush.msra.mxu0 0.0
    %1415 = vmatpush.msra.mxu0 %v48
    %1416 = vmatpush.msra.mxu0 %v47
    %1417 = vmatpush.msra.mxu0 %v46
    %1418 = vmatpush.msra.mxu0 %v45
    %1419 = vmatmul.f32.gmra.mxu0 %v1285
    %v1420 = vpop.f32.mrf.mxu0
    %v1421 = vadd.f32 0.0, %v1420
    %1422 = vdwg.mxu0
    %v1424 = vrot.slane %v1421, 2
    %v1426 = vadd.f32 %v77, %v1424
    %v1427 = vmul.f32 %v1426, 0.5
    %v1428 = vtanh.pop %v1427
    %v1429 = vmul.f32 %v1428, 0.5
    %v1430 = vadd.f32 %v1429, 0.5
    %v1431 = vtanh.pop %v1426
    %v1433 = vrot.slane %v1254, 6
    %v1435 = vmul.f32 %v1430, %v1433
    %1437 = vrot.lane.b32.xlu0 %v1431, 64
    %v1438 = vpop.permute.xlu0 %1437
    %v1440 = vmul.f32 %v1430, %v1438
    %1442 = vrot.lane.b32.xlu0 %v1440, 32
    %v1443 = vpop.permute.xlu0 %1442
    %v1445 = vadd.f32 %v1435, %v1443
    %v1446 = vtanh.pop %v1445
    %1448 = vrot.lane.b32.xlu0 %v1446, 64
    %v1449 = vpop.permute.xlu0 %1448
    %v1451 = vmul.f32 %v1430, %v1449
    %1452 = vmatpush.msra.mxu0 0.0
    %1453 = vmatpush.msra.mxu0 0.0
    %1454 = vmatpush.msra.mxu0 0.0
    %1455 = vmatpush.msra.mxu0 0.0
    %1456 = vmatpush.msra.mxu0 0.0
    %1457 = vmatpush.msra.mxu0 0.0
    %1458 = vmatpush.msra.mxu0 0.0
    %1459 = vmatpush.msra.mxu0 0.0
    %1460 = vmatpush.msra.mxu0 0.0
    %1461 = vmatpush.msra.mxu0 0.0
    %1462 = vmatpush.msra.mxu0 0.0
    %1463 = vmatpush.msra.mxu0 0.0
    %1464 = vmatpush.msra.mxu0 %v57
    %1465 = vmatpush.msra.mxu0 %v56
    %1466 = vmatpush.msra.mxu0 %v55
    %1467 = vmatpush.msra.mxu0 %v54
    %1468 = vmatmul.f32.gmra.mxu0 %v1358
    %v1469 = vpop.f32.mrf.mxu0
    %v1470 = vadd.f32 0.0, %v1469
    %1471 = vdwg.mxu0
    %v1473 = vrot.slane %v1451, 6
    %1474 = vrot.lane.b32.xlu0 %v1473, 32
    %v1475 = vpop.permute.xlu0 %1474
    %v1476 = vsel %vm78, %v1475, 0
    %1478 = vmatpush.msra.mxu0 0.0
    %1479 = vmatpush.msra.mxu0 0.0
    %1480 = vmatpush.msra.mxu0 0.0
    %1481 = vmatpush.msra.mxu0 0.0
    %1482 = vmatpush.msra.mxu0 0.0
    %1483 = vmatpush.msra.mxu0 0.0
    %1484 = vmatpush.msra.mxu0 0.0
    %1485 = vmatpush.msra.mxu0 0.0
    %1486 = vmatpush.msra.mxu0 0.0
    %1487 = vmatpush.msra.mxu0 0.0
    %1488 = vmatpush.msra.mxu0 0.0
    %1489 = vmatpush.msra.mxu0 0.0
    %1490 = vmatpush.msra.mxu0 %v53
    %1491 = vmatpush.msra.mxu0 %v52
    %1492 = vmatpush.msra.mxu0 %v51
    %1493 = vmatpush.msra.mxu0 %v50
    %1494 = vmatmul.f32.gmra.mxu0 %v1476
    %v1495 = vpop.f32.mrf.mxu0
    %v1496 = vadd.f32 %v1470, %v1495
    %1497 = vdwg.mxu0
    %v1498 = vadd.f32 %v1496, %v68
    %v1499 = vmul.f32 %v1498, 0.5
    %v1500 = vtanh.pop %v1499
    %v1501 = vmul.f32 %v1500, 0.5
    %v1502 = vadd.f32 %v1501, 0.5
    %v1503 = vtanh.pop %v1498
    %v1504 = vmul.f32 %v1502, %v1323
    %1506 = vrot.lane.b32.xlu0 %v1503, 64
    %v1507 = vpop.permute.xlu0 %1506
    %v1509 = vmul.f32 %v1502, %v1507
    %1511 = vrot.lane.b32.xlu0 %v1509, 32
    %v1512 = vpop.permute.xlu0 %1511
    %v1514 = vadd.f32 %v1504, %v1512
    %v1515 = vtanh.pop %v1514
    %1517 = vrot.lane.b32.xlu0 %v1515, 64
    %v1518 = vpop.permute.xlu0 %1517
    %v1520 = vmul.f32 %v1502, %v1518
    %1522 = vrot.lane.b32.xlu0 %v1402, 32
    %v1523 = vpop.permute.xlu0 %1522
    %v1524 = vsel %vm78, %v1523, 0
    %1526 = vmatpush.msra.mxu0 0.0
    %1527 = vmatpush.msra.mxu0 0.0
    %1528 = vmatpush.msra.mxu0 0.0
    %1529 = vmatpush.msra.mxu0 0.0
    %1530 = vmatpush.msra.mxu0 0.0
    %1531 = vmatpush.msra.mxu0 0.0
    %1532 = vmatpush.msra.mxu0 0.0
    %1533 = vmatpush.msra.mxu0 0.0
    %1534 = vmatpush.msra.mxu0 0.0
    %1535 = vmatpush.msra.mxu0 0.0
    %1536 = vmatpush.msra.mxu0 0.0
    %1537 = vmatpush.msra.mxu0 0.0
    %1538 = vmatpush.msra.mxu0 %v66
    %1539 = vmatpush.msra.mxu0 %v65
    %1540 = vmatpush.msra.mxu0 %v64
    %1541 = vmatpush.msra.mxu0 %v63
    %1542 = vmatmul.f32.gmra.mxu0 %v1524
    %v1543 = vpop.f32.mrf.mxu0
    %v1544 = vadd.f32 0.0, %v1543
    %1545 = vdwg.mxu0
    %1547 = vrot.lane.b32.xlu0 %v1520, 32
    %v1548 = vpop.permute.xlu0 %1547
    %v1549 = vsel %vm78, %v1548, 0
    %1551 = vmatpush.msra.mxu0 0.0
    %1552 = vmatpush.msra.mxu0 0.0
    %1553 = vmatpush.msra.mxu0 0.0
    %1554 = vmatpush.msra.mxu0 0.0
    %1555 = vmatpush.msra.mxu0 0.0
    %1556 = vmatpush.msra.mxu0 0.0
    %1557 = vmatpush.msra.mxu0 0.0
    %1558 = vmatpush.msra.mxu0 0.0
    %1559 = vmatpush.msra.mxu0 0.0
    %1560 = vmatpush.msra.mxu0 0.0
    %1561 = vmatpush.msra.mxu0 0.0
    %1562 = vmatpush.msra.mxu0 0.0
    %1563 = vmatpush.msra.mxu0 %v62
    %1564 = vmatpush.msra.mxu0 %v61
    %1565 = vmatpush.msra.mxu0 %v60
    %1566 = vmatpush.msra.mxu0 %v59
    %1567 = vmatmul.f32.gmra.mxu0 %v1549
    %v1568 = vpop.f32.mrf.mxu0
    %v1569 = vadd.f32 %v1544, %v1568
    %1570 = vdwg.mxu0
    %v1571 = vadd.f32 %v1569, %v69
    %v1572 = vmul.f32 %v1571, 0.5
    %v1573 = vtanh.pop %v1572
    %v1574 = vmul.f32 %v1573, 0.5
    %v1575 = vadd.f32 %v1574, 0.5
    %v1576 = vtanh.pop %v1571
    %v1577 = vmul.f32 %v1575, %v1396
    %1579 = vrot.lane.b32.xlu0 %v1576, 64
    %v1580 = vpop.permute.xlu0 %1579
    %v1582 = vmul.f32 %v1575, %v1580
    %1584 = vrot.lane.b32.xlu0 %v1582, 32
    %v1585 = vpop.permute.xlu0 %1584
    %v1587 = vadd.f32 %v1577, %v1585
    %v1588 = vtanh.pop %v1587
    %1590 = vrot.lane.b32.xlu0 %v1588, 64
    %v1591 = vpop.permute.xlu0 %1590
    %v1593 = vmul.f32 %v1575, %v1591
    %v1594 = vld [vmem:[#allocation5 + $0xc0] sm:$0x1]
    %v1595 = vld [vmem:[#allocation5 + $0xc8] sm:$0x1]
    %1597 = vrot.lane.b32.xlu0 %v1593, 32
    %v1598 = vpop.permute.xlu0 %1597
    %vm1600 = vcmask 254976
    %v1601 = vsel %vm1600, %v1598, 0.0
    %1602 = vadd.xlane.f32.xlu0 %v1601
    %v1603 = vpop.xlane.xlu0 %1602
    %v1604 = vrcp.pop 32.0
    %v1605 = vmul.f32 32.0, %v1604
    %v1606 = vsub.f32 1.0, %v1605
    %v1607 = vmul.f32 %v1604, %v1606
    %v1608 = vadd.f32 %v1604, %v1607
    %vm1609 = vweird.f32 %v1604
    %v1610 = vsel %vm1609, %v1604, %v1608
    %v1611 = vmul.f32 %v1603, %v1610
    %v1612 = vsub.f32 %v1593, %v1611
    %v1613 = vmul.f32 %v1612, %v1612
    %1615 = vrot.lane.b32.xlu0 %v1613, 32
    %v1616 = vpop.permute.xlu0 %1615
    %v1618 = vsel %vm1600, %v1616, 0.0
    %1619 = vadd.xlane.f32.xlu0 %v1618
    %v1620 = vpop.xlane.xlu0 %1619
    %v1621 = vmul.f32 %v1620, %v1610
    %v1622 = vadd.f32 %v1621, 1e-05
    %v1623 = vrsqrt.pop %v1622
    %v1624 = vmul.f32 %v1623, %v1622
    %v1625 = vmul.f32 %v1624, %v1623
    %v1626 = vmul.f32 0.5, %v1625
    %v1627 = vsub.f32 1.5, %v1626
    %v1628 = vmul.f32 %v1623, %v1627
    %vm1629 = vweird.f32 %v1622
    %vm1630 = vweird.f32 %v1623
    %vm1631 = vmor %vm1629, %vm1630
    %v1632 = vsel %vm1631, %v1623, %v1628
    %v1633 = vmul.f32 %v1612, %v1632
    %v1634 = vperm.slane %v1594, 0
    %1636 = vrot.lane.b32.xlu0 %v1634, 96
    %v1637 = vpop.permute.xlu0 %1636
    %v1639 = vmul.f32 %v1633, %v1637
    %v1640 = vperm.slane %v1595, 0
    %1642 = vrot.lane.b32.xlu0 %v1640, 96
    %v1643 = vpop.permute.xlu0 %1642
    %v1645 = vadd.f32 %v1639, %v1643
    %v1646 = vld [vmem:[#allocation5 + $0xd0] sm:$0xff]
    %v1647 = vld [vmem:[#allocation5 + $0xd8] sm:$0xff]
    %v1648 = vld [vmem:[#allocation5 + $0xe0] sm:$0xff]
    %v1649 = vld [vmem:[#allocation5 + $0xe8] sm:$0xff]
    %v1650 = vld [vmem:[#allocation5 + $0xf0] sm:$0x1]
    %v1651 = vld [vmem:[#allocation5 + $0xf8] sm:$0xff]
    %v1652 = vld [vmem:[#allocation5 + $0x100] sm:$0xff]
    %v1653 = vld [vmem:[#allocation5 + $0x108] sm:$0xff]
    %v1654 = vld [vmem:[#allocation5 + $0x110] sm:$0xff]
    %v1655 = vld [vmem:[#allocation5 + $0x118] sm:$0xff]
    %v1656 = vld [vmem:[#allocation5 + $0x120] sm:$0xff]
    %v1657 = vld [vmem:[#allocation5 + $0x128] sm:$0xff]
    %v1658 = vld [vmem:[#allocation5 + $0x130] sm:$0xff]
    %v1659 = vld [vmem:[#allocation5 + $0x138] sm:$0xff]
    %v1660 = vld [vmem:[#allocation5 + $0x140] sm:$0xff]
    %v1661 = vld [vmem:[#allocation5 + $0x148] sm:$0xff]
    %v1662 = vld [vmem:[#allocation5 + $0x150] sm:$0xff]
    %v1663 = vld [vmem:[#allocation5 + $0x158] sm:$0xff]
    %v1664 = vld [vmem:[#allocation5 + $0x160] sm:$0xff]
    %v1665 = vld [vmem:[#allocation5 + $0x168] sm:$0xff]
    %v1666 = vld [vmem:[#allocation5 + $0x170] sm:$0xff]
    %v1667 = vld [vmem:[#allocation5 + $0x178] sm:$0x1]
    %v1668 = vld [vmem:[#allocation5 + $0x180] sm:$0xff]
    %v1669 = vld [vmem:[#allocation5 + $0x188] sm:$0xff]
    %v1670 = vld [vmem:[#allocation5 + $0x190] sm:$0xff]
    %v1671 = vld [vmem:[#allocation5 + $0x198] sm:$0xff]
    %v1672 = vld [vmem:[#allocation5 + $0x1a0] sm:$0xff]
    %v1673 = vld [vmem:[#allocation5 + $0x1a8] sm:$0xff]
    %v1674 = vld [vmem:[#allocation5 + $0x1b0] sm:$0xff]
    %v1675 = vld [vmem:[#allocation5 + $0x1b8] sm:$0xff]
    %v1676 = vld [vmem:[#allocation5 + $0x1c0] sm:$0xff]
    %v1677 = vld [vmem:[#allocation5 + $0x1c8] sm:$0xff]
    %v1678 = vld [vmem:[#allocation5 + $0x1d0] sm:$0xff]
    %v1679 = vld [vmem:[#allocation5 + $0x1d8] sm:$0xff]
    %v1680 = vld [vmem:[#allocation5 + $0x1e0] sm:$0xff]
    %v1681 = vld [vmem:[#allocation5 + $0x1e8] sm:$0xff]
    %v1682 = vld [vmem:[#allocation5 + $0x1f0] sm:$0xff]
    %v1683 = vld [vmem:[#allocation5 + $0x1f8] sm:$0xff]
    %v1684 = vld [vmem:[#allocation5 + $0x200] sm:$0x1]
    %v1685 = vperm.slane %v1650, 0
    %1687 = vrot.lane.b32.xlu0 %v1645, 32
    %v1688 = vpop.permute.xlu0 %1687
    %v1689 = vsel %vm78, %v1688, 0
    %1691 = vmatpush.msra.mxu0 0.0
    %1692 = vmatpush.msra.mxu0 0.0
    %1693 = vmatpush.msra.mxu0 0.0
    %1694 = vmatpush.msra.mxu0 0.0
    %1695 = vmatpush.msra.mxu0 0.0
    %1696 = vmatpush.msra.mxu0 0.0
    %1697 = vmatpush.msra.mxu0 0.0
    %1698 = vmatpush.msra.mxu0 0.0
    %1699 = vmatpush.msra.mxu0 0.0
    %1700 = vmatpush.msra.mxu0 0.0
    %1701 = vmatpush.msra.mxu0 0.0
    %1702 = vmatpush.msra.mxu0 0.0
    %1703 = vmatpush.msra.mxu0 %v1649
    %1704 = vmatpush.msra.mxu0 %v1648
    %1705 = vmatpush.msra.mxu0 %v1647
    %1706 = vmatpush.msra.mxu0 %v1646
    %1707 = vmatmul.f32.gmra.mxu0 %v1689
    %v1708 = vpop.f32.mrf.mxu0
    %v1709 = vadd.f32 %v1685, %v1708
    %1710 = vdwg.mxu0
    %v1711 = vmax.f32 %v1709, 0.0
    %v1712 = vperm.slane %v1667, 0
    %1713 = vmatpush.msra.mxu0 %v1666
    %1714 = vmatpush.msra.mxu0 %v1665
    %1715 = vmatpush.msra.mxu0 %v1664
    %1716 = vmatpush.msra.mxu0 %v1663
    %1717 = vmatpush.msra.mxu0 %v1662
    %1718 = vmatpush.msra.mxu0 %v1661
    %1719 = vmatpush.msra.mxu0 %v1660
    %1720 = vmatpush.msra.mxu0 %v1659
    %1721 = vmatpush.msra.mxu0 %v1658
    %1722 = vmatpush.msra.mxu0 %v1657
    %1723 = vmatpush.msra.mxu0 %v1656
    %1724 = vmatpush.msra.mxu0 %v1655
    %1725 = vmatpush.msra.mxu0 %v1654
    %1726 = vmatpush.msra.mxu0 %v1653
    %1727 = vmatpush.msra.mxu0 %v1652
    %1728 = vmatpush.msra.mxu0 %v1651
    %1729 = vmatmul.f32.gmra.mxu0 %v1711
    %v1730 = vpop.f32.mrf.mxu0
    %v1731 = vadd.f32 %v1712, %v1730
    %1732 = vdwg.mxu0
    %v1733 = vmax.f32 %v1731, 0.0
    %v1734 = vperm.slane %v1684, 0
    %1735 = vmatpush.msra.mxu0 %v1683
    %1736 = vmatpush.msra.mxu0 %v1682
    %1737 = vmatpush.msra.mxu0 %v1681
    %1738 = vmatpush.msra.mxu0 %v1680
    %1739 = vmatpush.msra.mxu0 %v1679
    %1740 = vmatpush.msra.mxu0 %v1678
    %1741 = vmatpush.msra.mxu0 %v1677
    %1742 = vmatpush.msra.mxu0 %v1676
    %1743 = vmatpush.msra.mxu0 %v1675
    %1744 = vmatpush.msra.mxu0 %v1674
    %1745 = vmatpush.msra.mxu0 %v1673
    %1746 = vmatpush.msra.mxu0 %v1672
    %1747 = vmatpush.msra.mxu0 %v1671
    %1748 = vmatpush.msra.mxu0 %v1670
    %1749 = vmatpush.msra.mxu0 %v1669
    %1750 = vmatpush.msra.mxu0 %v1668
    %1751 = vmatmul.f32.gmra.mxu0 %v1733
    %v1752 = vpop.f32.mrf.mxu0
    %v1753 = vadd.f32 %v1734, %v1752
    %1754 = vdwg.mxu0
    %v1755 = vlaneseq
    %v1756 = vand.u32 %v1755, 127
    %vm1757 = vcmp.lt.s32.totalorder %v1756, 32
    %v1758 = vmul.f32 %v1753, 1.442695
    %v1759 = vpow.pop %v1758
    %v1760 = vmax.f32 %v1753, 1e-06
    %v1761 = vsel %vm1757, %v1759, %v1760
    %1762 = vst [vmem:[#allocation7] sm:$0x3] %v1761
    // Predicated region
    $region18: #{tpu_custom_call.1} parent=1 // pred_check
      _
    $region19: #{tpu_custom_call.1} parent=1 // pred_check_branch
      %1764 = sbr.rel (0) target = $region21
    $region20: #{tpu_custom_call.1} parent=1 // pred_region
      %1766 = vsyncadd [#allocation4], 0
      %s1768 = sshll.u32 [#allocation7], 4
      %s1769 = int_to_ptr.vmem [resolvable:$true] %s1768
      %s1770 = sshll.u32 %s2, 4
      %s1771 = int_to_ptr.hbm [resolvable:$true] %s1770
      %1773 = dma.vmem_to_hbm [thread:$0]  %s1769, 32, %s1771, [#allocation4]
    $region21: #{tpu_custom_call.1} parent=1 // pred_fallthru
      _
    // Predicated region
    $region22: #{tpu_custom_call.1} parent=1 // pred_check
      _
    $region23: #{tpu_custom_call.1} parent=1 // pred_check_branch
      %1775 = sbr.rel (0) target = $region25
    $region24: #{tpu_custom_call.1} parent=1 // pred_region
      %1777 = dma.done [#allocation4], 32
    $region25: #{tpu_custom_call.1} parent=1 // pred_fallthru
      _
    %1778 = vsyncpa [#allocation3], 1
    %1779 = vsyncpa [#allocation6], 1
    %1780 = vsyncpa [#allocation4], 1

</llo_original>
